<compile_context>
chip_gen: v7x
topology: tpu7x:2x2x1
jax: 0.10.0
libtpu: 0.0.40
codegen_flags: <defaults>
</compile_context>

<pallas_src>
import math
from functools import partial

import jax
import jax.numpy as jnp
from jax.experimental import pallas as pl
from jax.experimental.pallas import tpu as pltpu


def _pick_tile_h(H, downsample, cap=8):
    """Largest row-strip height <= cap that divides H (even when downsampling)."""
    for t in range(min(H, cap), 0, -1):
        if H % t == 0 and (not downsample or t % 2 == 0):
            return t
    return H


# ----------------------------------------------------------------------------
# Pallas kernel: one (batch, row-strip) tile per grid step, full block fused.
# ----------------------------------------------------------------------------
def _block_kernel(*refs, learnable_sc, downsample, tile_h):
    if learnable_sc:
        (xp_ref, w1_ref, b1_ref, w2_ref, b2_ref, wsc_ref, bsc_ref,
         out_ref, hpad_ref) = refs
    else:
        xp_ref, w1_ref, b1_ref, w2_ref, b2_ref, out_ref, hpad_ref = refs
        wsc_ref = bsc_ref = None

    TH = tile_h
    cin = xp_ref.shape[3]
    W = xp_ref.shape[2] - 2          # padded width = W + 2
    hch = w1_ref.shape[2]
    cout = w2_ref.shape[2]

    r = pl.program_id(1)
    n_strips = pl.num_programs(1)
    row0 = pl.multiple_of(r * TH, TH)        # first padded-input row of this strip

    # ---- conv1 over TH+2 rows (1-row halo each side), dx folded into K ------
    rows1 = (TH + 2) * W
    acc1 = jnp.broadcast_to(b1_ref[...], (rows1, hch))          # bias-initialized
    for dy in range(3):
        slab = xp_ref[0, pl.ds(row0 + dy, TH + 2), :, :]        # (TH+2, W+2, cin) bf16
        slab = jnp.maximum(slab, 0)                             # relu(x); relu(0)=0 keeps pad
        patch = jnp.concatenate(
            [slab[:, 0:W, :], slab[:, 1:W + 1, :], slab[:, 2:W + 2, :]], axis=-1)
        acc1 = acc1 + jnp.dot(patch.reshape(rows1, 3 * cin), w1_ref[dy],
                              preferred_element_type=jnp.float32)
    r1 = jnp.maximum(acc1, 0.0).astype(jnp.bfloat16)            # relu(conv1 + b1)

    # ---- stage relu(h1) into the zero-padded VMEM strip for conv2 -----------
    hpad_ref[:, 0:1, :] = jnp.zeros((TH + 2, 1, hch), jnp.bfloat16)       # left halo col
    hpad_ref[:, W + 1:W + 2, :] = jnp.zeros((TH + 2, 1, hch), jnp.bfloat16)  # right halo col
    hpad_ref[:, 1:W + 1, :] = r1.reshape(TH + 2, W, hch)

    zrow = jnp.zeros((W + 2, hch), jnp.bfloat16)

    @pl.when(r == 0)
    def _():                                   # top image boundary: conv2 zero padding
        hpad_ref[0, :, :] = zrow

    @pl.when(r == n_strips - 1)
    def _():                                   # bottom image boundary
        hpad_ref[TH + 1, :, :] = zrow

    # ---- conv2 over the TH rows of this strip --------------------------------
    rows2 = TH * W
    acc2 = jnp.broadcast_to(b2_ref[...], (rows2, cout))
    for dy in range(3):
        slab = hpad_ref[dy:dy + TH, :, :]                       # (TH, W+2, hch) bf16
        patch = jnp.concatenate(
            [slab[:, 0:W, :], slab[:, 1:W + 1, :], slab[:, 2:W + 2, :]], axis=-1)
        acc2 = acc2 + jnp.dot(patch.reshape(rows2, 3 * hch), w2_ref[dy],
                              preferred_element_type=jnp.float32)

    # ---- shortcut path --------------------------------------------------------
    x_in = xp_ref[0, pl.ds(row0 + 2, TH), 1:W + 1, :]           # (TH, W, cin) bf16, no relu
    if learnable_sc:
        sc = jnp.dot(x_in.reshape(rows2, cin), wsc_ref[...],
                     preferred_element_type=jnp.float32) + bsc_ref[...]
    else:
        sc = x_in.reshape(rows2, cin).astype(jnp.float32)       # identity (cin == cout)

    y = (sc + acc2).reshape(TH, W, cout)

    if downsample:
        # avg_pool2d(2); pooling the sum == summing the pooled branches (linear).
        yw = y.reshape(TH, W // 2, 2, cout)
        yw = yw[:, :, 0, :] + yw[:, :, 1, :]
        yh = yw.reshape(TH // 2, 2, W // 2, cout)
        y = (yh[:, 0, :, :] + yh[:, 1, :, :]) * 0.25

    out_ref[0] = y


# ----------------------------------------------------------------------------
# Wrapper (glue): layout transposes, padding, weight slabs, pallas_call.
# ----------------------------------------------------------------------------
def block_forward(x_nchw, params, *, downsample=False, tile_h=None):
    w1, b1 = params["w1"], params["b1"]          # OIHW / (O,)
    w2, b2 = params["w2"], params["b2"]
    wsc, bsc = params["wsc"], params["bsc"]
    learnable_sc = wsc is not None

    B, cin, H, W = x_nchw.shape
    hch = w1.shape[0]
    cout = w2.shape[0]

    TH = _pick_tile_h(H, downsample) if tile_h is None else tile_h
    assert H % TH == 0, "tile_h must divide H"
    if downsample:
        assert TH % 2 == 0 and W % 2 == 0, "downsample needs even tile_h and W"
    n_strips = H // TH
    Ho, Wo = (H // 2, W // 2) if downsample else (H, W)
    THo = TH // 2 if downsample else TH

    # --- glue: layout / padding / bf16 matmul operands ---
    x = jnp.transpose(x_nchw, (0, 2, 3, 1)).astype(jnp.bfloat16)     # NCHW -> NHWC
    xp = jnp.pad(x, ((0, 0), (2, 2), (1, 1), (0, 0)))                # rows +-2, cols +-1

    # OIHW -> HWIO -> per-dy slab with dx folded into K: (3, 3*Cin, Cout)
    w1s = jnp.transpose(w1, (2, 3, 1, 0)).reshape(3, 3 * cin, hch).astype(jnp.bfloat16)
    w2s = jnp.transpose(w2, (2, 3, 1, 0)).reshape(3, 3 * hch, cout).astype(jnp.bfloat16)
    b1r = b1.reshape(1, hch).astype(jnp.float32)
    b2r = b2.reshape(1, cout).astype(jnp.float32)

    ins = [xp, w1s, b1r, w2s, b2r]
    in_specs = [
        pl.BlockSpec((1, H + 4, W + 2, cin), lambda b, r: (b, 0, 0, 0)),
        pl.BlockSpec((3, 3 * cin, hch), lambda b, r: (0, 0, 0)),
        pl.BlockSpec((1, hch), lambda b, r: (0, 0)),
        pl.BlockSpec((3, 3 * hch, cout), lambda b, r: (0, 0, 0)),
        pl.BlockSpec((1, cout), lambda b, r: (0, 0)),
    ]
    if learnable_sc:
        wscm = jnp.transpose(wsc[:, :, 0, 0], (1, 0)).astype(jnp.bfloat16)  # (Cin, Cout)
        bscr = bsc.reshape(1, cout).astype(jnp.float32)
        ins += [wscm, bscr]
        in_specs += [pl.BlockSpec((cin, cout), lambda b, r: (0, 0)),
                     pl.BlockSpec((1, cout), lambda b, r: (0, 0))]

    # --- VMEM budget: double-buffered blocks + strip scratch + temporaries ---
    blk_bytes = ((H + 4) * (W + 2) * cin * 2
                 + 3 * 3 * cin * hch * 2 + 3 * 3 * hch * cout * 2
                 + (cin * cout * 2 if learnable_sc else 0)
                 + (hch + 2 * cout) * 4
                 + THo * Wo * cout * 4)
    scratch_bytes = (TH + 2) * (W + 2) * hch * 2
    tmp_bytes = ((TH + 2) * W * (3 * cin * 2 + 4 * hch)
                 + TH * W * (3 * hch * 2 + 12 * cout))
    vmem_limit = int(min(2 * blk_bytes + scratch_bytes + 2 * tmp_bytes + (4 << 20),
                         64 << 20))

    flops = 2 * B * H * W * (9 * cin * hch + 9 * hch * cout
                             + (cin * cout if learnable_sc else 0))
    bytes_accessed = (xp.size * 2 + w1s.size * 2 + w2s.size * 2
                      + (cin * cout * 2 if learnable_sc else 0)
                      + (hch + 2 * cout) * 4 + B * Ho * Wo * cout * 4)
    cost = pl.CostEstimate(flops=int(flops), transcendentals=0,
                           bytes_accessed=int(bytes_accessed))

    out_nhwc = pl.pallas_call(
        partial(_block_kernel, learnable_sc=learnable_sc,
                downsample=downsample, tile_h=TH),
        out_shape=jax.ShapeDtypeStruct((B, Ho, Wo, cout), jnp.float32),
        grid_spec=pltpu.PrefetchScalarGridSpec(
            num_scalar_prefetch=0,
            grid=(B, n_strips),
            in_specs=in_specs,
            out_specs=pl.BlockSpec((1, THo, Wo, cout), lambda b, r: (b, r, 0, 0)),
            scratch_shapes=[pltpu.VMEM((TH + 2, W + 2, hch), jnp.bfloat16)],
        ),
        compiler_params=pltpu.CompilerParams(
            dimension_semantics=("parallel", "parallel"),
            vmem_limit_bytes=vmem_limit),
        cost_estimate=cost,
    )(*ins)

    return jnp.transpose(out_nhwc, (0, 3, 1, 2))                 # NHWC -> NCHW


# ----------------------------------------------------------------------------
# Deterministic parameter construction (matches the module __init__).
# ----------------------------------------------------------------------------
def _xavier_uniform(key, shape_oihw, gain):
    o, i, kh, kw = shape_oihw
    fan_in, fan_out = i * kh * kw, o * kh * kw
    bound = gain * math.sqrt(6.0 / (fan_in + fan_out))
    return jax.random.uniform(key, shape_oihw, jnp.float32, -bound, bound)


def _spectral_normalize(w_oihw, key, n_iter=1, eps=1e-12):
    # One power-iteration step with a deterministic random u (mirrors
    # torch.nn.utils.spectral_norm with n_power_iterations=1).
    o = w_oihw.shape[0]
    wm = w_oihw.reshape(o, -1)
    u = jax.random.normal(key, (o,), jnp.float32)
    u = u / (jnp.linalg.norm(u) + eps)
    v = u
    for _ in range(n_iter):
        v = wm.T @ u
        v = v / (jnp.linalg.norm(v) + eps)
        u = wm @ v
        u = u / (jnp.linalg.norm(u) + eps)
    sigma = u @ (wm @ v)
    return w_oihw / sigma


def _conv_bias(key, fan_in, out_ch):
    bound = 1.0 / math.sqrt(fan_in)
    return jax.random.uniform(key, (out_ch,), jnp.float32, -bound, bound)


def init_block_params(key, in_ch, out_ch, h_ch=None, ksize=3, downsample=False):
    learnable_sc = (in_ch != out_ch) or downsample
    h_ch = in_ch if h_ch is None else out_ch      # exact __init__ logic

    ks = jax.random.split(key, 8)
    w1 = _spectral_normalize(
        _xavier_uniform(ks[0], (h_ch, in_ch, ksize, ksize), math.sqrt(2.0)), ks[1])
    b1 = _conv_bias(ks[2], in_ch * ksize * ksize, h_ch)
    w2 = _spectral_normalize(
        _xavier_uniform(ks[3], (out_ch, h_ch, ksize, ksize), math.sqrt(2.0)), ks[4])
    b2 = _conv_bias(ks[5], h_ch * ksize * ksize, out_ch)
    if learnable_sc:
        wsc = _spectral_normalize(
            _xavier_uniform(ks[6], (out_ch, in_ch, 1, 1), 1.0), ks[7])
        bsc = _conv_bias(ks[7], in_ch, out_ch)
    else:
        wsc, bsc = None, None
    return {"w1": w1, "b1": b1, "w2": w2, "b2": b2, "wsc": wsc, "bsc": bsc}


# ----------------------------------------------------------------------------
# Pure-JAX reference.  With matmul_dtype=bf16 the conv operands are cast at the
# same points as the kernel (f32 accumulation), isolating kernel logic from the
# expected bf16 rounding of the optimized MXU path.
# ----------------------------------------------------------------------------
def ref_forward(x, params, *, downsample=False, matmul_dtype=jnp.float32):
    cast = lambda t: t.astype(matmul_dtype)

    def conv(t, w, b, pad):
        y = jax.lax.conv_general_dilated(
            cast(t), cast(w), (1, 1), ((pad, pad), (pad, pad)),
            dimension_numbers=("NCHW", "OIHW", "NCHW"),
            preferred_element_type=jnp.float32)
        return y + b[None, :, None, None]

    def avg_pool(t):
        s = jax.lax.reduce_window(t, 0.0, jax.lax.add,
                                  (1, 1, 2, 2), (1, 1, 2, 2), "VALID")
        return s / 4.0

    relu = lambda t: jnp.maximum(t, 0.0)
    h = conv(relu(x), params["w1"], params["b1"], 1)
    h = conv(relu(h), params["w2"], params["b2"], 1)
    if downsample:
        h = avg_pool(h)
    if params["wsc"] is not None:
        sc = conv(x, params["wsc"], params["bsc"], 0)
    else:
        sc = x
    if downsample:
        sc = avg_pool(sc)
    return sc + h


if __name__ == "__main__":
    key = jax.random.PRNGKey(0)
    k_x, k_p = jax.random.split(key)

    B, in_ch, out_ch, H, W = 2, 4, 8, 16, 16        # learnable_sc=True (4 != 8)
    downsample = False                              # grid = (2 batch, 2 row strips)

    x = jax.random.normal(k_x, (B, in_ch, H, W), jnp.float32)
    params = init_block_params(k_p, in_ch, out_ch, downsample=downsample)

    y = jax.block_until_ready(block_forward(x, params, downsample=downsample))

    y_ref = ref_forward(x, params, downsample=downsample, matmul_dtype=jnp.bfloat16)
    assert y.shape == y_ref.shape == (B, out_ch, H, W)
    max_err = float(jnp.max(jnp.abs(y - y_ref)))
    assert max_err < 2e-2, f"mismatch vs reference: {max_err}"

    print("KERNEL_OK")
</pallas_src>

<mosaic_0001>
module attributes {stable_mosaic.version = 11 : i64} {
  func.func @_block_kernel(%arg0: i32, %arg1: i32, %arg2: memref<1x20x18x4xbf16, #tpu.memory_space<vmem>>, %arg3: memref<3x12x4xbf16, #tpu.memory_space<vmem>>, %arg4: memref<1x4xf32, #tpu.memory_space<vmem>>, %arg5: memref<3x12x8xbf16, #tpu.memory_space<vmem>>, %arg6: memref<1x8xf32, #tpu.memory_space<vmem>>, %arg7: memref<4x8xbf16, #tpu.memory_space<vmem>>, %arg8: memref<1x8xf32, #tpu.memory_space<vmem>>, %arg9: memref<1x8x16x8xf32, #tpu.memory_space<vmem>>, %arg10: memref<10x18x4xbf16, #tpu.memory_space<vmem>>) attributes {dimension_semantics = [#tpu.dimension_semantics<parallel>, #tpu.dimension_semantics<parallel>], iteration_bounds = array<i64: 2, 2>, scalar_prefetch = 0 : i64, scratch_operands = 1 : i64, tpu.core_type = #tpu.core_type<tc>, window_params = [{transform_indices = @transform_0, window_bounds = array<i64: 1, 20, 18, 4>}, {pipeline_mode = #tpu.pipeline_mode<synchronous>, transform_indices = @transform_1, window_bounds = array<i64: 3, 12, 4>}, {pipeline_mode = #tpu.pipeline_mode<synchronous>, transform_indices = @transform_2, window_bounds = array<i64: 1, 4>}, {pipeline_mode = #tpu.pipeline_mode<synchronous>, transform_indices = @transform_3, window_bounds = array<i64: 3, 12, 8>}, {pipeline_mode = #tpu.pipeline_mode<synchronous>, transform_indices = @transform_4, window_bounds = array<i64: 1, 8>}, {pipeline_mode = #tpu.pipeline_mode<synchronous>, transform_indices = @transform_5, window_bounds = array<i64: 4, 8>}, {pipeline_mode = #tpu.pipeline_mode<synchronous>, transform_indices = @transform_6, window_bounds = array<i64: 1, 8>}, {transform_indices = @transform_7, window_bounds = array<i64: 1, 8, 16, 8>}]} {
    %c8_i32 = arith.constant 8 : i32
    %0 = arith.muli %arg1, %c8_i32 : i32
    %1 = tpu.assume_multiple %0, 8 : i32
    %c0 = arith.constant 0 : index
    %c0_0 = arith.constant 0 : index
    %2 = vector.load %arg4[%c0, %c0_0] : memref<1x4xf32, #tpu.memory_space<vmem>>, vector<1x4xf32>
    %3 = vector.shape_cast %2 : vector<1x4xf32> to vector<1x4xf32>
    %4 = vector.broadcast %3 : vector<1x4xf32> to vector<160x4xf32>
    %c0_i32 = arith.constant 0 : i32
    %5 = arith.addi %1, %c0_i32 : i32
    %c0_1 = arith.constant 0 : index
    %6 = arith.index_cast %5 : i32 to index
    %c0_2 = arith.constant 0 : index
    %c0_3 = arith.constant 0 : index
    %7 = vector.load %arg2[%c0_1, %6, %c0_2, %c0_3] : memref<1x20x18x4xbf16, #tpu.memory_space<vmem>>, vector<1x10x18x4xbf16>
    %8 = vector.shape_cast %7 : vector<1x10x18x4xbf16> to vector<10x18x4xbf16>
    %cst = arith.constant 0.000000e+00 : bf16
    %9 = vector.broadcast %cst : bf16 to vector<10x18x4xbf16>
    %10 = arith.maximumf %8, %9 : vector<10x18x4xbf16>
    %11 = vector.extract_strided_slice %10 {offsets = [0, 0, 0], sizes = [10, 16, 4], strides = [1, 1, 1]} : vector<10x18x4xbf16> to vector<10x16x4xbf16>
    %12 = vector.extract_strided_slice %10 {offsets = [0, 1, 0], sizes = [10, 16, 4], strides = [1, 1, 1]} : vector<10x18x4xbf16> to vector<10x16x4xbf16>
    %13 = vector.extract_strided_slice %10 {offsets = [0, 2, 0], sizes = [10, 16, 4], strides = [1, 1, 1]} : vector<10x18x4xbf16> to vector<10x16x4xbf16>
    %14 = tpu.concatenate %11, %12, %13 in 2 : vector<10x16x4xbf16>, vector<10x16x4xbf16>, vector<10x16x4xbf16> -> vector<10x16x12xbf16>
    %15 = vector.shape_cast %14 : vector<10x16x12xbf16> to vector<160x12xbf16>
    %c0_4 = arith.constant 0 : index
    %c0_5 = arith.constant 0 : index
    %c0_6 = arith.constant 0 : index
    %16 = vector.load %arg3[%c0_4, %c0_5, %c0_6] : memref<3x12x4xbf16, #tpu.memory_space<vmem>>, vector<1x12x4xbf16>
    %17 = vector.shape_cast %16 : vector<1x12x4xbf16> to vector<12x4xbf16>
    %cst_7 = arith.constant dense<0.000000e+00> : vector<160x4xf32>
    %18 = tpu.matmul %15, %17, %cst_7 {dimension_numbers = #tpu.dot_dimension_numbers<[1], [0], [0], [1], [0, 0, 1, 1], [], []>} : vector<160x12xbf16>, vector<12x4xbf16>, vector<160x4xf32> -> vector<160x4xf32>
    %19 = arith.addf %4, %18 : vector<160x4xf32>
    %c1_i32 = arith.constant 1 : i32
    %20 = arith.addi %1, %c1_i32 : i32
    %c0_8 = arith.constant 0 : index
    %21 = arith.index_cast %20 : i32 to index
    %c0_9 = arith.constant 0 : index
    %c0_10 = arith.constant 0 : index
    %22 = vector.load %arg2[%c0_8, %21, %c0_9, %c0_10] : memref<1x20x18x4xbf16, #tpu.memory_space<vmem>>, vector<1x10x18x4xbf16>
    %23 = vector.shape_cast %22 : vector<1x10x18x4xbf16> to vector<10x18x4xbf16>
    %cst_11 = arith.constant 0.000000e+00 : bf16
    %24 = vector.broadcast %cst_11 : bf16 to vector<10x18x4xbf16>
    %25 = arith.maximumf %23, %24 : vector<10x18x4xbf16>
    %26 = vector.extract_strided_slice %25 {offsets = [0, 0, 0], sizes = [10, 16, 4], strides = [1, 1, 1]} : vector<10x18x4xbf16> to vector<10x16x4xbf16>
    %27 = vector.extract_strided_slice %25 {offsets = [0, 1, 0], sizes = [10, 16, 4], strides = [1, 1, 1]} : vector<10x18x4xbf16> to vector<10x16x4xbf16>
    %28 = vector.extract_strided_slice %25 {offsets = [0, 2, 0], sizes = [10, 16, 4], strides = [1, 1, 1]} : vector<10x18x4xbf16> to vector<10x16x4xbf16>
    %29 = tpu.concatenate %26, %27, %28 in 2 : vector<10x16x4xbf16>, vector<10x16x4xbf16>, vector<10x16x4xbf16> -> vector<10x16x12xbf16>
    %30 = vector.shape_cast %29 : vector<10x16x12xbf16> to vector<160x12xbf16>
    %c1 = arith.constant 1 : index
    %c0_12 = arith.constant 0 : index
    %c0_13 = arith.constant 0 : index
    %31 = vector.load %arg3[%c1, %c0_12, %c0_13] : memref<3x12x4xbf16, #tpu.memory_space<vmem>>, vector<1x12x4xbf16>
    %32 = vector.shape_cast %31 : vector<1x12x4xbf16> to vector<12x4xbf16>
    %cst_14 = arith.constant dense<0.000000e+00> : vector<160x4xf32>
    %33 = tpu.matmul %30, %32, %cst_14 {dimension_numbers = #tpu.dot_dimension_numbers<[1], [0], [0], [1], [0, 0, 1, 1], [], []>} : vector<160x12xbf16>, vector<12x4xbf16>, vector<160x4xf32> -> vector<160x4xf32>
    %34 = arith.addf %19, %33 : vector<160x4xf32>
    %c2_i32 = arith.constant 2 : i32
    %35 = arith.addi %1, %c2_i32 : i32
    %c0_15 = arith.constant 0 : index
    %36 = arith.index_cast %35 : i32 to index
    %c0_16 = arith.constant 0 : index
    %c0_17 = arith.constant 0 : index
    %37 = vector.load %arg2[%c0_15, %36, %c0_16, %c0_17] : memref<1x20x18x4xbf16, #tpu.memory_space<vmem>>, vector<1x10x18x4xbf16>
    %38 = vector.shape_cast %37 : vector<1x10x18x4xbf16> to vector<10x18x4xbf16>
    %cst_18 = arith.constant 0.000000e+00 : bf16
    %39 = vector.broadcast %cst_18 : bf16 to vector<10x18x4xbf16>
    %40 = arith.maximumf %38, %39 : vector<10x18x4xbf16>
    %41 = vector.extract_strided_slice %40 {offsets = [0, 0, 0], sizes = [10, 16, 4], strides = [1, 1, 1]} : vector<10x18x4xbf16> to vector<10x16x4xbf16>
    %42 = vector.extract_strided_slice %40 {offsets = [0, 1, 0], sizes = [10, 16, 4], strides = [1, 1, 1]} : vector<10x18x4xbf16> to vector<10x16x4xbf16>
    %43 = vector.extract_strided_slice %40 {offsets = [0, 2, 0], sizes = [10, 16, 4], strides = [1, 1, 1]} : vector<10x18x4xbf16> to vector<10x16x4xbf16>
    %44 = tpu.concatenate %41, %42, %43 in 2 : vector<10x16x4xbf16>, vector<10x16x4xbf16>, vector<10x16x4xbf16> -> vector<10x16x12xbf16>
    %45 = vector.shape_cast %44 : vector<10x16x12xbf16> to vector<160x12xbf16>
    %c2 = arith.constant 2 : index
    %c0_19 = arith.constant 0 : index
    %c0_20 = arith.constant 0 : index
    %46 = vector.load %arg3[%c2, %c0_19, %c0_20] : memref<3x12x4xbf16, #tpu.memory_space<vmem>>, vector<1x12x4xbf16>
    %47 = vector.shape_cast %46 : vector<1x12x4xbf16> to vector<12x4xbf16>
    %cst_21 = arith.constant dense<0.000000e+00> : vector<160x4xf32>
    %48 = tpu.matmul %45, %47, %cst_21 {dimension_numbers = #tpu.dot_dimension_numbers<[1], [0], [0], [1], [0, 0, 1, 1], [], []>} : vector<160x12xbf16>, vector<12x4xbf16>, vector<160x4xf32> -> vector<160x4xf32>
    %49 = arith.addf %34, %48 : vector<160x4xf32>
    %cst_22 = arith.constant 0.000000e+00 : f32
    %50 = vector.broadcast %cst_22 : f32 to vector<160x4xf32>
    %51 = arith.maximumf %49, %50 : vector<160x4xf32>
    %52 = arith.truncf %51 : vector<160x4xf32> to vector<160x4xbf16>
    %cst_23 = arith.constant 0.000000e+00 : bf16
    %53 = vector.broadcast %cst_23 : bf16 to vector<10x1x4xbf16>
    %c0_24 = arith.constant 0 : index
    %c0_25 = arith.constant 0 : index
    %c0_26 = arith.constant 0 : index
    %54 = vector.load %arg10[%c0_24, %c0_25, %c0_26] : memref<10x18x4xbf16, #tpu.memory_space<vmem>>, vector<10x1x4xbf16>
    tpu.vector_store %arg10[%c0_24, %c0_25, %c0_26], %53 {strides = array<i32>} : memref<10x18x4xbf16, #tpu.memory_space<vmem>>, vector<10x1x4xbf16>,
    %cst_27 = arith.constant 0.000000e+00 : bf16
    %55 = vector.broadcast %cst_27 : bf16 to vector<10x1x4xbf16>
    %c0_28 = arith.constant 0 : index
    %c17 = arith.constant 17 : index
    %c0_29 = arith.constant 0 : index
    %56 = vector.load %arg10[%c0_28, %c17, %c0_29] : memref<10x18x4xbf16, #tpu.memory_space<vmem>>, vector<10x1x4xbf16>
    tpu.vector_store %arg10[%c0_28, %c17, %c0_29], %55 {strides = array<i32>} : memref<10x18x4xbf16, #tpu.memory_space<vmem>>, vector<10x1x4xbf16>,
    %57 = vector.shape_cast %52 : vector<160x4xbf16> to vector<10x16x4xbf16>
    %c0_30 = arith.constant 0 : index
    %c1_31 = arith.constant 1 : index
    %c0_32 = arith.constant 0 : index
    %58 = vector.load %arg10[%c0_30, %c1_31, %c0_32] : memref<10x18x4xbf16, #tpu.memory_space<vmem>>, vector<10x16x4xbf16>
    tpu.vector_store %arg10[%c0_30, %c1_31, %c0_32], %57 {strides = array<i32>} : memref<10x18x4xbf16, #tpu.memory_space<vmem>>, vector<10x16x4xbf16>,
    %cst_33 = arith.constant 0.000000e+00 : bf16
    %59 = vector.broadcast %cst_33 : bf16 to vector<18x4xbf16>
    %c0_i32_34 = arith.constant 0 : i32
    %60 = arith.cmpi eq, %arg1, %c0_i32_34 : i32
    %61 = arith.extui %60 : i1 to i32
    %c0_i32_35 = arith.constant 0 : i32
    %62 = arith.cmpi ne, %61, %c0_i32_35 : i32
    scf.if %62 {
      %c0_74 = arith.constant 0 : index
      %c0_75 = arith.constant 0 : index
      %c0_76 = arith.constant 0 : index
      %114 = vector.load %arg10[%c0_74, %c0_75, %c0_76] : memref<10x18x4xbf16, #tpu.memory_space<vmem>>, vector<1x18x4xbf16>
      %115 = vector.shape_cast %114 : vector<1x18x4xbf16> to vector<18x4xbf16>
      %116 = vector.shape_cast %59 : vector<18x4xbf16> to vector<1x18x4xbf16>
      tpu.vector_store %arg10[%c0_74, %c0_75, %c0_76], %116 {strides = array<i32>} : memref<10x18x4xbf16, #tpu.memory_space<vmem>>, vector<1x18x4xbf16>,
    } else {
    }
    %c1_i32_36 = arith.constant 1 : i32
    %63 = arith.cmpi eq, %arg1, %c1_i32_36 : i32
    %64 = arith.extui %63 : i1 to i32
    %c0_i32_37 = arith.constant 0 : i32
    %65 = arith.cmpi ne, %64, %c0_i32_37 : i32
    scf.if %65 {
      %c9 = arith.constant 9 : index
      %c0_74 = arith.constant 0 : index
      %c0_75 = arith.constant 0 : index
      %114 = vector.load %arg10[%c9, %c0_74, %c0_75] : memref<10x18x4xbf16, #tpu.memory_space<vmem>>, vector<1x18x4xbf16>
      %115 = vector.shape_cast %114 : vector<1x18x4xbf16> to vector<18x4xbf16>
      %116 = vector.shape_cast %59 : vector<18x4xbf16> to vector<1x18x4xbf16>
      tpu.vector_store %arg10[%c9, %c0_74, %c0_75], %116 {strides = array<i32>} : memref<10x18x4xbf16, #tpu.memory_space<vmem>>, vector<1x18x4xbf16>,
    } else {
    }
    %c0_38 = arith.constant 0 : index
    %c0_39 = arith.constant 0 : index
    %66 = vector.load %arg6[%c0_38, %c0_39] : memref<1x8xf32, #tpu.memory_space<vmem>>, vector<1x8xf32>
    %67 = vector.shape_cast %66 : vector<1x8xf32> to vector<1x8xf32>
    %68 = vector.broadcast %67 : vector<1x8xf32> to vector<128x8xf32>
    %c0_40 = arith.constant 0 : index
    %c0_41 = arith.constant 0 : index
    %c0_42 = arith.constant 0 : index
    %69 = vector.load %arg10[%c0_40, %c0_41, %c0_42] : memref<10x18x4xbf16, #tpu.memory_space<vmem>>, vector<8x18x4xbf16>
    %70 = vector.extract_strided_slice %69 {offsets = [0, 0, 0], sizes = [8, 16, 4], strides = [1, 1, 1]} : vector<8x18x4xbf16> to vector<8x16x4xbf16>
    %71 = vector.extract_strided_slice %69 {offsets = [0, 1, 0], sizes = [8, 16, 4], strides = [1, 1, 1]} : vector<8x18x4xbf16> to vector<8x16x4xbf16>
    %72 = vector.extract_strided_slice %69 {offsets = [0, 2, 0], sizes = [8, 16, 4], strides = [1, 1, 1]} : vector<8x18x4xbf16> to vector<8x16x4xbf16>
    %73 = tpu.concatenate %70, %71, %72 in 2 : vector<8x16x4xbf16>, vector<8x16x4xbf16>, vector<8x16x4xbf16> -> vector<8x16x12xbf16>
    %74 = vector.shape_cast %73 : vector<8x16x12xbf16> to vector<128x12xbf16>
    %c0_43 = arith.constant 0 : index
    %c0_44 = arith.constant 0 : index
    %c0_45 = arith.constant 0 : index
    %75 = vector.load %arg5[%c0_43, %c0_44, %c0_45] : memref<3x12x8xbf16, #tpu.memory_space<vmem>>, vector<1x12x8xbf16>
    %76 = vector.shape_cast %75 : vector<1x12x8xbf16> to vector<12x8xbf16>
    %cst_46 = arith.constant dense<0.000000e+00> : vector<128x8xf32>
    %77 = tpu.matmul %74, %76, %cst_46 {dimension_numbers = #tpu.dot_dimension_numbers<[1], [0], [0], [1], [0, 0, 1, 1], [], []>} : vector<128x12xbf16>, vector<12x8xbf16>, vector<128x8xf32> -> vector<128x8xf32>
    %78 = arith.addf %68, %77 : vector<128x8xf32>
    %c1_47 = arith.constant 1 : index
    %c0_48 = arith.constant 0 : index
    %c0_49 = arith.constant 0 : index
    %79 = vector.load %arg10[%c1_47, %c0_48, %c0_49] : memref<10x18x4xbf16, #tpu.memory_space<vmem>>, vector<8x18x4xbf16>
    %80 = vector.extract_strided_slice %79 {offsets = [0, 0, 0], sizes = [8, 16, 4], strides = [1, 1, 1]} : vector<8x18x4xbf16> to vector<8x16x4xbf16>
    %81 = vector.extract_strided_slice %79 {offsets = [0, 1, 0], sizes = [8, 16, 4], strides = [1, 1, 1]} : vector<8x18x4xbf16> to vector<8x16x4xbf16>
    %82 = vector.extract_strided_slice %79 {offsets = [0, 2, 0], sizes = [8, 16, 4], strides = [1, 1, 1]} : vector<8x18x4xbf16> to vector<8x16x4xbf16>
    %83 = tpu.concatenate %80, %81, %82 in 2 : vector<8x16x4xbf16>, vector<8x16x4xbf16>, vector<8x16x4xbf16> -> vector<8x16x12xbf16>
    %84 = vector.shape_cast %83 : vector<8x16x12xbf16> to vector<128x12xbf16>
    %c1_50 = arith.constant 1 : index
    %c0_51 = arith.constant 0 : index
    %c0_52 = arith.constant 0 : index
    %85 = vector.load %arg5[%c1_50, %c0_51, %c0_52] : memref<3x12x8xbf16, #tpu.memory_space<vmem>>, vector<1x12x8xbf16>
    %86 = vector.shape_cast %85 : vector<1x12x8xbf16> to vector<12x8xbf16>
    %cst_53 = arith.constant dense<0.000000e+00> : vector<128x8xf32>
    %87 = tpu.matmul %84, %86, %cst_53 {dimension_numbers = #tpu.dot_dimension_numbers<[1], [0], [0], [1], [0, 0, 1, 1], [], []>} : vector<128x12xbf16>, vector<12x8xbf16>, vector<128x8xf32> -> vector<128x8xf32>
    %88 = arith.addf %78, %87 : vector<128x8xf32>
    %c2_54 = arith.constant 2 : index
    %c0_55 = arith.constant 0 : index
    %c0_56 = arith.constant 0 : index
    %89 = vector.load %arg10[%c2_54, %c0_55, %c0_56] : memref<10x18x4xbf16, #tpu.memory_space<vmem>>, vector<8x18x4xbf16>
    %90 = vector.extract_strided_slice %89 {offsets = [0, 0, 0], sizes = [8, 16, 4], strides = [1, 1, 1]} : vector<8x18x4xbf16> to vector<8x16x4xbf16>
    %91 = vector.extract_strided_slice %89 {offsets = [0, 1, 0], sizes = [8, 16, 4], strides = [1, 1, 1]} : vector<8x18x4xbf16> to vector<8x16x4xbf16>
    %92 = vector.extract_strided_slice %89 {offsets = [0, 2, 0], sizes = [8, 16, 4], strides = [1, 1, 1]} : vector<8x18x4xbf16> to vector<8x16x4xbf16>
    %93 = tpu.concatenate %90, %91, %92 in 2 : vector<8x16x4xbf16>, vector<8x16x4xbf16>, vector<8x16x4xbf16> -> vector<8x16x12xbf16>
    %94 = vector.shape_cast %93 : vector<8x16x12xbf16> to vector<128x12xbf16>
    %c2_57 = arith.constant 2 : index
    %c0_58 = arith.constant 0 : index
    %c0_59 = arith.constant 0 : index
    %95 = vector.load %arg5[%c2_57, %c0_58, %c0_59] : memref<3x12x8xbf16, #tpu.memory_space<vmem>>, vector<1x12x8xbf16>
    %96 = vector.shape_cast %95 : vector<1x12x8xbf16> to vector<12x8xbf16>
    %cst_60 = arith.constant dense<0.000000e+00> : vector<128x8xf32>
    %97 = tpu.matmul %94, %96, %cst_60 {dimension_numbers = #tpu.dot_dimension_numbers<[1], [0], [0], [1], [0, 0, 1, 1], [], []>} : vector<128x12xbf16>, vector<12x8xbf16>, vector<128x8xf32> -> vector<128x8xf32>
    %98 = arith.addf %88, %97 : vector<128x8xf32>
    %c2_i32_61 = arith.constant 2 : i32
    %99 = arith.addi %1, %c2_i32_61 : i32
    %c0_62 = arith.constant 0 : index
    %100 = arith.index_cast %99 : i32 to index
    %c1_63 = arith.constant 1 : index
    %c0_64 = arith.constant 0 : index
    %101 = vector.load %arg2[%c0_62, %100, %c1_63, %c0_64] : memref<1x20x18x4xbf16, #tpu.memory_space<vmem>>, vector<1x8x16x4xbf16>
    %102 = vector.shape_cast %101 : vector<1x8x16x4xbf16> to vector<8x16x4xbf16>
    %103 = vector.shape_cast %102 : vector<8x16x4xbf16> to vector<128x4xbf16>
    %c0_65 = arith.constant 0 : index
    %c0_66 = arith.constant 0 : index
    %104 = vector.load %arg7[%c0_65, %c0_66] : memref<4x8xbf16, #tpu.memory_space<vmem>>, vector<4x8xbf16>
    %cst_67 = arith.constant dense<0.000000e+00> : vector<128x8xf32>
    %105 = tpu.matmul %103, %104, %cst_67 {dimension_numbers = #tpu.dot_dimension_numbers<[1], [0], [0], [1], [0, 0, 1, 1], [], []>} : vector<128x4xbf16>, vector<4x8xbf16>, vector<128x8xf32> -> vector<128x8xf32>
    %c0_68 = arith.constant 0 : index
    %c0_69 = arith.constant 0 : index
    %106 = vector.load %arg8[%c0_68, %c0_69] : memref<1x8xf32, #tpu.memory_space<vmem>>, vector<1x8xf32>
    %107 = vector.broadcast %106 : vector<1x8xf32> to vector<128x8xf32>
    %108 = arith.addf %105, %107 : vector<128x8xf32>
    %109 = arith.addf %108, %98 : vector<128x8xf32>
    %110 = vector.shape_cast %109 : vector<128x8xf32> to vector<8x16x8xf32>
    %c0_70 = arith.constant 0 : index
    %c0_71 = arith.constant 0 : index
    %c0_72 = arith.constant 0 : index
    %c0_73 = arith.constant 0 : index
    %111 = vector.load %arg9[%c0_70, %c0_71, %c0_72, %c0_73] : memref<1x8x16x8xf32, #tpu.memory_space<vmem>>, vector<1x8x16x8xf32>
    %112 = vector.shape_cast %111 : vector<1x8x16x8xf32> to vector<8x16x8xf32>
    %113 = vector.shape_cast %110 : vector<8x16x8xf32> to vector<1x8x16x8xf32>
    tpu.vector_store %arg9[%c0_70, %c0_71, %c0_72, %c0_73], %113 {strides = array<i32>} : memref<1x8x16x8xf32, #tpu.memory_space<vmem>>, vector<1x8x16x8xf32>,
    return
  }
  func.func @transform_0(%arg0: i32, %arg1: i32) -> (i32, i32, i32, i32) {
    %c0_i32 = arith.constant 0 : i32
    %c0_i32_0 = arith.constant 0 : i32
    %c0_i32_1 = arith.constant 0 : i32
    %c0_i32_2 = arith.constant 0 : i32
    return %arg0, %c0_i32, %c0_i32_0, %c0_i32_1 : i32, i32, i32, i32
  }
  func.func @transform_1(%arg0: i32, %arg1: i32) -> (i32, i32, i32) {
    %c0_i32 = arith.constant 0 : i32
    %c0_i32_0 = arith.constant 0 : i32
    %c0_i32_1 = arith.constant 0 : i32
    %c0_i32_2 = arith.constant 0 : i32
    return %c0_i32, %c0_i32_0, %c0_i32_1 : i32, i32, i32
  }
  func.func @transform_2(%arg0: i32, %arg1: i32) -> (i32, i32) {
    %c0_i32 = arith.constant 0 : i32
    %c0_i32_0 = arith.constant 0 : i32
    %c0_i32_1 = arith.constant 0 : i32
    return %c0_i32, %c0_i32_0 : i32, i32
  }
  func.func @transform_3(%arg0: i32, %arg1: i32) -> (i32, i32, i32) {
    %c0_i32 = arith.constant 0 : i32
    %c0_i32_0 = arith.constant 0 : i32
    %c0_i32_1 = arith.constant 0 : i32
    %c0_i32_2 = arith.constant 0 : i32
    return %c0_i32, %c0_i32_0, %c0_i32_1 : i32, i32, i32
  }
  func.func @transform_4(%arg0: i32, %arg1: i32) -> (i32, i32) {
    %c0_i32 = arith.constant 0 : i32
    %c0_i32_0 = arith.constant 0 : i32
    %c0_i32_1 = arith.constant 0 : i32
    return %c0_i32, %c0_i32_0 : i32, i32
  }
  func.func @transform_5(%arg0: i32, %arg1: i32) -> (i32, i32) {
    %c0_i32 = arith.constant 0 : i32
    %c0_i32_0 = arith.constant 0 : i32
    %c0_i32_1 = arith.constant 0 : i32
    return %c0_i32, %c0_i32_0 : i32, i32
  }
  func.func @transform_6(%arg0: i32, %arg1: i32) -> (i32, i32) {
    %c0_i32 = arith.constant 0 : i32
    %c0_i32_0 = arith.constant 0 : i32
    %c0_i32_1 = arith.constant 0 : i32
    return %c0_i32, %c0_i32_0 : i32, i32
  }
  func.func @transform_7(%arg0: i32, %arg1: i32) -> (i32, i32, i32, i32) {
    %c0_i32 = arith.constant 0 : i32
    %c0_i32_0 = arith.constant 0 : i32
    %c0_i32_1 = arith.constant 0 : i32
    return %arg0, %arg1, %c0_i32, %c0_i32_0 : i32, i32, i32, i32
  }
}

</mosaic_0001>

<llo_original>
// kernel: tpu_custom_call.1
$region0: #{tpu_custom_call.1}
  #allocation0 [shape = 'u32[]', space=smem, size = 0x4, offset = 0x4, fixed_abs, tag = 'smem constant byte address 0x4 - core index']
  #allocation1 [shape = 'u32[144,128]{1,0:T(1,128)}', space=vmem, size = 0x12000, scoped, tag = 'internal scratch']
  #allocation2 [shape = 'bf16[10,18,4]{2,1,0:T(8,128)(2,1)}', space=vmem, size = 0xf000, scoped, tag = 'scratch operand']
  %s0 = inlined_call_operand.vmem [shape: bf16[2,20,18,4], index: 0, kind: input, shape index: {}]
  %s1 = inlined_call_operand.vmem [shape: bf16[3,12,4], index: 1, kind: input, shape index: {}]
  %s2 = inlined_call_operand.vmem [shape: f32[1,4], index: 2, kind: input, shape index: {}]
  %s3 = inlined_call_operand.vmem [shape: bf16[3,12,8], index: 3, kind: input, shape index: {}]
  %s4 = inlined_call_operand.vmem [shape: f32[1,8], index: 4, kind: input, shape index: {}]
  %s5 = inlined_call_operand.vmem [shape: bf16[4,8], index: 5, kind: input, shape index: {}]
  %s6 = inlined_call_operand.vmem [shape: f32[1,8], index: 6, kind: input, shape index: {}]
  %s7 = inlined_call_operand.vmem [shape: f32[2,16,16,8], index: 7, kind: output, shape index: {}]
  %s8 = sld [smem:[#allocation0]]
  $region69: #{tpu_custom_call.1} parent=0
    _
  %s10 = ssub.s32 1, %s8
  %s11 = scalar_select 0, %s10, %s8
  loop: start=0, step=1, limit=6
  $region2: #{tpu_custom_call.1} parent=0 // loop_pre_header
    _
  $region3: #{tpu_custom_call.1} parent=0 // loop_header
    %s13 = sphi 0, %s17
    %p14 = scmp.ge.s32.totalorder %s13, 6
    %s20 = sphi 0, %s32
    %s21 = sphi 0, %s28
    %s22 = sphi 0, %s20
    %s23 = sphi 0, %s21
    %s24 = sphi 0, %s22
    %s25 = sphi 0, %s23
    %s35 = sphi 0, %s37
    %s38 = sphi 0, %s35
    %s39 = sphi 0, %s38
    %s55 = sphi 0, %s39
    %s59 = sphi 0, %s59
    %s61 = sphi 0, %s59
    %s62 = sphi 0, %s61
    %s76 = sphi 0, %s62
    %s80 = sphi 0, %s80
    %s82 = sphi 0, %s80
    %s83 = sphi 0, %s82
    %s97 = sphi 0, %s83
    %s101 = sphi 0, %s101
    %s103 = sphi 0, %s101
    %s104 = sphi 0, %s103
    %s118 = sphi 0, %s104
    %s122 = sphi 0, %s122
    %s124 = sphi 0, %s122
    %s125 = sphi 0, %s124
    %s139 = sphi 0, %s125
    %s143 = sphi 0, %s143
    %s145 = sphi 0, %s143
    %s146 = sphi 0, %s145
    %s160 = sphi 0, %s146
    %s164 = sphi 0, %s164
    %s166 = sphi 0, %s164
    %s167 = sphi 0, %s166
    %s181 = sphi 0, %s167
    %s189 = sphi 0, %s191
    %s192 = sphi 0, %s189
    %s193 = sphi 0, %s192
    %s209 = sphi 0, %s193
  $region4: #{tpu_custom_call.1} parent=0 // loop_header_branch
    %16 = sbr.rel (%p14) target = $region8
  $region5: #{tpu_custom_call.1} parent=0 // loop_body
    %s18 = ssub.s32 %s13, 1
    %s19 = ssub.s32 %s13, 2
    %s26 = sadd.s32 1, %s21
    %p27 = scmp.ge.s32.totalorder %s26, 2
    %s28 = scalar_select %p27, 0, %s26
    %s29 = sadd.s32 1, %s20
    %s30 = scalar_select %p27, %s29, %s20
    %p31 = scmp.ge.s32.totalorder %s30, 2
    %s32 = scalar_select %p31, 0, %s30
    %s33 = ssub.s32 %s20, %s32
    %p34 = scmp.eq.s32.totalorder %s33, 0
    %s36 = sadd.s32 %s35, 1
    %s37 = scalar_select %p34, %s35, %s36
    %p40 = pneg %p34
    %p41 = scmp.eq.s32.totalorder %s13, 3
    %p42 = por %p40, %p41
    %p43 = scmp.ne.s32.totalorder %s35, %s38
    %p44 = scmp.eq.s32.totalorder %s13, 0
    %p45 = por %p43, %p44
    %p46 = scmp.ne.s32.totalorder %s35, %s38
    %p47 = scmp.eq.s32.totalorder %s18, 3
    %p48 = por %p46, %p47
    %p49 = scmp.ne.s32.totalorder %s38, %s39
    %p50 = scmp.eq.s32.totalorder %s18, 0
    %p51 = por %p49, %p50
    %p52 = scmp.ne.s32.totalorder %s38, %s39
    %p53 = scmp.eq.s32.totalorder %s19, 3
    %p54 = por %p52, %p53
    %p56 = scmp.ne.s32.totalorder %s39, %s55
    %p57 = scmp.eq.s32.totalorder %s19, 0
    %p58 = por %p56, %p57
    %s60 = sadd.s32 %s59, 1
    %p63 = scmp.eq.s32.totalorder %s13, 3
    %p64 = scmp.ne.s32.totalorder %s59, %s61
    %p65 = scmp.eq.s32.totalorder %s13, 0
    %p66 = por %p64, %p65
    %p67 = scmp.ne.s32.totalorder %s59, %s61
    %p68 = scmp.eq.s32.totalorder %s18, 3
    %p69 = por %p67, %p68
    %p70 = scmp.ne.s32.totalorder %s61, %s62
    %p71 = scmp.eq.s32.totalorder %s18, 0
    %p72 = por %p70, %p71
    %p73 = scmp.ne.s32.totalorder %s61, %s62
    %p74 = scmp.eq.s32.totalorder %s19, 3
    %p75 = por %p73, %p74
    %p77 = scmp.ne.s32.totalorder %s62, %s76
    %p78 = scmp.eq.s32.totalorder %s19, 0
    %p79 = por %p77, %p78
    %s81 = sadd.s32 %s80, 1
    %p84 = scmp.eq.s32.totalorder %s13, 3
    %p85 = scmp.ne.s32.totalorder %s80, %s82
    %p86 = scmp.eq.s32.totalorder %s13, 0
    %p87 = por %p85, %p86
    %p88 = scmp.ne.s32.totalorder %s80, %s82
    %p89 = scmp.eq.s32.totalorder %s18, 3
    %p90 = por %p88, %p89
    %p91 = scmp.ne.s32.totalorder %s82, %s83
    %p92 = scmp.eq.s32.totalorder %s18, 0
    %p93 = por %p91, %p92
    %p94 = scmp.ne.s32.totalorder %s82, %s83
    %p95 = scmp.eq.s32.totalorder %s19, 3
    %p96 = por %p94, %p95
    %p98 = scmp.ne.s32.totalorder %s83, %s97
    %p99 = scmp.eq.s32.totalorder %s19, 0
    %p100 = por %p98, %p99
    %s102 = sadd.s32 %s101, 1
    %p105 = scmp.eq.s32.totalorder %s13, 3
    %p106 = scmp.ne.s32.totalorder %s101, %s103
    %p107 = scmp.eq.s32.totalorder %s13, 0
    %p108 = por %p106, %p107
    %p109 = scmp.ne.s32.totalorder %s101, %s103
    %p110 = scmp.eq.s32.totalorder %s18, 3
    %p111 = por %p109, %p110
    %p112 = scmp.ne.s32.totalorder %s103, %s104
    %p113 = scmp.eq.s32.totalorder %s18, 0
    %p114 = por %p112, %p113
    %p115 = scmp.ne.s32.totalorder %s103, %s104
    %p116 = scmp.eq.s32.totalorder %s19, 3
    %p117 = por %p115, %p116
    %p119 = scmp.ne.s32.totalorder %s104, %s118
    %p120 = scmp.eq.s32.totalorder %s19, 0
    %p121 = por %p119, %p120
    %s123 = sadd.s32 %s122, 1
    %p126 = scmp.eq.s32.totalorder %s13, 3
    %p127 = scmp.ne.s32.totalorder %s122, %s124
    %p128 = scmp.eq.s32.totalorder %s13, 0
    %p129 = por %p127, %p128
    %p130 = scmp.ne.s32.totalorder %s122, %s124
    %p131 = scmp.eq.s32.totalorder %s18, 3
    %p132 = por %p130, %p131
    %p133 = scmp.ne.s32.totalorder %s124, %s125
    %p134 = scmp.eq.s32.totalorder %s18, 0
    %p135 = por %p133, %p134
    %p136 = scmp.ne.s32.totalorder %s124, %s125
    %p137 = scmp.eq.s32.totalorder %s19, 3
    %p138 = por %p136, %p137
    %p140 = scmp.ne.s32.totalorder %s125, %s139
    %p141 = scmp.eq.s32.totalorder %s19, 0
    %p142 = por %p140, %p141
    %s144 = sadd.s32 %s143, 1
    %p147 = scmp.eq.s32.totalorder %s13, 3
    %p148 = scmp.ne.s32.totalorder %s143, %s145
    %p149 = scmp.eq.s32.totalorder %s13, 0
    %p150 = por %p148, %p149
    %p151 = scmp.ne.s32.totalorder %s143, %s145
    %p152 = scmp.eq.s32.totalorder %s18, 3
    %p153 = por %p151, %p152
    %p154 = scmp.ne.s32.totalorder %s145, %s146
    %p155 = scmp.eq.s32.totalorder %s18, 0
    %p156 = por %p154, %p155
    %p157 = scmp.ne.s32.totalorder %s145, %s146
    %p158 = scmp.eq.s32.totalorder %s19, 3
    %p159 = por %p157, %p158
    %p161 = scmp.ne.s32.totalorder %s146, %s160
    %p162 = scmp.eq.s32.totalorder %s19, 0
    %p163 = por %p161, %p162
    %s165 = sadd.s32 %s164, 1
    %p168 = scmp.eq.s32.totalorder %s13, 3
    %p169 = scmp.ne.s32.totalorder %s164, %s166
    %p170 = scmp.eq.s32.totalorder %s13, 0
    %p171 = por %p169, %p170
    %p172 = scmp.ne.s32.totalorder %s164, %s166
    %p173 = scmp.eq.s32.totalorder %s18, 3
    %p174 = por %p172, %p173
    %p175 = scmp.ne.s32.totalorder %s166, %s167
    %p176 = scmp.eq.s32.totalorder %s18, 0
    %p177 = por %p175, %p176
    %p178 = scmp.ne.s32.totalorder %s166, %s167
    %p179 = scmp.eq.s32.totalorder %s19, 3
    %p180 = por %p178, %p179
    %p182 = scmp.ne.s32.totalorder %s167, %s181
    %p183 = scmp.eq.s32.totalorder %s19, 0
    %p184 = por %p182, %p183
    %s185 = ssub.s32 %s20, %s32
    %s186 = ssub.s32 %s21, %s28
    %s187 = sor.u32 %s185, %s186
    %p188 = scmp.eq.s32.totalorder %s187, 0
    %s190 = sadd.s32 %s189, 1
    %s191 = scalar_select %p188, %s189, %s190
    %p194 = pneg %p188
    %p195 = scmp.eq.s32.totalorder %s13, 3
    %p196 = por %p194, %p195
    %p197 = scmp.ne.s32.totalorder %s189, %s192
    %p198 = scmp.eq.s32.totalorder %s13, 0
    %p199 = por %p197, %p198
    %p200 = scmp.ne.s32.totalorder %s189, %s192
    %p201 = scmp.eq.s32.totalorder %s18, 3
    %p202 = por %p200, %p201
    %p203 = scmp.ne.s32.totalorder %s192, %s193
    %p204 = scmp.eq.s32.totalorder %s18, 0
    %p205 = por %p203, %p204
    %p206 = scmp.ne.s32.totalorder %s192, %s193
    %p207 = scmp.eq.s32.totalorder %s19, 3
    %p208 = por %p206, %p207
    %p210 = scmp.ne.s32.totalorder %s193, %s209
    %p211 = scmp.eq.s32.totalorder %s19, 0
    %p212 = por %p210, %p211
    %p213 = scmp.le.s32.totalorder 1, %s13
    %p214 = scmp.lt.s32.totalorder %s13, 5
    %p215 = pnand %p213, %p214
    %p216 = pneg %p215
    // Predicated region
    $region9: #{tpu_custom_call.1} parent=5 // pred_check
      _
    $region10: #{tpu_custom_call.1} parent=5 // pred_check_branch
      %218 = sbr.rel (%p215) target = $region12
    $region11: #{tpu_custom_call.1} parent=5 // pred_region
      %s219 = ssub.s32 %s13, 1
      // Predicated region
      $region13: #{tpu_custom_call.1} parent=11 // pred_check
        %p220 = pneg %p72
      $region14: #{tpu_custom_call.1} parent=11 // pred_check_branch
        %222 = sbr.rel (%p220) target = $region16
      $region15: #{tpu_custom_call.1} parent=11 // pred_region
        _
      $region16: #{tpu_custom_call.1} parent=11 // pred_fallthru
        _
      // Predicated region
      $region17: #{tpu_custom_call.1} parent=11 // pred_check
        %p223 = pneg %p93
      $region18: #{tpu_custom_call.1} parent=11 // pred_check_branch
        %225 = sbr.rel (%p223) target = $region20
      $region19: #{tpu_custom_call.1} parent=11 // pred_region
        _
      $region20: #{tpu_custom_call.1} parent=11 // pred_fallthru
        _
      // Predicated region
      $region21: #{tpu_custom_call.1} parent=11 // pred_check
        %p226 = pneg %p114
      $region22: #{tpu_custom_call.1} parent=11 // pred_check_branch
        %228 = sbr.rel (%p226) target = $region24
      $region23: #{tpu_custom_call.1} parent=11 // pred_region
        _
      $region24: #{tpu_custom_call.1} parent=11 // pred_fallthru
        _
      // Predicated region
      $region25: #{tpu_custom_call.1} parent=11 // pred_check
        %p229 = pneg %p135
      $region26: #{tpu_custom_call.1} parent=11 // pred_check_branch
        %231 = sbr.rel (%p229) target = $region28
      $region27: #{tpu_custom_call.1} parent=11 // pred_region
        _
      $region28: #{tpu_custom_call.1} parent=11 // pred_fallthru
        _
      // Predicated region
      $region29: #{tpu_custom_call.1} parent=11 // pred_check
        %p232 = pneg %p156
      $region30: #{tpu_custom_call.1} parent=11 // pred_check_branch
        %234 = sbr.rel (%p232) target = $region32
      $region31: #{tpu_custom_call.1} parent=11 // pred_region
        _
      $region32: #{tpu_custom_call.1} parent=11 // pred_fallthru
        _
      // Predicated region
      $region33: #{tpu_custom_call.1} parent=11 // pred_check
        %p235 = pneg %p177
      $region34: #{tpu_custom_call.1} parent=11 // pred_check_branch
        %237 = sbr.rel (%p235) target = $region36
      $region35: #{tpu_custom_call.1} parent=11 // pred_region
        _
      $region36: #{tpu_custom_call.1} parent=11 // pred_fallthru
        _
    $region12: #{tpu_custom_call.1} parent=5 // pred_fallthru
      _
    %p238 = scmp.lt.s32.totalorder %s13, 4
    // Predicated region
    $region37: #{tpu_custom_call.1} parent=5 // pred_check
      %p239 = pneg %p238
    $region38: #{tpu_custom_call.1} parent=5 // pred_check_branch
      %241 = sbr.rel (%p239) target = $region40
    $region39: #{tpu_custom_call.1} parent=5 // pred_region
      // Predicated region
      $region41: #{tpu_custom_call.1} parent=39 // pred_check
        %p242 = pneg %p45
      $region42: #{tpu_custom_call.1} parent=39 // pred_check_branch
        %244 = sbr.rel (%p242) target = $region44
      $region43: #{tpu_custom_call.1} parent=39 // pred_region
        %p245 = scmp.lt.s32.totalorder %s20, 1
        %s246 = scalar_select %p245, %s20, 1
        %s247 = smul.addr %s246, 60
        %s248 = smul.addr %s247, 4
        %s249 = scalar_lea.vmem %s0, %s248
      $region44: #{tpu_custom_call.1} parent=39 // pred_fallthru
        _
    $region40: #{tpu_custom_call.1} parent=5 // pred_fallthru
      _
    %p250 = scmp.le.s32.totalorder 1, %s13
    %p251 = scmp.lt.s32.totalorder %s13, 5
    %p252 = pnand %p250, %p251
    %p253 = pneg %p252
    // Predicated region
    $region45: #{tpu_custom_call.1} parent=5 // pred_check
      _
    $region46: #{tpu_custom_call.1} parent=5 // pred_check_branch
      %255 = sbr.rel (%p252) target = $region48
    $region47: #{tpu_custom_call.1} parent=5 // pred_region
      %s256 = ssub.s32 %s13, 1
      %p257 = scmp.lt.s32.totalorder %s22, 1
      %s258 = scalar_select %p257, %s22, 1
      %s259 = smul.addr %s258, 60
      %s260 = smul.addr %s259, 4
      %s261 = scalar_lea.vmem %s0, %s260
      %p262 = pneg %p51
      %p263 = pneg %p48
      %p264 = pneg %p72
      %p265 = pneg %p69
      %p266 = pneg %p93
      %p267 = pneg %p90
      %p268 = pneg %p114
      %p269 = pneg %p111
      %p270 = pneg %p135
      %p271 = pneg %p132
      %p272 = pneg %p156
      %p273 = pneg %p153
      %p274 = pneg %p177
      %p275 = pneg %p174
      %p276 = pneg %p205
      %p277 = pneg %p202
      %s278 = smul.u32 8, %s23
      %p279 = scmp.lt.s32.totalorder %s22, 1
      %s280 = scalar_select %p279, %s22, 1
      %p281 = scmp.lt.s32.totalorder %s278, 15
      %s282 = scalar_select %p281, %s278, 15
      %s283 = smul.addr %s282, 2
      %s284 = smul.addr %s280, 32
      %s285 = sadd.s32 %s283, %s284
      %s286 = smul.addr %s285, 8
      %s287 = scalar_lea.vmem %s7, %s286
      %p288 = scmp.lt.s32.totalorder %s22, 1
      %s289 = scalar_select %p288, %s22, 1
      %s290 = smul.addr %s289, 60
      %s291 = smul.addr %s290, 4
      %s292 = scalar_lea.vmem %s0, %s291
      %s293 = smul.u32 8, %s23
      %p294 = scmp.lt.s32.totalorder %s22, 1
      %s295 = scalar_select %p294, %s22, 1
      %p296 = scmp.lt.s32.totalorder %s293, 15
      %s297 = scalar_select %p296, %s293, 15
      %s298 = smul.addr %s297, 2
      %s299 = smul.addr %s295, 32
      %s300 = sadd.s32 %s298, %s299
      %s301 = smul.addr %s300, 8
      %s302 = scalar_lea.vmem %s7, %s301
      %s303 = smul.u32 8, %s23
      %s305 = smul.u32 %s23, 8
      %v306 = vld [vmem:[%s2] sm:$0x1]
      %v308 = vlaneseq
      %v309 = vshrl.u32 %v308, 7
      %v310 = vsub.s32 0, %v309
      %v311 = vrot.slane %v306, %v310
      %s313 = smul.u32 %s305, 3
      %s314 = smul.addr %s313, 4
      %s315 = scalar_lea.vmem %s292, %s314
      %v316 = vld [vmem:[%s315] sm:$0xf]
      %v317 = vld [vmem:[%s315 + $0x4] sm:$0xf]
      %v318 = vld [vmem:[%s315 + $0x8] sm:$0x1]
      %v319 = vld [vmem:[%s315 + $0xc] sm:$0xf]
      %v320 = vld [vmem:[%s315 + $0x10] sm:$0xf]
      %v321 = vld [vmem:[%s315 + $0x14] sm:$0x1]
      %v322 = vld [vmem:[%s315 + $0x18] sm:$0xf]
      %v323 = vld [vmem:[%s315 + $0x1c] sm:$0xf]
      %v324 = vld [vmem:[%s315 + $0x20] sm:$0x1]
      %v325 = vld [vmem:[%s315 + $0x24] sm:$0xf]
      %v326 = vld [vmem:[%s315 + $0x28] sm:$0xf]
      %v327 = vld [vmem:[%s315 + $0x2c] sm:$0x1]
      %v328 = vld [vmem:[%s315 + $0x30] sm:$0xf]
      %v329 = vld [vmem:[%s315 + $0x34] sm:$0xf]
      %v330 = vld [vmem:[%s315 + $0x38] sm:$0x1]
      %v331 = vld [vmem:[%s315 + $0x3c] sm:$0xf]
      %v332 = vld [vmem:[%s315 + $0x40] sm:$0xf]
      %v333 = vld [vmem:[%s315 + $0x44] sm:$0x1]
      %v334 = vld [vmem:[%s315 + $0x48] sm:$0xf]
      %v335 = vld [vmem:[%s315 + $0x4c] sm:$0xf]
      %v336 = vld [vmem:[%s315 + $0x50] sm:$0x1]
      %v337 = vld [vmem:[%s315 + $0x54] sm:$0xf]
      %v338 = vld [vmem:[%s315 + $0x58] sm:$0xf]
      %v339 = vld [vmem:[%s315 + $0x5c] sm:$0x1]
      %v340 = vld [vmem:[%s315 + $0x60] sm:$0xf]
      %v341 = vld [vmem:[%s315 + $0x64] sm:$0xf]
      %v342 = vld [vmem:[%s315 + $0x68] sm:$0x1]
      %v343 = vld [vmem:[%s315 + $0x6c] sm:$0xf]
      %v344 = vld [vmem:[%s315 + $0x70] sm:$0xf]
      %v345 = vld [vmem:[%s315 + $0x74] sm:$0x1]
      %v346 = vmax.bf16 %v316, 0
      %v347 = vmax.bf16 %v317, 0
      %v348 = vmax.bf16 %v318, 0
      %v349 = vmax.bf16 %v319, 0
      %v350 = vmax.bf16 %v320, 0
      %v351 = vmax.bf16 %v321, 0
      %v352 = vmax.bf16 %v322, 0
      %v353 = vmax.bf16 %v323, 0
      %v354 = vmax.bf16 %v324, 0
      %v355 = vmax.bf16 %v325, 0
      %v356 = vmax.bf16 %v326, 0
      %v357 = vmax.bf16 %v327, 0
      %v358 = vmax.bf16 %v328, 0
      %v359 = vmax.bf16 %v329, 0
      %v360 = vmax.bf16 %v330, 0
      %v361 = vmax.bf16 %v331, 0
      %v362 = vmax.bf16 %v332, 0
      %v363 = vmax.bf16 %v333, 0
      %v364 = vmax.bf16 %v334, 0
      %v365 = vmax.bf16 %v335, 0
      %v366 = vmax.bf16 %v336, 0
      %v367 = vmax.bf16 %v337, 0
      %v368 = vmax.bf16 %v338, 0
      %v369 = vmax.bf16 %v339, 0
      %v370 = vmax.bf16 %v340, 0
      %v371 = vmax.bf16 %v341, 0
      %v372 = vmax.bf16 %v342, 0
      %v373 = vmax.bf16 %v343, 0
      %v374 = vmax.bf16 %v344, 0
      %v375 = vmax.bf16 %v345, 0
      %v396 = vunpack.c.l.b16 %v346
      %v397 = vunpack.c.l.b16 %v347
      %v398 = vunpack.c.l.b16 %v349
      %v399 = vunpack.c.l.b16 %v350
      %v400 = vunpack.c.l.b16 %v352
      %v401 = vunpack.c.l.b16 %v353
      %v402 = vunpack.c.l.b16 %v355
      %v403 = vunpack.c.l.b16 %v356
      %v404 = vunpack.c.l.b16 %v358
      %v405 = vunpack.c.l.b16 %v359
      %v406 = vunpack.c.l.b16 %v361
      %v407 = vunpack.c.l.b16 %v362
      %v408 = vunpack.c.l.b16 %v364
      %v409 = vunpack.c.l.b16 %v365
      %v410 = vunpack.c.l.b16 %v367
      %v411 = vunpack.c.l.b16 %v368
      %v412 = vunpack.c.l.b16 %v370
      %v413 = vunpack.c.l.b16 %v371
      %v414 = vunpack.c.l.b16 %v373
      %v415 = vunpack.c.l.b16 %v374
      %v416 = vpack.c.b16 %v397, %v396
      %v417 = vpack.c.b16 %v399, %v398
      %v418 = vpack.c.b16 %v401, %v400
      %v419 = vpack.c.b16 %v403, %v402
      %v420 = vpack.c.b16 %v405, %v404
      %v421 = vpack.c.b16 %v407, %v406
      %v422 = vpack.c.b16 %v409, %v408
      %v423 = vpack.c.b16 %v411, %v410
      %v424 = vpack.c.b16 %v413, %v412
      %v425 = vpack.c.b16 %v415, %v414
      %v436 = vunpack.c.l.b16 %v348
      %v437 = vunpack.c.l.b16 %v351
      %v438 = vunpack.c.l.b16 %v354
      %v439 = vunpack.c.l.b16 %v357
      %v440 = vunpack.c.l.b16 %v360
      %v441 = vunpack.c.l.b16 %v363
      %v442 = vunpack.c.l.b16 %v366
      %v443 = vunpack.c.l.b16 %v369
      %v444 = vunpack.c.l.b16 %v372
      %v445 = vunpack.c.l.b16 %v375
      %v446 = vpack.c.b16 %v436, %v436
      %v447 = vpack.c.b16 %v437, %v437
      %v448 = vpack.c.b16 %v438, %v438
      %v449 = vpack.c.b16 %v439, %v439
      %v450 = vpack.c.b16 %v440, %v440
      %v451 = vpack.c.b16 %v441, %v441
      %v452 = vpack.c.b16 %v442, %v442
      %v453 = vpack.c.b16 %v443, %v443
      %v454 = vpack.c.b16 %v444, %v444
      %v455 = vpack.c.b16 %v445, %v445
      %vm456 = vsmask.f32 7424
      %v458 = vshrl.u32 %v416, 16
      %v460 = vshll.u32 %v416, 16
      %v462 = vrot.slane %v460, 1
      %v463 = vor.u32 %v458, %v462
      %v465 = vshll.u32 %v446, 16
      %v467 = vrot.slane %v465, 1
      %v468 = vsel %vm456, %v463, %v467
      %v470 = vshrl.u32 %v417, 16
      %v472 = vshll.u32 %v417, 16
      %v474 = vrot.slane %v472, 1
      %v475 = vor.u32 %v470, %v474
      %v477 = vshll.u32 %v447, 16
      %v479 = vrot.slane %v477, 1
      %v480 = vsel %vm456, %v475, %v479
      %v482 = vshrl.u32 %v418, 16
      %v484 = vshll.u32 %v418, 16
      %v486 = vrot.slane %v484, 1
      %v487 = vor.u32 %v482, %v486
      %v489 = vshll.u32 %v448, 16
      %v491 = vrot.slane %v489, 1
      %v492 = vsel %vm456, %v487, %v491
      %v494 = vshrl.u32 %v419, 16
      %v496 = vshll.u32 %v419, 16
      %v498 = vrot.slane %v496, 1
      %v499 = vor.u32 %v494, %v498
      %v501 = vshll.u32 %v449, 16
      %v503 = vrot.slane %v501, 1
      %v504 = vsel %vm456, %v499, %v503
      %v506 = vshrl.u32 %v420, 16
      %v508 = vshll.u32 %v420, 16
      %v510 = vrot.slane %v508, 1
      %v511 = vor.u32 %v506, %v510
      %v513 = vshll.u32 %v450, 16
      %v515 = vrot.slane %v513, 1
      %v516 = vsel %vm456, %v511, %v515
      %v518 = vshrl.u32 %v421, 16
      %v520 = vshll.u32 %v421, 16
      %v522 = vrot.slane %v520, 1
      %v523 = vor.u32 %v518, %v522
      %v525 = vshll.u32 %v451, 16
      %v527 = vrot.slane %v525, 1
      %v528 = vsel %vm456, %v523, %v527
      %v530 = vshrl.u32 %v422, 16
      %v532 = vshll.u32 %v422, 16
      %v534 = vrot.slane %v532, 1
      %v535 = vor.u32 %v530, %v534
      %v537 = vshll.u32 %v452, 16
      %v539 = vrot.slane %v537, 1
      %v540 = vsel %vm456, %v535, %v539
      %v542 = vshrl.u32 %v423, 16
      %v544 = vshll.u32 %v423, 16
      %v546 = vrot.slane %v544, 1
      %v547 = vor.u32 %v542, %v546
      %v549 = vshll.u32 %v453, 16
      %v551 = vrot.slane %v549, 1
      %v552 = vsel %vm456, %v547, %v551
      %v554 = vshrl.u32 %v424, 16
      %v556 = vshll.u32 %v424, 16
      %v558 = vrot.slane %v556, 1
      %v559 = vor.u32 %v554, %v558
      %v561 = vshll.u32 %v454, 16
      %v563 = vrot.slane %v561, 1
      %v564 = vsel %vm456, %v559, %v563
      %v566 = vshrl.u32 %v425, 16
      %v568 = vshll.u32 %v425, 16
      %v570 = vrot.slane %v568, 1
      %v571 = vor.u32 %v566, %v570
      %v573 = vshll.u32 %v455, 16
      %v575 = vrot.slane %v573, 1
      %v576 = vsel %vm456, %v571, %v575
      %577 = vrot.lane.b32.xlu0 %v468, 4
      %v578 = vpop.permute.xlu0 %577
      %579 = vrot.lane.b32.xlu0 %v480, 4
      %v580 = vpop.permute.xlu0 %579
      %581 = vrot.lane.b32.xlu0 %v492, 4
      %v582 = vpop.permute.xlu0 %581
      %583 = vrot.lane.b32.xlu0 %v504, 4
      %v584 = vpop.permute.xlu0 %583
      %585 = vrot.lane.b32.xlu0 %v516, 4
      %v586 = vpop.permute.xlu0 %585
      %587 = vrot.lane.b32.xlu0 %v528, 4
      %v588 = vpop.permute.xlu0 %587
      %589 = vrot.lane.b32.xlu0 %v540, 4
      %v590 = vpop.permute.xlu0 %589
      %591 = vrot.lane.b32.xlu0 %v552, 4
      %v592 = vpop.permute.xlu0 %591
      %593 = vrot.lane.b32.xlu0 %v564, 4
      %v594 = vpop.permute.xlu0 %593
      %595 = vrot.lane.b32.xlu0 %v576, 4
      %v596 = vpop.permute.xlu0 %595
      %vm597 = vcmask 1046528
      %v598 = vrot.slane %v416, 1
      %v599 = vrot.slane %v446, 1
      %v600 = vsel %vm597, %v598, %v599
      %v601 = vrot.slane %v417, 1
      %v602 = vrot.slane %v447, 1
      %v603 = vsel %vm597, %v601, %v602
      %v604 = vrot.slane %v418, 1
      %v605 = vrot.slane %v448, 1
      %v606 = vsel %vm597, %v604, %v605
      %v607 = vrot.slane %v419, 1
      %v608 = vrot.slane %v449, 1
      %v609 = vsel %vm597, %v607, %v608
      %v610 = vrot.slane %v420, 1
      %v611 = vrot.slane %v450, 1
      %v612 = vsel %vm597, %v610, %v611
      %v613 = vrot.slane %v421, 1
      %v614 = vrot.slane %v451, 1
      %v615 = vsel %vm597, %v613, %v614
      %v616 = vrot.slane %v422, 1
      %v617 = vrot.slane %v452, 1
      %v618 = vsel %vm597, %v616, %v617
      %v619 = vrot.slane %v423, 1
      %v620 = vrot.slane %v453, 1
      %v621 = vsel %vm597, %v619, %v620
      %v622 = vrot.slane %v424, 1
      %v623 = vrot.slane %v454, 1
      %v624 = vsel %vm597, %v622, %v623
      %v625 = vrot.slane %v425, 1
      %v626 = vrot.slane %v455, 1
      %v627 = vsel %vm597, %v625, %v626
      %628 = vrot.lane.b32.xlu0 %v600, 8
      %v629 = vpop.permute.xlu0 %628
      %630 = vrot.lane.b32.xlu0 %v603, 8
      %v631 = vpop.permute.xlu0 %630
      %632 = vrot.lane.b32.xlu0 %v606, 8
      %v633 = vpop.permute.xlu0 %632
      %634 = vrot.lane.b32.xlu0 %v609, 8
      %v635 = vpop.permute.xlu0 %634
      %636 = vrot.lane.b32.xlu0 %v612, 8
      %v637 = vpop.permute.xlu0 %636
      %638 = vrot.lane.b32.xlu0 %v615, 8
      %v639 = vpop.permute.xlu0 %638
      %640 = vrot.lane.b32.xlu0 %v618, 8
      %v641 = vpop.permute.xlu0 %640
      %642 = vrot.lane.b32.xlu0 %v621, 8
      %v643 = vpop.permute.xlu0 %642
      %644 = vrot.lane.b32.xlu0 %v624, 8
      %v645 = vpop.permute.xlu0 %644
      %646 = vrot.lane.b32.xlu0 %v627, 8
      %v647 = vpop.permute.xlu0 %646
      %vm648 = vcmask 31744
      %v650 = vsel %vm648, %v416, %v578
      %v652 = vsel %vm648, %v417, %v580
      %v654 = vsel %vm648, %v418, %v582
      %v656 = vsel %vm648, %v419, %v584
      %v658 = vsel %vm648, %v420, %v586
      %v660 = vsel %vm648, %v421, %v588
      %v662 = vsel %vm648, %v422, %v590
      %v664 = vsel %vm648, %v423, %v592
      %v666 = vsel %vm648, %v424, %v594
      %v668 = vsel %vm648, %v425, %v596
      %vm669 = vcmask 64512
      %v671 = vsel %vm669, %v650, %v629
      %v673 = vsel %vm669, %v652, %v631
      %v675 = vsel %vm669, %v654, %v633
      %v677 = vsel %vm669, %v656, %v635
      %v679 = vsel %vm669, %v658, %v637
      %v681 = vsel %vm669, %v660, %v639
      %v683 = vsel %vm669, %v662, %v641
      %v685 = vsel %vm669, %v664, %v643
      %v687 = vsel %vm669, %v666, %v645
      %v689 = vsel %vm669, %v668, %v647
      %v690 = vld [vmem:[%s1] sm:$0xf]
      %v691 = vld [vmem:[%s1 + $0x4] sm:$0x3]
      %v694 = vunpack.c.l.b16 %v690
      %v695 = vunpack.c.l.b16 %v691
      %v696 = vpack.c.b16 %v695, %v694
      %vm697 = vcmask 97280
      %v698 = vsel %vm697, %v671, 0
      %v700 = vsel %vm697, %v673, 0
      %v702 = vsel %vm697, %v675, 0
      %v704 = vsel %vm697, %v677, 0
      %v706 = vsel %vm697, %v679, 0
      %v708 = vsel %vm697, %v681, 0
      %v710 = vsel %vm697, %v683, 0
      %v712 = vsel %vm697, %v685, 0
      %v714 = vsel %vm697, %v687, 0
      %v716 = vsel %vm697, %v689, 0
      %vm718 = vcmask 1045504
      %v720 = vsel %vm718, %v696, 0
      %722 = vmatprep.subr.bf16.mxu0 0
      %723 = vmatpush1.bf16.msra.mxu0 %v720
      %724 = vmatprep.subr.bf16.mxu0 0
      %725 = vmatpush1.bf16.msra.mxu0 0
      %726 = vmatprep.subr.bf16.mxu0 0
      %727 = vmatpush1.bf16.msra.mxu0 0
      %728 = vmatprep.subr.bf16.mxu0 0
      %729 = vmatpush1.bf16.msra.mxu0 0
      %730 = vmatprep.subr.bf16.mxu0 0
      %731 = vmatpush1.bf16.msra.mxu0 0
      %732 = vmatprep.subr.bf16.mxu0 0
      %733 = vmatpush1.bf16.msra.mxu0 0
      %734 = vmatprep.subr.bf16.mxu0 0
      %735 = vmatpush1.bf16.msra.mxu0 0
      %736 = vmatprep.subr.bf16.mxu0 0
      %737 = vmatpush1.bf16.msra.mxu0 0
      %738 = vmatprep.subr.bf16.mxu0 0
      %739 = vmatpush1.bf16.msra.mxu0 0
      %740 = vmatprep.subr.bf16.mxu0 0
      %741 = vmatpush1.bf16.msra.mxu0 0
      %742 = vmatprep.subr.bf16.mxu0 0
      %743 = vmatpush1.bf16.msra.mxu0 0
      %744 = vmatprep.subr.bf16.mxu0 0
      %745 = vmatpush1.bf16.msra.mxu0 0
      %746 = vmatprep.subr.bf16.mxu0 0
      %747 = vmatpush1.bf16.msra.mxu0 0
      %748 = vmatprep.subr.bf16.mxu0 0
      %749 = vmatpush1.bf16.msra.mxu0 0
      %750 = vmatprep.subr.bf16.mxu0 0
      %751 = vmatpush1.bf16.msra.mxu0 0
      %752 = vmatprep.subr.bf16.mxu0 0
      %753 = vmatpush1.bf16.msra.mxu0 0
      %754 = vmatprep.mubr.bf16.mxu0 0
      %755 = vmatmul.mubr.bf16.gmra.mrb[0].mxu0 %v698
      %v756 = vpop.f32.mrb[0].mxu0
      %v757 = vadd.f32 0.0, %v756
      %v758 = vpop.f32.mrb[0].mxu0
      %v759 = vpop.f32.mrb[0].mxu0
      %v760 = vadd.f32 0.0, %v759
      %v761 = vpop.f32.mrb[0].mxu0
      %762 = vmatprep.mubr.bf16.mxu0 0
      %763 = vmatmul.mubr.bf16.gmra.mrb[0].mxu0 %v700
      %v764 = vpop.f32.mrb[0].mxu0
      %v765 = vadd.f32 0.0, %v764
      %v766 = vpop.f32.mrb[0].mxu0
      %v767 = vpop.f32.mrb[0].mxu0
      %v768 = vadd.f32 0.0, %v767
      %v769 = vpop.f32.mrb[0].mxu0
      %770 = vmatprep.mubr.bf16.mxu0 0
      %771 = vmatmul.mubr.bf16.gmra.mrb[0].mxu0 %v702
      %v772 = vpop.f32.mrb[0].mxu0
      %v773 = vadd.f32 0.0, %v772
      %v774 = vpop.f32.mrb[0].mxu0
      %v775 = vpop.f32.mrb[0].mxu0
      %v776 = vadd.f32 0.0, %v775
      %v777 = vpop.f32.mrb[0].mxu0
      %778 = vmatprep.mubr.bf16.mxu0 0
      %779 = vmatmul.mubr.bf16.gmra.mrb[0].mxu0 %v704
      %v780 = vpop.f32.mrb[0].mxu0
      %v781 = vadd.f32 0.0, %v780
      %v782 = vpop.f32.mrb[0].mxu0
      %v783 = vpop.f32.mrb[0].mxu0
      %v784 = vadd.f32 0.0, %v783
      %v785 = vpop.f32.mrb[0].mxu0
      %786 = vmatprep.mubr.bf16.mxu0 0
      %787 = vmatmul.mubr.bf16.gmra.mrb[0].mxu0 %v706
      %v788 = vpop.f32.mrb[0].mxu0
      %v789 = vadd.f32 0.0, %v788
      %v790 = vpop.f32.mrb[0].mxu0
      %v791 = vpop.f32.mrb[0].mxu0
      %v792 = vadd.f32 0.0, %v791
      %v793 = vpop.f32.mrb[0].mxu0
      %794 = vmatprep.mubr.bf16.mxu0 0
      %795 = vmatmul.mubr.bf16.gmra.mrb[0].mxu0 %v708
      %v796 = vpop.f32.mrb[0].mxu0
      %v797 = vadd.f32 0.0, %v796
      %v798 = vpop.f32.mrb[0].mxu0
      %v799 = vpop.f32.mrb[0].mxu0
      %v800 = vadd.f32 0.0, %v799
      %v801 = vpop.f32.mrb[0].mxu0
      %802 = vmatprep.mubr.bf16.mxu0 0
      %803 = vmatmul.mubr.bf16.gmra.mrb[0].mxu0 %v710
      %v804 = vpop.f32.mrb[0].mxu0
      %v805 = vadd.f32 0.0, %v804
      %v806 = vpop.f32.mrb[0].mxu0
      %v807 = vpop.f32.mrb[0].mxu0
      %v808 = vadd.f32 0.0, %v807
      %v809 = vpop.f32.mrb[0].mxu0
      %810 = vmatprep.mubr.bf16.mxu0 0
      %811 = vmatmul.mubr.bf16.gmra.mrb[0].mxu0 %v712
      %v812 = vpop.f32.mrb[0].mxu0
      %v813 = vadd.f32 0.0, %v812
      %v814 = vpop.f32.mrb[0].mxu0
      %v815 = vpop.f32.mrb[0].mxu0
      %v816 = vadd.f32 0.0, %v815
      %v817 = vpop.f32.mrb[0].mxu0
      %818 = vmatprep.mubr.bf16.mxu0 0
      %819 = vmatmul.mubr.bf16.gmra.mrb[0].mxu0 %v714
      %v820 = vpop.f32.mrb[0].mxu0
      %v821 = vadd.f32 0.0, %v820
      %v822 = vpop.f32.mrb[0].mxu0
      %v823 = vpop.f32.mrb[0].mxu0
      %v824 = vadd.f32 0.0, %v823
      %v825 = vpop.f32.mrb[0].mxu0
      %826 = vmatprep.mubr.bf16.mxu0 0
      %827 = vmatmul.mubr.bf16.gmra.mrb[0].mxu0 %v716
      %v828 = vpop.f32.mrb[0].mxu0
      %v829 = vadd.f32 0.0, %v828
      %v830 = vpop.f32.mrb[0].mxu0
      %v831 = vpop.f32.mrb[0].mxu0
      %v832 = vadd.f32 0.0, %v831
      %v833 = vpop.f32.mrb[0].mxu0
      %834 = vdwg.mxu0
      %v835 = vadd.f32 %v311, %v757
      %v836 = vadd.f32 %v311, %v760
      %v837 = vadd.f32 %v311, %v765
      %v838 = vadd.f32 %v311, %v768
      %v839 = vadd.f32 %v311, %v773
      %v840 = vadd.f32 %v311, %v776
      %v841 = vadd.f32 %v311, %v781
      %v842 = vadd.f32 %v311, %v784
      %v843 = vadd.f32 %v311, %v789
      %v844 = vadd.f32 %v311, %v792
      %v845 = vadd.f32 %v311, %v797
      %v846 = vadd.f32 %v311, %v800
      %v847 = vadd.f32 %v311, %v805
      %v848 = vadd.f32 %v311, %v808
      %v849 = vadd.f32 %v311, %v813
      %v850 = vadd.f32 %v311, %v816
      %v851 = vadd.f32 %v311, %v821
      %v852 = vadd.f32 %v311, %v824
      %v853 = vadd.f32 %v311, %v829
      %v854 = vadd.f32 %v311, %v832
      %s855 = sadd.s32 %s305, 1
      %s856 = smul.u32 %s855, 3
      %s857 = smul.addr %s856, 4
      %s858 = scalar_lea.vmem %s292, %s857
      %v859 = vld [vmem:[%s858] sm:$0xf]
      %v860 = vld [vmem:[%s858 + $0x4] sm:$0xf]
      %v861 = vld [vmem:[%s858 + $0x8] sm:$0x1]
      %v862 = vld [vmem:[%s858 + $0xc] sm:$0xf]
      %v863 = vld [vmem:[%s858 + $0x10] sm:$0xf]
      %v864 = vld [vmem:[%s858 + $0x14] sm:$0x1]
      %v865 = vld [vmem:[%s858 + $0x18] sm:$0xf]
      %v866 = vld [vmem:[%s858 + $0x1c] sm:$0xf]
      %v867 = vld [vmem:[%s858 + $0x20] sm:$0x1]
      %v868 = vld [vmem:[%s858 + $0x24] sm:$0xf]
      %v869 = vld [vmem:[%s858 + $0x28] sm:$0xf]
      %v870 = vld [vmem:[%s858 + $0x2c] sm:$0x1]
      %v871 = vld [vmem:[%s858 + $0x30] sm:$0xf]
      %v872 = vld [vmem:[%s858 + $0x34] sm:$0xf]
      %v873 = vld [vmem:[%s858 + $0x38] sm:$0x1]
      %v874 = vld [vmem:[%s858 + $0x3c] sm:$0xf]
      %v875 = vld [vmem:[%s858 + $0x40] sm:$0xf]
      %v876 = vld [vmem:[%s858 + $0x44] sm:$0x1]
      %v877 = vld [vmem:[%s858 + $0x48] sm:$0xf]
      %v878 = vld [vmem:[%s858 + $0x4c] sm:$0xf]
      %v879 = vld [vmem:[%s858 + $0x50] sm:$0x1]
      %v880 = vld [vmem:[%s858 + $0x54] sm:$0xf]
      %v881 = vld [vmem:[%s858 + $0x58] sm:$0xf]
      %v882 = vld [vmem:[%s858 + $0x5c] sm:$0x1]
      %v883 = vld [vmem:[%s858 + $0x60] sm:$0xf]
      %v884 = vld [vmem:[%s858 + $0x64] sm:$0xf]
      %v885 = vld [vmem:[%s858 + $0x68] sm:$0x1]
      %v886 = vld [vmem:[%s858 + $0x6c] sm:$0xf]
      %v887 = vld [vmem:[%s858 + $0x70] sm:$0xf]
      %v888 = vld [vmem:[%s858 + $0x74] sm:$0x1]
      %v889 = vmax.bf16 %v859, 0
      %v890 = vmax.bf16 %v860, 0
      %v891 = vmax.bf16 %v861, 0
      %v892 = vmax.bf16 %v862, 0
      %v893 = vmax.bf16 %v863, 0
      %v894 = vmax.bf16 %v864, 0
      %v895 = vmax.bf16 %v865, 0
      %v896 = vmax.bf16 %v866, 0
      %v897 = vmax.bf16 %v867, 0
      %v898 = vmax.bf16 %v868, 0
      %v899 = vmax.bf16 %v869, 0
      %v900 = vmax.bf16 %v870, 0
      %v901 = vmax.bf16 %v871, 0
      %v902 = vmax.bf16 %v872, 0
      %v903 = vmax.bf16 %v873, 0
      %v904 = vmax.bf16 %v874, 0
      %v905 = vmax.bf16 %v875, 0
      %v906 = vmax.bf16 %v876, 0
      %v907 = vmax.bf16 %v877, 0
      %v908 = vmax.bf16 %v878, 0
      %v909 = vmax.bf16 %v879, 0
      %v910 = vmax.bf16 %v880, 0
      %v911 = vmax.bf16 %v881, 0
      %v912 = vmax.bf16 %v882, 0
      %v913 = vmax.bf16 %v883, 0
      %v914 = vmax.bf16 %v884, 0
      %v915 = vmax.bf16 %v885, 0
      %v916 = vmax.bf16 %v886, 0
      %v917 = vmax.bf16 %v887, 0
      %v918 = vmax.bf16 %v888, 0
      %v939 = vunpack.c.l.b16 %v889
      %v940 = vunpack.c.l.b16 %v890
      %v941 = vunpack.c.l.b16 %v892
      %v942 = vunpack.c.l.b16 %v893
      %v943 = vunpack.c.l.b16 %v895
      %v944 = vunpack.c.l.b16 %v896
      %v945 = vunpack.c.l.b16 %v898
      %v946 = vunpack.c.l.b16 %v899
      %v947 = vunpack.c.l.b16 %v901
      %v948 = vunpack.c.l.b16 %v902
      %v949 = vunpack.c.l.b16 %v904
      %v950 = vunpack.c.l.b16 %v905
      %v951 = vunpack.c.l.b16 %v907
      %v952 = vunpack.c.l.b16 %v908
      %v953 = vunpack.c.l.b16 %v910
      %v954 = vunpack.c.l.b16 %v911
      %v955 = vunpack.c.l.b16 %v913
      %v956 = vunpack.c.l.b16 %v914
      %v957 = vunpack.c.l.b16 %v916
      %v958 = vunpack.c.l.b16 %v917
      %v959 = vpack.c.b16 %v940, %v939
      %v960 = vpack.c.b16 %v942, %v941
      %v961 = vpack.c.b16 %v944, %v943
      %v962 = vpack.c.b16 %v946, %v945
      %v963 = vpack.c.b16 %v948, %v947
      %v964 = vpack.c.b16 %v950, %v949
      %v965 = vpack.c.b16 %v952, %v951
      %v966 = vpack.c.b16 %v954, %v953
      %v967 = vpack.c.b16 %v956, %v955
      %v968 = vpack.c.b16 %v958, %v957
      %v979 = vunpack.c.l.b16 %v891
      %v980 = vunpack.c.l.b16 %v894
      %v981 = vunpack.c.l.b16 %v897
      %v982 = vunpack.c.l.b16 %v900
      %v983 = vunpack.c.l.b16 %v903
      %v984 = vunpack.c.l.b16 %v906
      %v985 = vunpack.c.l.b16 %v909
      %v986 = vunpack.c.l.b16 %v912
      %v987 = vunpack.c.l.b16 %v915
      %v988 = vunpack.c.l.b16 %v918
      %v989 = vpack.c.b16 %v979, %v979
      %v990 = vpack.c.b16 %v980, %v980
      %v991 = vpack.c.b16 %v981, %v981
      %v992 = vpack.c.b16 %v982, %v982
      %v993 = vpack.c.b16 %v983, %v983
      %v994 = vpack.c.b16 %v984, %v984
      %v995 = vpack.c.b16 %v985, %v985
      %v996 = vpack.c.b16 %v986, %v986
      %v997 = vpack.c.b16 %v987, %v987
      %v998 = vpack.c.b16 %v988, %v988
      %v1000 = vshrl.u32 %v959, 16
      %v1002 = vshll.u32 %v959, 16
      %v1004 = vrot.slane %v1002, 1
      %v1005 = vor.u32 %v1000, %v1004
      %v1007 = vshll.u32 %v989, 16
      %v1009 = vrot.slane %v1007, 1
      %v1010 = vsel %vm456, %v1005, %v1009
      %v1012 = vshrl.u32 %v960, 16
      %v1014 = vshll.u32 %v960, 16
      %v1016 = vrot.slane %v1014, 1
      %v1017 = vor.u32 %v1012, %v1016
      %v1019 = vshll.u32 %v990, 16
      %v1021 = vrot.slane %v1019, 1
      %v1022 = vsel %vm456, %v1017, %v1021
      %v1024 = vshrl.u32 %v961, 16
      %v1026 = vshll.u32 %v961, 16
      %v1028 = vrot.slane %v1026, 1
      %v1029 = vor.u32 %v1024, %v1028
      %v1031 = vshll.u32 %v991, 16
      %v1033 = vrot.slane %v1031, 1
      %v1034 = vsel %vm456, %v1029, %v1033
      %v1036 = vshrl.u32 %v962, 16
      %v1038 = vshll.u32 %v962, 16
      %v1040 = vrot.slane %v1038, 1
      %v1041 = vor.u32 %v1036, %v1040
      %v1043 = vshll.u32 %v992, 16
      %v1045 = vrot.slane %v1043, 1
      %v1046 = vsel %vm456, %v1041, %v1045
      %v1048 = vshrl.u32 %v963, 16
      %v1050 = vshll.u32 %v963, 16
      %v1052 = vrot.slane %v1050, 1
      %v1053 = vor.u32 %v1048, %v1052
      %v1055 = vshll.u32 %v993, 16
      %v1057 = vrot.slane %v1055, 1
      %v1058 = vsel %vm456, %v1053, %v1057
      %v1060 = vshrl.u32 %v964, 16
      %v1062 = vshll.u32 %v964, 16
      %v1064 = vrot.slane %v1062, 1
      %v1065 = vor.u32 %v1060, %v1064
      %v1067 = vshll.u32 %v994, 16
      %v1069 = vrot.slane %v1067, 1
      %v1070 = vsel %vm456, %v1065, %v1069
      %v1072 = vshrl.u32 %v965, 16
      %v1074 = vshll.u32 %v965, 16
      %v1076 = vrot.slane %v1074, 1
      %v1077 = vor.u32 %v1072, %v1076
      %v1079 = vshll.u32 %v995, 16
      %v1081 = vrot.slane %v1079, 1
      %v1082 = vsel %vm456, %v1077, %v1081
      %v1084 = vshrl.u32 %v966, 16
      %v1086 = vshll.u32 %v966, 16
      %v1088 = vrot.slane %v1086, 1
      %v1089 = vor.u32 %v1084, %v1088
      %v1091 = vshll.u32 %v996, 16
      %v1093 = vrot.slane %v1091, 1
      %v1094 = vsel %vm456, %v1089, %v1093
      %v1096 = vshrl.u32 %v967, 16
      %v1098 = vshll.u32 %v967, 16
      %v1100 = vrot.slane %v1098, 1
      %v1101 = vor.u32 %v1096, %v1100
      %v1103 = vshll.u32 %v997, 16
      %v1105 = vrot.slane %v1103, 1
      %v1106 = vsel %vm456, %v1101, %v1105
      %v1108 = vshrl.u32 %v968, 16
      %v1110 = vshll.u32 %v968, 16
      %v1112 = vrot.slane %v1110, 1
      %v1113 = vor.u32 %v1108, %v1112
      %v1115 = vshll.u32 %v998, 16
      %v1117 = vrot.slane %v1115, 1
      %v1118 = vsel %vm456, %v1113, %v1117
      %1119 = vrot.lane.b32.xlu0 %v1010, 4
      %v1120 = vpop.permute.xlu0 %1119
      %1121 = vrot.lane.b32.xlu0 %v1022, 4
      %v1122 = vpop.permute.xlu0 %1121
      %1123 = vrot.lane.b32.xlu0 %v1034, 4
      %v1124 = vpop.permute.xlu0 %1123
      %1125 = vrot.lane.b32.xlu0 %v1046, 4
      %v1126 = vpop.permute.xlu0 %1125
      %1127 = vrot.lane.b32.xlu0 %v1058, 4
      %v1128 = vpop.permute.xlu0 %1127
      %1129 = vrot.lane.b32.xlu0 %v1070, 4
      %v1130 = vpop.permute.xlu0 %1129
      %1131 = vrot.lane.b32.xlu0 %v1082, 4
      %v1132 = vpop.permute.xlu0 %1131
      %1133 = vrot.lane.b32.xlu0 %v1094, 4
      %v1134 = vpop.permute.xlu0 %1133
      %1135 = vrot.lane.b32.xlu0 %v1106, 4
      %v1136 = vpop.permute.xlu0 %1135
      %1137 = vrot.lane.b32.xlu0 %v1118, 4
      %v1138 = vpop.permute.xlu0 %1137
      %v1139 = vrot.slane %v959, 1
      %v1140 = vrot.slane %v989, 1
      %v1141 = vsel %vm597, %v1139, %v1140
      %v1142 = vrot.slane %v960, 1
      %v1143 = vrot.slane %v990, 1
      %v1144 = vsel %vm597, %v1142, %v1143
      %v1145 = vrot.slane %v961, 1
      %v1146 = vrot.slane %v991, 1
      %v1147 = vsel %vm597, %v1145, %v1146
      %v1148 = vrot.slane %v962, 1
      %v1149 = vrot.slane %v992, 1
      %v1150 = vsel %vm597, %v1148, %v1149
      %v1151 = vrot.slane %v963, 1
      %v1152 = vrot.slane %v993, 1
      %v1153 = vsel %vm597, %v1151, %v1152
      %v1154 = vrot.slane %v964, 1
      %v1155 = vrot.slane %v994, 1
      %v1156 = vsel %vm597, %v1154, %v1155
      %v1157 = vrot.slane %v965, 1
      %v1158 = vrot.slane %v995, 1
      %v1159 = vsel %vm597, %v1157, %v1158
      %v1160 = vrot.slane %v966, 1
      %v1161 = vrot.slane %v996, 1
      %v1162 = vsel %vm597, %v1160, %v1161
      %v1163 = vrot.slane %v967, 1
      %v1164 = vrot.slane %v997, 1
      %v1165 = vsel %vm597, %v1163, %v1164
      %v1166 = vrot.slane %v968, 1
      %v1167 = vrot.slane %v998, 1
      %v1168 = vsel %vm597, %v1166, %v1167
      %1169 = vrot.lane.b32.xlu0 %v1141, 8
      %v1170 = vpop.permute.xlu0 %1169
      %1171 = vrot.lane.b32.xlu0 %v1144, 8
      %v1172 = vpop.permute.xlu0 %1171
      %1173 = vrot.lane.b32.xlu0 %v1147, 8
      %v1174 = vpop.permute.xlu0 %1173
      %1175 = vrot.lane.b32.xlu0 %v1150, 8
      %v1176 = vpop.permute.xlu0 %1175
      %1177 = vrot.lane.b32.xlu0 %v1153, 8
      %v1178 = vpop.permute.xlu0 %1177
      %1179 = vrot.lane.b32.xlu0 %v1156, 8
      %v1180 = vpop.permute.xlu0 %1179
      %1181 = vrot.lane.b32.xlu0 %v1159, 8
      %v1182 = vpop.permute.xlu0 %1181
      %1183 = vrot.lane.b32.xlu0 %v1162, 8
      %v1184 = vpop.permute.xlu0 %1183
      %1185 = vrot.lane.b32.xlu0 %v1165, 8
      %v1186 = vpop.permute.xlu0 %1185
      %1187 = vrot.lane.b32.xlu0 %v1168, 8
      %v1188 = vpop.permute.xlu0 %1187
      %v1190 = vsel %vm648, %v959, %v1120
      %v1192 = vsel %vm648, %v960, %v1122
      %v1194 = vsel %vm648, %v961, %v1124
      %v1196 = vsel %vm648, %v962, %v1126
      %v1198 = vsel %vm648, %v963, %v1128
      %v1200 = vsel %vm648, %v964, %v1130
      %v1202 = vsel %vm648, %v965, %v1132
      %v1204 = vsel %vm648, %v966, %v1134
      %v1206 = vsel %vm648, %v967, %v1136
      %v1208 = vsel %vm648, %v968, %v1138
      %v1210 = vsel %vm669, %v1190, %v1170
      %v1212 = vsel %vm669, %v1192, %v1172
      %v1214 = vsel %vm669, %v1194, %v1174
      %v1216 = vsel %vm669, %v1196, %v1176
      %v1218 = vsel %vm669, %v1198, %v1178
      %v1220 = vsel %vm669, %v1200, %v1180
      %v1222 = vsel %vm669, %v1202, %v1182
      %v1224 = vsel %vm669, %v1204, %v1184
      %v1226 = vsel %vm669, %v1206, %v1186
      %v1228 = vsel %vm669, %v1208, %v1188
      %s1229 = scalar_lea.vmem %s1, 8
      %v1230 = vld [vmem:[%s1229] sm:$0xf]
      %v1231 = vld [vmem:[%s1229 + $0x4] sm:$0x3]
      %v1234 = vunpack.c.l.b16 %v1230
      %v1235 = vunpack.c.l.b16 %v1231
      %v1236 = vpack.c.b16 %v1235, %v1234
      %v1237 = vsel %vm697, %v1210, 0
      %v1239 = vsel %vm697, %v1212, 0
      %v1241 = vsel %vm697, %v1214, 0
      %v1243 = vsel %vm697, %v1216, 0
      %v1245 = vsel %vm697, %v1218, 0
      %v1247 = vsel %vm697, %v1220, 0
      %v1249 = vsel %vm697, %v1222, 0
      %v1251 = vsel %vm697, %v1224, 0
      %v1253 = vsel %vm697, %v1226, 0
      %v1255 = vsel %vm697, %v1228, 0
      %v1258 = vsel %vm718, %v1236, 0
      %1260 = vmatprep.subr.bf16.mxu0 0
      %1261 = vmatpush1.bf16.msra.mxu0 %v1258
      %1262 = vmatprep.subr.bf16.mxu0 0
      %1263 = vmatpush1.bf16.msra.mxu0 0
      %1264 = vmatprep.subr.bf16.mxu0 0
      %1265 = vmatpush1.bf16.msra.mxu0 0
      %1266 = vmatprep.subr.bf16.mxu0 0
      %1267 = vmatpush1.bf16.msra.mxu0 0
      %1268 = vmatprep.subr.bf16.mxu0 0
      %1269 = vmatpush1.bf16.msra.mxu0 0
      %1270 = vmatprep.subr.bf16.mxu0 0
      %1271 = vmatpush1.bf16.msra.mxu0 0
      %1272 = vmatprep.subr.bf16.mxu0 0
      %1273 = vmatpush1.bf16.msra.mxu0 0
      %1274 = vmatprep.subr.bf16.mxu0 0
      %1275 = vmatpush1.bf16.msra.mxu0 0
      %1276 = vmatprep.subr.bf16.mxu0 0
      %1277 = vmatpush1.bf16.msra.mxu0 0
      %1278 = vmatprep.subr.bf16.mxu0 0
      %1279 = vmatpush1.bf16.msra.mxu0 0
      %1280 = vmatprep.subr.bf16.mxu0 0
      %1281 = vmatpush1.bf16.msra.mxu0 0
      %1282 = vmatprep.subr.bf16.mxu0 0
      %1283 = vmatpush1.bf16.msra.mxu0 0
      %1284 = vmatprep.subr.bf16.mxu0 0
      %1285 = vmatpush1.bf16.msra.mxu0 0
      %1286 = vmatprep.subr.bf16.mxu0 0
      %1287 = vmatpush1.bf16.msra.mxu0 0
      %1288 = vmatprep.subr.bf16.mxu0 0
      %1289 = vmatpush1.bf16.msra.mxu0 0
      %1290 = vmatprep.subr.bf16.mxu0 0
      %1291 = vmatpush1.bf16.msra.mxu0 0
      %1292 = vmatprep.mubr.bf16.mxu0 0
      %1293 = vmatmul.mubr.bf16.gmra.mrb[0].mxu0 %v1237
      %v1294 = vpop.f32.mrb[0].mxu0
      %v1295 = vadd.f32 0.0, %v1294
      %v1296 = vpop.f32.mrb[0].mxu0
      %v1297 = vpop.f32.mrb[0].mxu0
      %v1298 = vadd.f32 0.0, %v1297
      %v1299 = vpop.f32.mrb[0].mxu0
      %1300 = vmatprep.mubr.bf16.mxu0 0
      %1301 = vmatmul.mubr.bf16.gmra.mrb[0].mxu0 %v1239
      %v1302 = vpop.f32.mrb[0].mxu0
      %v1303 = vadd.f32 0.0, %v1302
      %v1304 = vpop.f32.mrb[0].mxu0
      %v1305 = vpop.f32.mrb[0].mxu0
      %v1306 = vadd.f32 0.0, %v1305
      %v1307 = vpop.f32.mrb[0].mxu0
      %1308 = vmatprep.mubr.bf16.mxu0 0
      %1309 = vmatmul.mubr.bf16.gmra.mrb[0].mxu0 %v1241
      %v1310 = vpop.f32.mrb[0].mxu0
      %v1311 = vadd.f32 0.0, %v1310
      %v1312 = vpop.f32.mrb[0].mxu0
      %v1313 = vpop.f32.mrb[0].mxu0
      %v1314 = vadd.f32 0.0, %v1313
      %v1315 = vpop.f32.mrb[0].mxu0
      %1316 = vmatprep.mubr.bf16.mxu0 0
      %1317 = vmatmul.mubr.bf16.gmra.mrb[0].mxu0 %v1243
      %v1318 = vpop.f32.mrb[0].mxu0
      %v1319 = vadd.f32 0.0, %v1318
      %v1320 = vpop.f32.mrb[0].mxu0
      %v1321 = vpop.f32.mrb[0].mxu0
      %v1322 = vadd.f32 0.0, %v1321
      %v1323 = vpop.f32.mrb[0].mxu0
      %1324 = vmatprep.mubr.bf16.mxu0 0
      %1325 = vmatmul.mubr.bf16.gmra.mrb[0].mxu0 %v1245
      %v1326 = vpop.f32.mrb[0].mxu0
      %v1327 = vadd.f32 0.0, %v1326
      %v1328 = vpop.f32.mrb[0].mxu0
      %v1329 = vpop.f32.mrb[0].mxu0
      %v1330 = vadd.f32 0.0, %v1329
      %v1331 = vpop.f32.mrb[0].mxu0
      %1332 = vmatprep.mubr.bf16.mxu0 0
      %1333 = vmatmul.mubr.bf16.gmra.mrb[0].mxu0 %v1247
      %v1334 = vpop.f32.mrb[0].mxu0
      %v1335 = vadd.f32 0.0, %v1334
      %v1336 = vpop.f32.mrb[0].mxu0
      %v1337 = vpop.f32.mrb[0].mxu0
      %v1338 = vadd.f32 0.0, %v1337
      %v1339 = vpop.f32.mrb[0].mxu0
      %1340 = vmatprep.mubr.bf16.mxu0 0
      %1341 = vmatmul.mubr.bf16.gmra.mrb[0].mxu0 %v1249
      %v1342 = vpop.f32.mrb[0].mxu0
      %v1343 = vadd.f32 0.0, %v1342
      %v1344 = vpop.f32.mrb[0].mxu0
      %v1345 = vpop.f32.mrb[0].mxu0
      %v1346 = vadd.f32 0.0, %v1345
      %v1347 = vpop.f32.mrb[0].mxu0
      %1348 = vmatprep.mubr.bf16.mxu0 0
      %1349 = vmatmul.mubr.bf16.gmra.mrb[0].mxu0 %v1251
      %v1350 = vpop.f32.mrb[0].mxu0
      %v1351 = vadd.f32 0.0, %v1350
      %v1352 = vpop.f32.mrb[0].mxu0
      %v1353 = vpop.f32.mrb[0].mxu0
      %v1354 = vadd.f32 0.0, %v1353
      %v1355 = vpop.f32.mrb[0].mxu0
      %1356 = vmatprep.mubr.bf16.mxu0 0
      %1357 = vmatmul.mubr.bf16.gmra.mrb[0].mxu0 %v1253
      %v1358 = vpop.f32.mrb[0].mxu0
      %v1359 = vadd.f32 0.0, %v1358
      %v1360 = vpop.f32.mrb[0].mxu0
      %v1361 = vpop.f32.mrb[0].mxu0
      %v1362 = vadd.f32 0.0, %v1361
      %v1363 = vpop.f32.mrb[0].mxu0
      %1364 = vmatprep.mubr.bf16.mxu0 0
      %1365 = vmatmul.mubr.bf16.gmra.mrb[0].mxu0 %v1255
      %v1366 = vpop.f32.mrb[0].mxu0
      %v1367 = vadd.f32 0.0, %v1366
      %v1368 = vpop.f32.mrb[0].mxu0
      %v1369 = vpop.f32.mrb[0].mxu0
      %v1370 = vadd.f32 0.0, %v1369
      %v1371 = vpop.f32.mrb[0].mxu0
      %1372 = vdwg.mxu0
      %v1373 = vadd.f32 %v835, %v1295
      %v1374 = vadd.f32 %v836, %v1298
      %v1375 = vadd.f32 %v837, %v1303
      %v1376 = vadd.f32 %v838, %v1306
      %v1377 = vadd.f32 %v839, %v1311
      %v1378 = vadd.f32 %v840, %v1314
      %v1379 = vadd.f32 %v841, %v1319
      %v1380 = vadd.f32 %v842, %v1322
      %v1381 = vadd.f32 %v843, %v1327
      %v1382 = vadd.f32 %v844, %v1330
      %v1383 = vadd.f32 %v845, %v1335
      %v1384 = vadd.f32 %v846, %v1338
      %v1385 = vadd.f32 %v847, %v1343
      %v1386 = vadd.f32 %v848, %v1346
      %v1387 = vadd.f32 %v849, %v1351
      %v1388 = vadd.f32 %v850, %v1354
      %v1389 = vadd.f32 %v851, %v1359
      %v1390 = vadd.f32 %v852, %v1362
      %v1391 = vadd.f32 %v853, %v1367
      %v1392 = vadd.f32 %v854, %v1370
      %s1393 = sadd.s32 %s305, 2
      %s1394 = smul.u32 %s1393, 3
      %s1395 = smul.addr %s1394, 4
      %s1396 = scalar_lea.vmem %s292, %s1395
      %v1397 = vld [vmem:[%s1396] sm:$0xf]
      %v1398 = vld [vmem:[%s1396 + $0x4] sm:$0xf]
      %v1399 = vld [vmem:[%s1396 + $0x8] sm:$0x1]
      %v1400 = vld [vmem:[%s1396 + $0xc] sm:$0xf]
      %v1401 = vld [vmem:[%s1396 + $0x10] sm:$0xf]
      %v1402 = vld [vmem:[%s1396 + $0x14] sm:$0x1]
      %v1403 = vld [vmem:[%s1396 + $0x18] sm:$0xf]
      %v1404 = vld [vmem:[%s1396 + $0x1c] sm:$0xf]
      %v1405 = vld [vmem:[%s1396 + $0x20] sm:$0x1]
      %v1406 = vld [vmem:[%s1396 + $0x24] sm:$0xf]
      %v1407 = vld [vmem:[%s1396 + $0x28] sm:$0xf]
      %v1408 = vld [vmem:[%s1396 + $0x2c] sm:$0x1]
      %v1409 = vld [vmem:[%s1396 + $0x30] sm:$0xf]
      %v1410 = vld [vmem:[%s1396 + $0x34] sm:$0xf]
      %v1411 = vld [vmem:[%s1396 + $0x38] sm:$0x1]
      %v1412 = vld [vmem:[%s1396 + $0x3c] sm:$0xf]
      %v1413 = vld [vmem:[%s1396 + $0x40] sm:$0xf]
      %v1414 = vld [vmem:[%s1396 + $0x44] sm:$0x1]
      %v1415 = vld [vmem:[%s1396 + $0x48] sm:$0xf]
      %v1416 = vld [vmem:[%s1396 + $0x4c] sm:$0xf]
      %v1417 = vld [vmem:[%s1396 + $0x50] sm:$0x1]
      %v1418 = vld [vmem:[%s1396 + $0x54] sm:$0xf]
      %v1419 = vld [vmem:[%s1396 + $0x58] sm:$0xf]
      %v1420 = vld [vmem:[%s1396 + $0x5c] sm:$0x1]
      %v1421 = vld [vmem:[%s1396 + $0x60] sm:$0xf]
      %v1422 = vld [vmem:[%s1396 + $0x64] sm:$0xf]
      %v1423 = vld [vmem:[%s1396 + $0x68] sm:$0x1]
      %v1424 = vld [vmem:[%s1396 + $0x6c] sm:$0xf]
      %v1425 = vld [vmem:[%s1396 + $0x70] sm:$0xf]
      %v1426 = vld [vmem:[%s1396 + $0x74] sm:$0x1]
      %v1427 = vmax.bf16 %v1397, 0
      %v1428 = vmax.bf16 %v1398, 0
      %v1429 = vmax.bf16 %v1399, 0
      %v1430 = vmax.bf16 %v1400, 0
      %v1431 = vmax.bf16 %v1401, 0
      %v1432 = vmax.bf16 %v1402, 0
      %v1433 = vmax.bf16 %v1403, 0
      %v1434 = vmax.bf16 %v1404, 0
      %v1435 = vmax.bf16 %v1405, 0
      %v1436 = vmax.bf16 %v1406, 0
      %v1437 = vmax.bf16 %v1407, 0
      %v1438 = vmax.bf16 %v1408, 0
      %v1439 = vmax.bf16 %v1409, 0
      %v1440 = vmax.bf16 %v1410, 0
      %v1441 = vmax.bf16 %v1411, 0
      %v1442 = vmax.bf16 %v1412, 0
      %v1443 = vmax.bf16 %v1413, 0
      %v1444 = vmax.bf16 %v1414, 0
      %v1445 = vmax.bf16 %v1415, 0
      %v1446 = vmax.bf16 %v1416, 0
      %v1447 = vmax.bf16 %v1417, 0
      %v1448 = vmax.bf16 %v1418, 0
      %v1449 = vmax.bf16 %v1419, 0
      %v1450 = vmax.bf16 %v1420, 0
      %v1451 = vmax.bf16 %v1421, 0
      %v1452 = vmax.bf16 %v1422, 0
      %v1453 = vmax.bf16 %v1423, 0
      %v1454 = vmax.bf16 %v1424, 0
      %v1455 = vmax.bf16 %v1425, 0
      %v1456 = vmax.bf16 %v1426, 0
      %v1477 = vunpack.c.l.b16 %v1427
      %v1478 = vunpack.c.l.b16 %v1428
      %v1479 = vunpack.c.l.b16 %v1430
      %v1480 = vunpack.c.l.b16 %v1431
      %v1481 = vunpack.c.l.b16 %v1433
      %v1482 = vunpack.c.l.b16 %v1434
      %v1483 = vunpack.c.l.b16 %v1436
      %v1484 = vunpack.c.l.b16 %v1437
      %v1485 = vunpack.c.l.b16 %v1439
      %v1486 = vunpack.c.l.b16 %v1440
      %v1487 = vunpack.c.l.b16 %v1442
      %v1488 = vunpack.c.l.b16 %v1443
      %v1489 = vunpack.c.l.b16 %v1445
      %v1490 = vunpack.c.l.b16 %v1446
      %v1491 = vunpack.c.l.b16 %v1448
      %v1492 = vunpack.c.l.b16 %v1449
      %v1493 = vunpack.c.l.b16 %v1451
      %v1494 = vunpack.c.l.b16 %v1452
      %v1495 = vunpack.c.l.b16 %v1454
      %v1496 = vunpack.c.l.b16 %v1455
      %v1497 = vpack.c.b16 %v1478, %v1477
      %v1498 = vpack.c.b16 %v1480, %v1479
      %v1499 = vpack.c.b16 %v1482, %v1481
      %v1500 = vpack.c.b16 %v1484, %v1483
      %v1501 = vpack.c.b16 %v1486, %v1485
      %v1502 = vpack.c.b16 %v1488, %v1487
      %v1503 = vpack.c.b16 %v1490, %v1489
      %v1504 = vpack.c.b16 %v1492, %v1491
      %v1505 = vpack.c.b16 %v1494, %v1493
      %v1506 = vpack.c.b16 %v1496, %v1495
      %v1517 = vunpack.c.l.b16 %v1429
      %v1518 = vunpack.c.l.b16 %v1432
      %v1519 = vunpack.c.l.b16 %v1435
      %v1520 = vunpack.c.l.b16 %v1438
      %v1521 = vunpack.c.l.b16 %v1441
      %v1522 = vunpack.c.l.b16 %v1444
      %v1523 = vunpack.c.l.b16 %v1447
      %v1524 = vunpack.c.l.b16 %v1450
      %v1525 = vunpack.c.l.b16 %v1453
      %v1526 = vunpack.c.l.b16 %v1456
      %v1527 = vpack.c.b16 %v1517, %v1517
      %v1528 = vpack.c.b16 %v1518, %v1518
      %v1529 = vpack.c.b16 %v1519, %v1519
      %v1530 = vpack.c.b16 %v1520, %v1520
      %v1531 = vpack.c.b16 %v1521, %v1521
      %v1532 = vpack.c.b16 %v1522, %v1522
      %v1533 = vpack.c.b16 %v1523, %v1523
      %v1534 = vpack.c.b16 %v1524, %v1524
      %v1535 = vpack.c.b16 %v1525, %v1525
      %v1536 = vpack.c.b16 %v1526, %v1526
      %v1538 = vshrl.u32 %v1497, 16
      %v1540 = vshll.u32 %v1497, 16
      %v1542 = vrot.slane %v1540, 1
      %v1543 = vor.u32 %v1538, %v1542
      %v1545 = vshll.u32 %v1527, 16
      %v1547 = vrot.slane %v1545, 1
      %v1548 = vsel %vm456, %v1543, %v1547
      %v1550 = vshrl.u32 %v1498, 16
      %v1552 = vshll.u32 %v1498, 16
      %v1554 = vrot.slane %v1552, 1
      %v1555 = vor.u32 %v1550, %v1554
      %v1557 = vshll.u32 %v1528, 16
      %v1559 = vrot.slane %v1557, 1
      %v1560 = vsel %vm456, %v1555, %v1559
      %v1562 = vshrl.u32 %v1499, 16
      %v1564 = vshll.u32 %v1499, 16
      %v1566 = vrot.slane %v1564, 1
      %v1567 = vor.u32 %v1562, %v1566
      %v1569 = vshll.u32 %v1529, 16
      %v1571 = vrot.slane %v1569, 1
      %v1572 = vsel %vm456, %v1567, %v1571
      %v1574 = vshrl.u32 %v1500, 16
      %v1576 = vshll.u32 %v1500, 16
      %v1578 = vrot.slane %v1576, 1
      %v1579 = vor.u32 %v1574, %v1578
      %v1581 = vshll.u32 %v1530, 16
      %v1583 = vrot.slane %v1581, 1
      %v1584 = vsel %vm456, %v1579, %v1583
      %v1586 = vshrl.u32 %v1501, 16
      %v1588 = vshll.u32 %v1501, 16
      %v1590 = vrot.slane %v1588, 1
      %v1591 = vor.u32 %v1586, %v1590
      %v1593 = vshll.u32 %v1531, 16
      %v1595 = vrot.slane %v1593, 1
      %v1596 = vsel %vm456, %v1591, %v1595
      %v1598 = vshrl.u32 %v1502, 16
      %v1600 = vshll.u32 %v1502, 16
      %v1602 = vrot.slane %v1600, 1
      %v1603 = vor.u32 %v1598, %v1602
      %v1605 = vshll.u32 %v1532, 16
      %v1607 = vrot.slane %v1605, 1
      %v1608 = vsel %vm456, %v1603, %v1607
      %v1610 = vshrl.u32 %v1503, 16
      %v1612 = vshll.u32 %v1503, 16
      %v1614 = vrot.slane %v1612, 1
      %v1615 = vor.u32 %v1610, %v1614
      %v1617 = vshll.u32 %v1533, 16
      %v1619 = vrot.slane %v1617, 1
      %v1620 = vsel %vm456, %v1615, %v1619
      %v1622 = vshrl.u32 %v1504, 16
      %v1624 = vshll.u32 %v1504, 16
      %v1626 = vrot.slane %v1624, 1
      %v1627 = vor.u32 %v1622, %v1626
      %v1629 = vshll.u32 %v1534, 16
      %v1631 = vrot.slane %v1629, 1
      %v1632 = vsel %vm456, %v1627, %v1631
      %v1634 = vshrl.u32 %v1505, 16
      %v1636 = vshll.u32 %v1505, 16
      %v1638 = vrot.slane %v1636, 1
      %v1639 = vor.u32 %v1634, %v1638
      %v1641 = vshll.u32 %v1535, 16
      %v1643 = vrot.slane %v1641, 1
      %v1644 = vsel %vm456, %v1639, %v1643
      %v1646 = vshrl.u32 %v1506, 16
      %v1648 = vshll.u32 %v1506, 16
      %v1650 = vrot.slane %v1648, 1
      %v1651 = vor.u32 %v1646, %v1650
      %v1653 = vshll.u32 %v1536, 16
      %v1655 = vrot.slane %v1653, 1
      %v1656 = vsel %vm456, %v1651, %v1655
      %1657 = vrot.lane.b32.xlu0 %v1548, 4
      %v1658 = vpop.permute.xlu0 %1657
      %1659 = vrot.lane.b32.xlu0 %v1560, 4
      %v1660 = vpop.permute.xlu0 %1659
      %1661 = vrot.lane.b32.xlu0 %v1572, 4
      %v1662 = vpop.permute.xlu0 %1661
      %1663 = vrot.lane.b32.xlu0 %v1584, 4
      %v1664 = vpop.permute.xlu0 %1663
      %1665 = vrot.lane.b32.xlu0 %v1596, 4
      %v1666 = vpop.permute.xlu0 %1665
      %1667 = vrot.lane.b32.xlu0 %v1608, 4
      %v1668 = vpop.permute.xlu0 %1667
      %1669 = vrot.lane.b32.xlu0 %v1620, 4
      %v1670 = vpop.permute.xlu0 %1669
      %1671 = vrot.lane.b32.xlu0 %v1632, 4
      %v1672 = vpop.permute.xlu0 %1671
      %1673 = vrot.lane.b32.xlu0 %v1644, 4
      %v1674 = vpop.permute.xlu0 %1673
      %1675 = vrot.lane.b32.xlu0 %v1656, 4
      %v1676 = vpop.permute.xlu0 %1675
      %v1677 = vrot.slane %v1497, 1
      %v1678 = vrot.slane %v1527, 1
      %v1679 = vsel %vm597, %v1677, %v1678
      %v1680 = vrot.slane %v1498, 1
      %v1681 = vrot.slane %v1528, 1
      %v1682 = vsel %vm597, %v1680, %v1681
      %v1683 = vrot.slane %v1499, 1
      %v1684 = vrot.slane %v1529, 1
      %v1685 = vsel %vm597, %v1683, %v1684
      %v1686 = vrot.slane %v1500, 1
      %v1687 = vrot.slane %v1530, 1
      %v1688 = vsel %vm597, %v1686, %v1687
      %v1689 = vrot.slane %v1501, 1
      %v1690 = vrot.slane %v1531, 1
      %v1691 = vsel %vm597, %v1689, %v1690
      %v1692 = vrot.slane %v1502, 1
      %v1693 = vrot.slane %v1532, 1
      %v1694 = vsel %vm597, %v1692, %v1693
      %v1695 = vrot.slane %v1503, 1
      %v1696 = vrot.slane %v1533, 1
      %v1697 = vsel %vm597, %v1695, %v1696
      %v1698 = vrot.slane %v1504, 1
      %v1699 = vrot.slane %v1534, 1
      %v1700 = vsel %vm597, %v1698, %v1699
      %v1701 = vrot.slane %v1505, 1
      %v1702 = vrot.slane %v1535, 1
      %v1703 = vsel %vm597, %v1701, %v1702
      %v1704 = vrot.slane %v1506, 1
      %v1705 = vrot.slane %v1536, 1
      %v1706 = vsel %vm597, %v1704, %v1705
      %1707 = vrot.lane.b32.xlu0 %v1679, 8
      %v1708 = vpop.permute.xlu0 %1707
      %1709 = vrot.lane.b32.xlu0 %v1682, 8
      %v1710 = vpop.permute.xlu0 %1709
      %1711 = vrot.lane.b32.xlu0 %v1685, 8
      %v1712 = vpop.permute.xlu0 %1711
      %1713 = vrot.lane.b32.xlu0 %v1688, 8
      %v1714 = vpop.permute.xlu0 %1713
      %1715 = vrot.lane.b32.xlu0 %v1691, 8
      %v1716 = vpop.permute.xlu0 %1715
      %1717 = vrot.lane.b32.xlu0 %v1694, 8
      %v1718 = vpop.permute.xlu0 %1717
      %1719 = vrot.lane.b32.xlu0 %v1697, 8
      %v1720 = vpop.permute.xlu0 %1719
      %1721 = vrot.lane.b32.xlu0 %v1700, 8
      %v1722 = vpop.permute.xlu0 %1721
      %1723 = vrot.lane.b32.xlu0 %v1703, 8
      %v1724 = vpop.permute.xlu0 %1723
      %1725 = vrot.lane.b32.xlu0 %v1706, 8
      %v1726 = vpop.permute.xlu0 %1725
      %v1728 = vsel %vm648, %v1497, %v1658
      %v1730 = vsel %vm648, %v1498, %v1660
      %v1732 = vsel %vm648, %v1499, %v1662
      %v1734 = vsel %vm648, %v1500, %v1664
      %v1736 = vsel %vm648, %v1501, %v1666
      %v1738 = vsel %vm648, %v1502, %v1668
      %v1740 = vsel %vm648, %v1503, %v1670
      %v1742 = vsel %vm648, %v1504, %v1672
      %v1744 = vsel %vm648, %v1505, %v1674
      %v1746 = vsel %vm648, %v1506, %v1676
      %v1748 = vsel %vm669, %v1728, %v1708
      %v1750 = vsel %vm669, %v1730, %v1710
      %v1752 = vsel %vm669, %v1732, %v1712
      %v1754 = vsel %vm669, %v1734, %v1714
      %v1756 = vsel %vm669, %v1736, %v1716
      %v1758 = vsel %vm669, %v1738, %v1718
      %v1760 = vsel %vm669, %v1740, %v1720
      %v1762 = vsel %vm669, %v1742, %v1722
      %v1764 = vsel %vm669, %v1744, %v1724
      %v1766 = vsel %vm669, %v1746, %v1726
      %s1767 = scalar_lea.vmem %s1, 16
      %v1768 = vld [vmem:[%s1767] sm:$0xf]
      %v1769 = vld [vmem:[%s1767 + $0x4] sm:$0x3]
      %v1772 = vunpack.c.l.b16 %v1768
      %v1773 = vunpack.c.l.b16 %v1769
      %v1774 = vpack.c.b16 %v1773, %v1772
      %v1775 = vsel %vm697, %v1748, 0
      %v1777 = vsel %vm697, %v1750, 0
      %v1779 = vsel %vm697, %v1752, 0
      %v1781 = vsel %vm697, %v1754, 0
      %v1783 = vsel %vm697, %v1756, 0
      %v1785 = vsel %vm697, %v1758, 0
      %v1787 = vsel %vm697, %v1760, 0
      %v1789 = vsel %vm697, %v1762, 0
      %v1791 = vsel %vm697, %v1764, 0
      %v1793 = vsel %vm697, %v1766, 0
      %v1796 = vsel %vm718, %v1774, 0
      %1798 = vmatprep.subr.bf16.mxu0 0
      %1799 = vmatpush1.bf16.msra.mxu0 %v1796
      %1800 = vmatprep.subr.bf16.mxu0 0
      %1801 = vmatpush1.bf16.msra.mxu0 0
      %1802 = vmatprep.subr.bf16.mxu0 0
      %1803 = vmatpush1.bf16.msra.mxu0 0
      %1804 = vmatprep.subr.bf16.mxu0 0
      %1805 = vmatpush1.bf16.msra.mxu0 0
      %1806 = vmatprep.subr.bf16.mxu0 0
      %1807 = vmatpush1.bf16.msra.mxu0 0
      %1808 = vmatprep.subr.bf16.mxu0 0
      %1809 = vmatpush1.bf16.msra.mxu0 0
      %1810 = vmatprep.subr.bf16.mxu0 0
      %1811 = vmatpush1.bf16.msra.mxu0 0
      %1812 = vmatprep.subr.bf16.mxu0 0
      %1813 = vmatpush1.bf16.msra.mxu0 0
      %1814 = vmatprep.subr.bf16.mxu0 0
      %1815 = vmatpush1.bf16.msra.mxu0 0
      %1816 = vmatprep.subr.bf16.mxu0 0
      %1817 = vmatpush1.bf16.msra.mxu0 0
      %1818 = vmatprep.subr.bf16.mxu0 0
      %1819 = vmatpush1.bf16.msra.mxu0 0
      %1820 = vmatprep.subr.bf16.mxu0 0
      %1821 = vmatpush1.bf16.msra.mxu0 0
      %1822 = vmatprep.subr.bf16.mxu0 0
      %1823 = vmatpush1.bf16.msra.mxu0 0
      %1824 = vmatprep.subr.bf16.mxu0 0
      %1825 = vmatpush1.bf16.msra.mxu0 0
      %1826 = vmatprep.subr.bf16.mxu0 0
      %1827 = vmatpush1.bf16.msra.mxu0 0
      %1828 = vmatprep.subr.bf16.mxu0 0
      %1829 = vmatpush1.bf16.msra.mxu0 0
      %1830 = vmatprep.mubr.bf16.mxu0 0
      %1831 = vmatmul.mubr.bf16.gmra.mrb[0].mxu0 %v1775
      %v1832 = vpop.f32.mrb[0].mxu0
      %v1833 = vadd.f32 0.0, %v1832
      %v1834 = vpop.f32.mrb[0].mxu0
      %v1835 = vpop.f32.mrb[0].mxu0
      %v1836 = vadd.f32 0.0, %v1835
      %v1837 = vpop.f32.mrb[0].mxu0
      %1838 = vmatprep.mubr.bf16.mxu0 0
      %1839 = vmatmul.mubr.bf16.gmra.mrb[0].mxu0 %v1777
      %v1840 = vpop.f32.mrb[0].mxu0
      %v1841 = vadd.f32 0.0, %v1840
      %v1842 = vpop.f32.mrb[0].mxu0
      %v1843 = vpop.f32.mrb[0].mxu0
      %v1844 = vadd.f32 0.0, %v1843
      %v1845 = vpop.f32.mrb[0].mxu0
      %1846 = vmatprep.mubr.bf16.mxu0 0
      %1847 = vmatmul.mubr.bf16.gmra.mrb[0].mxu0 %v1779
      %v1848 = vpop.f32.mrb[0].mxu0
      %v1849 = vadd.f32 0.0, %v1848
      %v1850 = vpop.f32.mrb[0].mxu0
      %v1851 = vpop.f32.mrb[0].mxu0
      %v1852 = vadd.f32 0.0, %v1851
      %v1853 = vpop.f32.mrb[0].mxu0
      %1854 = vmatprep.mubr.bf16.mxu0 0
      %1855 = vmatmul.mubr.bf16.gmra.mrb[0].mxu0 %v1781
      %v1856 = vpop.f32.mrb[0].mxu0
      %v1857 = vadd.f32 0.0, %v1856
      %v1858 = vpop.f32.mrb[0].mxu0
      %v1859 = vpop.f32.mrb[0].mxu0
      %v1860 = vadd.f32 0.0, %v1859
      %v1861 = vpop.f32.mrb[0].mxu0
      %1862 = vmatprep.mubr.bf16.mxu0 0
      %1863 = vmatmul.mubr.bf16.gmra.mrb[0].mxu0 %v1783
      %v1864 = vpop.f32.mrb[0].mxu0
      %v1865 = vadd.f32 0.0, %v1864
      %v1866 = vpop.f32.mrb[0].mxu0
      %v1867 = vpop.f32.mrb[0].mxu0
      %v1868 = vadd.f32 0.0, %v1867
      %v1869 = vpop.f32.mrb[0].mxu0
      %1870 = vmatprep.mubr.bf16.mxu0 0
      %1871 = vmatmul.mubr.bf16.gmra.mrb[0].mxu0 %v1785
      %v1872 = vpop.f32.mrb[0].mxu0
      %v1873 = vadd.f32 0.0, %v1872
      %v1874 = vpop.f32.mrb[0].mxu0
      %v1875 = vpop.f32.mrb[0].mxu0
      %v1876 = vadd.f32 0.0, %v1875
      %v1877 = vpop.f32.mrb[0].mxu0
      %1878 = vmatprep.mubr.bf16.mxu0 0
      %1879 = vmatmul.mubr.bf16.gmra.mrb[0].mxu0 %v1787
      %v1880 = vpop.f32.mrb[0].mxu0
      %v1881 = vadd.f32 0.0, %v1880
      %v1882 = vpop.f32.mrb[0].mxu0
      %v1883 = vpop.f32.mrb[0].mxu0
      %v1884 = vadd.f32 0.0, %v1883
      %v1885 = vpop.f32.mrb[0].mxu0
      %1886 = vmatprep.mubr.bf16.mxu0 0
      %1887 = vmatmul.mubr.bf16.gmra.mrb[0].mxu0 %v1789
      %v1888 = vpop.f32.mrb[0].mxu0
      %v1889 = vadd.f32 0.0, %v1888
      %v1890 = vpop.f32.mrb[0].mxu0
      %v1891 = vpop.f32.mrb[0].mxu0
      %v1892 = vadd.f32 0.0, %v1891
      %v1893 = vpop.f32.mrb[0].mxu0
      %1894 = vmatprep.mubr.bf16.mxu0 0
      %1895 = vmatmul.mubr.bf16.gmra.mrb[0].mxu0 %v1791
      %v1896 = vpop.f32.mrb[0].mxu0
      %v1897 = vadd.f32 0.0, %v1896
      %v1898 = vpop.f32.mrb[0].mxu0
      %v1899 = vpop.f32.mrb[0].mxu0
      %v1900 = vadd.f32 0.0, %v1899
      %v1901 = vpop.f32.mrb[0].mxu0
      %1902 = vmatprep.mubr.bf16.mxu0 0
      %1903 = vmatmul.mubr.bf16.gmra.mrb[0].mxu0 %v1793
      %v1904 = vpop.f32.mrb[0].mxu0
      %v1905 = vadd.f32 0.0, %v1904
      %v1906 = vpop.f32.mrb[0].mxu0
      %v1907 = vpop.f32.mrb[0].mxu0
      %v1908 = vadd.f32 0.0, %v1907
      %v1909 = vpop.f32.mrb[0].mxu0
      %1910 = vdwg.mxu0
      %v1911 = vadd.f32 %v1373, %v1833
      %v1912 = vadd.f32 %v1374, %v1836
      %v1913 = vadd.f32 %v1375, %v1841
      %v1914 = vadd.f32 %v1376, %v1844
      %v1915 = vadd.f32 %v1377, %v1849
      %v1916 = vadd.f32 %v1378, %v1852
      %v1917 = vadd.f32 %v1379, %v1857
      %v1918 = vadd.f32 %v1380, %v1860
      %v1919 = vadd.f32 %v1381, %v1865
      %v1920 = vadd.f32 %v1382, %v1868
      %v1921 = vadd.f32 %v1383, %v1873
      %v1922 = vadd.f32 %v1384, %v1876
      %v1923 = vadd.f32 %v1385, %v1881
      %v1924 = vadd.f32 %v1386, %v1884
      %v1925 = vadd.f32 %v1387, %v1889
      %v1926 = vadd.f32 %v1388, %v1892
      %v1927 = vadd.f32 %v1389, %v1897
      %v1928 = vadd.f32 %v1390, %v1900
      %v1929 = vadd.f32 %v1391, %v1905
      %v1930 = vadd.f32 %v1392, %v1908
      %v1931 = vmax.f32 %v1911, 0.0
      %v1932 = vmax.f32 %v1912, 0.0
      %v1933 = vmax.f32 %v1913, 0.0
      %v1934 = vmax.f32 %v1914, 0.0
      %v1935 = vmax.f32 %v1915, 0.0
      %v1936 = vmax.f32 %v1916, 0.0
      %v1937 = vmax.f32 %v1917, 0.0
      %v1938 = vmax.f32 %v1918, 0.0
      %v1939 = vmax.f32 %v1919, 0.0
      %v1940 = vmax.f32 %v1920, 0.0
      %v1941 = vmax.f32 %v1921, 0.0
      %v1942 = vmax.f32 %v1922, 0.0
      %v1943 = vmax.f32 %v1923, 0.0
      %v1944 = vmax.f32 %v1924, 0.0
      %v1945 = vmax.f32 %v1925, 0.0
      %v1946 = vmax.f32 %v1926, 0.0
      %v1947 = vmax.f32 %v1927, 0.0
      %v1948 = vmax.f32 %v1928, 0.0
      %v1949 = vmax.f32 %v1929, 0.0
      %v1950 = vmax.f32 %v1930, 0.0
      %v1951 = vpack.c.bf16 %v1932, %v1931
      %v1952 = vpack.c.bf16 %v1934, %v1933
      %v1953 = vpack.c.bf16 %v1936, %v1935
      %v1954 = vpack.c.bf16 %v1938, %v1937
      %v1955 = vpack.c.bf16 %v1940, %v1939
      %v1956 = vpack.c.bf16 %v1942, %v1941
      %v1957 = vpack.c.bf16 %v1944, %v1943
      %v1958 = vpack.c.bf16 %v1946, %v1945
      %v1959 = vpack.c.bf16 %v1948, %v1947
      %v1960 = vpack.c.bf16 %v1950, %v1949
      %vm1961 = vcmask 24576
      %vm1962 = vsmask.f32 256
      %vm1963 = vmand %vm1961, %vm1962
      %v1964 = vld [vmem:[#allocation2] sm:$0x1]
      %v1965 = vsel %vm1963, 0, %v1964
      %1966 = vst [vmem:[#allocation2] sm:$0x1] %v1965
      %v1967 = vld [vmem:[#allocation2 + $0xc] sm:$0x1]
      %v1968 = vsel %vm1963, 0, %v1967
      %1969 = vst [vmem:[#allocation2 + $0xc] sm:$0x1] %v1968
      %v1970 = vld [vmem:[#allocation2 + $0x18] sm:$0x1]
      %v1971 = vsel %vm1963, 0, %v1970
      %1972 = vst [vmem:[#allocation2 + $0x18] sm:$0x1] %v1971
      %v1973 = vld [vmem:[#allocation2 + $0x24] sm:$0x1]
      %v1974 = vsel %vm1963, 0, %v1973
      %1975 = vst [vmem:[#allocation2 + $0x24] sm:$0x1] %v1974
      %v1976 = vld [vmem:[#allocation2 + $0x30] sm:$0x1]
      %v1977 = vsel %vm1963, 0, %v1976
      %1978 = vst [vmem:[#allocation2 + $0x30] sm:$0x1] %v1977
      %v1979 = vld [vmem:[#allocation2 + $0x3c] sm:$0x1]
      %v1980 = vsel %vm1963, 0, %v1979
      %1981 = vst [vmem:[#allocation2 + $0x3c] sm:$0x1] %v1980
      %v1982 = vld [vmem:[#allocation2 + $0x48] sm:$0x1]
      %v1983 = vsel %vm1963, 0, %v1982
      %1984 = vst [vmem:[#allocation2 + $0x48] sm:$0x1] %v1983
      %v1985 = vld [vmem:[#allocation2 + $0x54] sm:$0x1]
      %v1986 = vsel %vm1963, 0, %v1985
      %1987 = vst [vmem:[#allocation2 + $0x54] sm:$0x1] %v1986
      %v1988 = vld [vmem:[#allocation2 + $0x60] sm:$0x1]
      %v1989 = vsel %vm1963, 0, %v1988
      %1990 = vst [vmem:[#allocation2 + $0x60] sm:$0x1] %v1989
      %v1991 = vld [vmem:[#allocation2 + $0x6c] sm:$0x1]
      %v1992 = vsel %vm1963, 0, %v1991
      %1993 = vst [vmem:[#allocation2 + $0x6c] sm:$0x1] %v1992
      %vm1994 = vsmask.f32 7938
      %vm1995 = vmand %vm1961, %vm1994
      %v1996 = vld [vmem:[#allocation2 + $0x8] sm:$0x1]
      %v1997 = vsel %vm1995, 0, %v1996
      %1998 = vst [vmem:[#allocation2 + $0x8] sm:$0x1] %v1997
      %v1999 = vld [vmem:[#allocation2 + $0x14] sm:$0x1]
      %v2000 = vsel %vm1995, 0, %v1999
      %2001 = vst [vmem:[#allocation2 + $0x14] sm:$0x1] %v2000
      %v2002 = vld [vmem:[#allocation2 + $0x20] sm:$0x1]
      %v2003 = vsel %vm1995, 0, %v2002
      %2004 = vst [vmem:[#allocation2 + $0x20] sm:$0x1] %v2003
      %v2005 = vld [vmem:[#allocation2 + $0x2c] sm:$0x1]
      %v2006 = vsel %vm1995, 0, %v2005
      %2007 = vst [vmem:[#allocation2 + $0x2c] sm:$0x1] %v2006
      %v2008 = vld [vmem:[#allocation2 + $0x38] sm:$0x1]
      %v2009 = vsel %vm1995, 0, %v2008
      %2010 = vst [vmem:[#allocation2 + $0x38] sm:$0x1] %v2009
      %v2011 = vld [vmem:[#allocation2 + $0x44] sm:$0x1]
      %v2012 = vsel %vm1995, 0, %v2011
      %2013 = vst [vmem:[#allocation2 + $0x44] sm:$0x1] %v2012
      %v2014 = vld [vmem:[#allocation2 + $0x50] sm:$0x1]
      %v2015 = vsel %vm1995, 0, %v2014
      %2016 = vst [vmem:[#allocation2 + $0x50] sm:$0x1] %v2015
      %v2017 = vld [vmem:[#allocation2 + $0x5c] sm:$0x1]
      %v2018 = vsel %vm1995, 0, %v2017
      %2019 = vst [vmem:[#allocation2 + $0x5c] sm:$0x1] %v2018
      %v2020 = vld [vmem:[#allocation2 + $0x68] sm:$0x1]
      %v2021 = vsel %vm1995, 0, %v2020
      %2022 = vst [vmem:[#allocation2 + $0x68] sm:$0x1] %v2021
      %v2023 = vld [vmem:[#allocation2 + $0x74] sm:$0x1]
      %v2024 = vsel %vm1995, 0, %v2023
      %2025 = vst [vmem:[#allocation2 + $0x74] sm:$0x1] %v2024
      %v2036 = vunpack.c.l.b16 %v1951
      %v2037 = vunpack.c.h.b16 %v1951
      %v2038 = vunpack.c.l.b16 %v1952
      %v2039 = vunpack.c.h.b16 %v1952
      %v2040 = vunpack.c.l.b16 %v1953
      %v2041 = vunpack.c.h.b16 %v1953
      %v2042 = vunpack.c.l.b16 %v1954
      %v2043 = vunpack.c.h.b16 %v1954
      %v2044 = vunpack.c.l.b16 %v1955
      %v2045 = vunpack.c.h.b16 %v1955
      %v2046 = vunpack.c.l.b16 %v1956
      %v2047 = vunpack.c.h.b16 %v1956
      %v2048 = vunpack.c.l.b16 %v1957
      %v2049 = vunpack.c.h.b16 %v1957
      %v2050 = vunpack.c.l.b16 %v1958
      %v2051 = vunpack.c.h.b16 %v1958
      %v2052 = vunpack.c.l.b16 %v1959
      %v2053 = vunpack.c.h.b16 %v1959
      %v2054 = vunpack.c.l.b16 %v1960
      %v2055 = vunpack.c.h.b16 %v1960
      %v2056 = vpack.c.b16 %v2036, %v2036
      %v2057 = vpack.c.b16 %v2037, %v2037
      %v2058 = vpack.c.b16 %v2038, %v2038
      %v2059 = vpack.c.b16 %v2039, %v2039
      %v2060 = vpack.c.b16 %v2040, %v2040
      %v2061 = vpack.c.b16 %v2041, %v2041
      %v2062 = vpack.c.b16 %v2042, %v2042
      %v2063 = vpack.c.b16 %v2043, %v2043
      %v2064 = vpack.c.b16 %v2044, %v2044
      %v2065 = vpack.c.b16 %v2045, %v2045
      %v2066 = vpack.c.b16 %v2046, %v2046
      %v2067 = vpack.c.b16 %v2047, %v2047
      %v2068 = vpack.c.b16 %v2048, %v2048
      %v2069 = vpack.c.b16 %v2049, %v2049
      %v2070 = vpack.c.b16 %v2050, %v2050
      %v2071 = vpack.c.b16 %v2051, %v2051
      %v2072 = vpack.c.b16 %v2052, %v2052
      %v2073 = vpack.c.b16 %v2053, %v2053
      %v2074 = vpack.c.b16 %v2054, %v2054
      %v2075 = vpack.c.b16 %v2055, %v2055
      %vm2076 = vsmask.f32 4368
      %vm2077 = vmor %vm1962, %vm2076
      %v2079 = vshrl.u32 %v2056, 16
      %v2081 = vrot.slane %v2079, 7
      %v2082 = vshll.u32 %v2056, 16
      %v2084 = vor.u32 %v2081, %v2082
      %v2085 = vrot.slane %v2081, 4
      %v2087 = vshrl.u32 %v2057, 16
      %v2089 = vrot.slane %v2087, 7
      %v2090 = vshll.u32 %v2057, 16
      %v2092 = vor.u32 %v2089, %v2090
      %v2093 = vsel %vm2077, %v2085, %v2092
      %v2094 = vrot.slane %v2089, 4
      %v2096 = vshrl.u32 %v2058, 16
      %v2098 = vrot.slane %v2096, 7
      %v2099 = vshll.u32 %v2058, 16
      %v2101 = vor.u32 %v2098, %v2099
      %v2102 = vrot.slane %v2098, 4
      %v2104 = vshrl.u32 %v2059, 16
      %v2106 = vrot.slane %v2104, 7
      %v2107 = vshll.u32 %v2059, 16
      %v2109 = vor.u32 %v2106, %v2107
      %v2110 = vsel %vm2077, %v2102, %v2109
      %v2111 = vrot.slane %v2106, 4
      %v2113 = vshrl.u32 %v2060, 16
      %v2115 = vrot.slane %v2113, 7
      %v2116 = vshll.u32 %v2060, 16
      %v2118 = vor.u32 %v2115, %v2116
      %v2119 = vrot.slane %v2115, 4
      %v2121 = vshrl.u32 %v2061, 16
      %v2123 = vrot.slane %v2121, 7
      %v2124 = vshll.u32 %v2061, 16
      %v2126 = vor.u32 %v2123, %v2124
      %v2127 = vsel %vm2077, %v2119, %v2126
      %v2128 = vrot.slane %v2123, 4
      %v2130 = vshrl.u32 %v2062, 16
      %v2132 = vrot.slane %v2130, 7
      %v2133 = vshll.u32 %v2062, 16
      %v2135 = vor.u32 %v2132, %v2133
      %v2136 = vrot.slane %v2132, 4
      %v2138 = vshrl.u32 %v2063, 16
      %v2140 = vrot.slane %v2138, 7
      %v2141 = vshll.u32 %v2063, 16
      %v2143 = vor.u32 %v2140, %v2141
      %v2144 = vsel %vm2077, %v2136, %v2143
      %v2145 = vrot.slane %v2140, 4
      %v2147 = vshrl.u32 %v2064, 16
      %v2149 = vrot.slane %v2147, 7
      %v2150 = vshll.u32 %v2064, 16
      %v2152 = vor.u32 %v2149, %v2150
      %v2153 = vrot.slane %v2149, 4
      %v2155 = vshrl.u32 %v2065, 16
      %v2157 = vrot.slane %v2155, 7
      %v2158 = vshll.u32 %v2065, 16
      %v2160 = vor.u32 %v2157, %v2158
      %v2161 = vsel %vm2077, %v2153, %v2160
      %v2162 = vrot.slane %v2157, 4
      %v2164 = vshrl.u32 %v2066, 16
      %v2166 = vrot.slane %v2164, 7
      %v2167 = vshll.u32 %v2066, 16
      %v2169 = vor.u32 %v2166, %v2167
      %v2170 = vrot.slane %v2166, 4
      %v2172 = vshrl.u32 %v2067, 16
      %v2174 = vrot.slane %v2172, 7
      %v2175 = vshll.u32 %v2067, 16
      %v2177 = vor.u32 %v2174, %v2175
      %v2178 = vsel %vm2077, %v2170, %v2177
      %v2179 = vrot.slane %v2174, 4
      %v2181 = vshrl.u32 %v2068, 16
      %v2183 = vrot.slane %v2181, 7
      %v2184 = vshll.u32 %v2068, 16
      %v2186 = vor.u32 %v2183, %v2184
      %v2187 = vrot.slane %v2183, 4
      %v2189 = vshrl.u32 %v2069, 16
      %v2191 = vrot.slane %v2189, 7
      %v2192 = vshll.u32 %v2069, 16
      %v2194 = vor.u32 %v2191, %v2192
      %v2195 = vsel %vm2077, %v2187, %v2194
      %v2196 = vrot.slane %v2191, 4
      %v2198 = vshrl.u32 %v2070, 16
      %v2200 = vrot.slane %v2198, 7
      %v2201 = vshll.u32 %v2070, 16
      %v2203 = vor.u32 %v2200, %v2201
      %v2204 = vrot.slane %v2200, 4
      %v2206 = vshrl.u32 %v2071, 16
      %v2208 = vrot.slane %v2206, 7
      %v2209 = vshll.u32 %v2071, 16
      %v2211 = vor.u32 %v2208, %v2209
      %v2212 = vsel %vm2077, %v2204, %v2211
      %v2213 = vrot.slane %v2208, 4
      %v2215 = vshrl.u32 %v2072, 16
      %v2217 = vrot.slane %v2215, 7
      %v2218 = vshll.u32 %v2072, 16
      %v2220 = vor.u32 %v2217, %v2218
      %v2221 = vrot.slane %v2217, 4
      %v2223 = vshrl.u32 %v2073, 16
      %v2225 = vrot.slane %v2223, 7
      %v2226 = vshll.u32 %v2073, 16
      %v2228 = vor.u32 %v2225, %v2226
      %v2229 = vsel %vm2077, %v2221, %v2228
      %v2230 = vrot.slane %v2225, 4
      %v2232 = vshrl.u32 %v2074, 16
      %v2234 = vrot.slane %v2232, 7
      %v2235 = vshll.u32 %v2074, 16
      %v2237 = vor.u32 %v2234, %v2235
      %v2238 = vrot.slane %v2234, 4
      %v2240 = vshrl.u32 %v2075, 16
      %v2242 = vrot.slane %v2240, 7
      %v2243 = vshll.u32 %v2075, 16
      %v2245 = vor.u32 %v2242, %v2243
      %v2246 = vsel %vm2077, %v2238, %v2245
      %v2247 = vrot.slane %v2242, 4
      %vm2278 = vcmask 27648
      %vm2279 = vmand %vm2278, %vm1994
      %v2280 = vld [vmem:[#allocation2] sm:$0xf]
      %v2281 = vsel %vm2279, %v2084, %v2280
      %2282 = vst [vmem:[#allocation2] sm:$0xf] %v2281
      %vm2283 = vcmask 27648
      %2284 = vst.msk [vmem:[#allocation2 + $0x4] sm:$0xf] %vm2283, %v2093
      %v2285 = vld [vmem:[#allocation2 + $0x8] sm:$0x1]
      %v2286 = vsel %vm1963, %v2094, %v2285
      %2287 = vst [vmem:[#allocation2 + $0x8] sm:$0x1] %v2286
      %v2288 = vld [vmem:[#allocation2 + $0xc] sm:$0xf]
      %v2289 = vsel %vm2279, %v2101, %v2288
      %2290 = vst [vmem:[#allocation2 + $0xc] sm:$0xf] %v2289
      %2291 = vst.msk [vmem:[#allocation2 + $0x10] sm:$0xf] %vm2283, %v2110
      %v2292 = vld [vmem:[#allocation2 + $0x14] sm:$0x1]
      %v2293 = vsel %vm1963, %v2111, %v2292
      %2294 = vst [vmem:[#allocation2 + $0x14] sm:$0x1] %v2293
      %v2295 = vld [vmem:[#allocation2 + $0x18] sm:$0xf]
      %v2296 = vsel %vm2279, %v2118, %v2295
      %2297 = vst [vmem:[#allocation2 + $0x18] sm:$0xf] %v2296
      %2298 = vst.msk [vmem:[#allocation2 + $0x1c] sm:$0xf] %vm2283, %v2127
      %v2299 = vld [vmem:[#allocation2 + $0x20] sm:$0x1]
      %v2300 = vsel %vm1963, %v2128, %v2299
      %2301 = vst [vmem:[#allocation2 + $0x20] sm:$0x1] %v2300
      %v2302 = vld [vmem:[#allocation2 + $0x24] sm:$0xf]
      %v2303 = vsel %vm2279, %v2135, %v2302
      %2304 = vst [vmem:[#allocation2 + $0x24] sm:$0xf] %v2303
      %2305 = vst.msk [vmem:[#allocation2 + $0x28] sm:$0xf] %vm2283, %v2144
      %v2306 = vld [vmem:[#allocation2 + $0x2c] sm:$0x1]
      %v2307 = vsel %vm1963, %v2145, %v2306
      %2308 = vst [vmem:[#allocation2 + $0x2c] sm:$0x1] %v2307
      %v2309 = vld [vmem:[#allocation2 + $0x30] sm:$0xf]
      %v2310 = vsel %vm2279, %v2152, %v2309
      %2311 = vst [vmem:[#allocation2 + $0x30] sm:$0xf] %v2310
      %2312 = vst.msk [vmem:[#allocation2 + $0x34] sm:$0xf] %vm2283, %v2161
      %v2313 = vld [vmem:[#allocation2 + $0x38] sm:$0x1]
      %v2314 = vsel %vm1963, %v2162, %v2313
      %2315 = vst [vmem:[#allocation2 + $0x38] sm:$0x1] %v2314
      %v2316 = vld [vmem:[#allocation2 + $0x3c] sm:$0xf]
      %v2317 = vsel %vm2279, %v2169, %v2316
      %2318 = vst [vmem:[#allocation2 + $0x3c] sm:$0xf] %v2317
      %2319 = vst.msk [vmem:[#allocation2 + $0x40] sm:$0xf] %vm2283, %v2178
      %v2320 = vld [vmem:[#allocation2 + $0x44] sm:$0x1]
      %v2321 = vsel %vm1963, %v2179, %v2320
      %2322 = vst [vmem:[#allocation2 + $0x44] sm:$0x1] %v2321
      %v2323 = vld [vmem:[#allocation2 + $0x48] sm:$0xf]
      %v2324 = vsel %vm2279, %v2186, %v2323
      %2325 = vst [vmem:[#allocation2 + $0x48] sm:$0xf] %v2324
      %2326 = vst.msk [vmem:[#allocation2 + $0x4c] sm:$0xf] %vm2283, %v2195
      %v2327 = vld [vmem:[#allocation2 + $0x50] sm:$0x1]
      %v2328 = vsel %vm1963, %v2196, %v2327
      %2329 = vst [vmem:[#allocation2 + $0x50] sm:$0x1] %v2328
      %v2330 = vld [vmem:[#allocation2 + $0x54] sm:$0xf]
      %v2331 = vsel %vm2279, %v2203, %v2330
      %2332 = vst [vmem:[#allocation2 + $0x54] sm:$0xf] %v2331
      %2333 = vst.msk [vmem:[#allocation2 + $0x58] sm:$0xf] %vm2283, %v2212
      %v2334 = vld [vmem:[#allocation2 + $0x5c] sm:$0x1]
      %v2335 = vsel %vm1963, %v2213, %v2334
      %2336 = vst [vmem:[#allocation2 + $0x5c] sm:$0x1] %v2335
      %v2337 = vld [vmem:[#allocation2 + $0x60] sm:$0xf]
      %v2338 = vsel %vm2279, %v2220, %v2337
      %2339 = vst [vmem:[#allocation2 + $0x60] sm:$0xf] %v2338
      %2340 = vst.msk [vmem:[#allocation2 + $0x64] sm:$0xf] %vm2283, %v2229
      %v2341 = vld [vmem:[#allocation2 + $0x68] sm:$0x1]
      %v2342 = vsel %vm1963, %v2230, %v2341
      %2343 = vst [vmem:[#allocation2 + $0x68] sm:$0x1] %v2342
      %v2344 = vld [vmem:[#allocation2 + $0x6c] sm:$0xf]
      %v2345 = vsel %vm2279, %v2237, %v2344
      %2346 = vst [vmem:[#allocation2 + $0x6c] sm:$0xf] %v2345
      %2347 = vst.msk [vmem:[#allocation2 + $0x70] sm:$0xf] %vm2283, %v2246
      %v2348 = vld [vmem:[#allocation2 + $0x74] sm:$0x1]
      %v2349 = vsel %vm1963, %v2247, %v2348
      %2350 = vst [vmem:[#allocation2 + $0x74] sm:$0x1] %v2349
      %p2351 = scmp.eq.s32.totalorder %s23, 0
      // Predicated region
      $region49: #{tpu_custom_call.1} parent=47 // pred_check
        %p2352 = pneg %p2351
      $region50: #{tpu_custom_call.1} parent=47 // pred_check_branch
        %2354 = sbr.rel (%p2352) target = $region52
      $region51: #{tpu_custom_call.1} parent=47 // pred_region
        %2355 = vst.msk [vmem:[#allocation2] sm:$0xf] %vm2283, 0
        %2356 = vst.msk [vmem:[#allocation2 + $0x4] sm:$0xf] %vm2283, 0
        %vm2357 = vcmask 24576
        %2358 = vst.msk [vmem:[#allocation2 + $0x8] sm:$0x1] %vm2357, 0
      $region52: #{tpu_custom_call.1} parent=47 // pred_fallthru
        _
      %p2359 = scmp.eq.s32.totalorder %s23, 1
      // Predicated region
      $region53: #{tpu_custom_call.1} parent=47 // pred_check
        %p2360 = pneg %p2359
      $region54: #{tpu_custom_call.1} parent=47 // pred_check_branch
        %2362 = sbr.rel (%p2360) target = $region56
      $region55: #{tpu_custom_call.1} parent=47 // pred_region
        %s2363 = scalar_lea.vmem [#allocation2], 108
        %2364 = vst.msk [vmem:[%s2363] sm:$0xf] %vm2283, 0
        %2365 = vst.msk [vmem:[%s2363 + $0x4] sm:$0xf] %vm2283, 0
        %vm2366 = vcmask 24576
        %2367 = vst.msk [vmem:[%s2363 + $0x8] sm:$0x1] %vm2366, 0
      $region56: #{tpu_custom_call.1} parent=47 // pred_fallthru
        _
      %v2368 = vld [vmem:[%s4] sm:$0x1]
      %v2370 = vlaneseq
      %v2371 = vshrl.u32 %v2370, 7
      %v2372 = vsub.s32 0, %v2371
      %v2373 = vrot.slane %v2368, %v2372
      %v2375 = vld [vmem:[#allocation2] sm:$0xf]
      %v2376 = vld [vmem:[#allocation2 + $0x4] sm:$0xf]
      %v2377 = vld [vmem:[#allocation2 + $0x8] sm:$0x1]
      %v2378 = vld [vmem:[#allocation2 + $0xc] sm:$0xf]
      %v2379 = vld [vmem:[#allocation2 + $0x10] sm:$0xf]
      %v2380 = vld [vmem:[#allocation2 + $0x14] sm:$0x1]
      %v2381 = vld [vmem:[#allocation2 + $0x18] sm:$0xf]
      %v2382 = vld [vmem:[#allocation2 + $0x1c] sm:$0xf]
      %v2383 = vld [vmem:[#allocation2 + $0x20] sm:$0x1]
      %v2384 = vld [vmem:[#allocation2 + $0x24] sm:$0xf]
      %v2385 = vld [vmem:[#allocation2 + $0x28] sm:$0xf]
      %v2386 = vld [vmem:[#allocation2 + $0x2c] sm:$0x1]
      %v2387 = vld [vmem:[#allocation2 + $0x30] sm:$0xf]
      %v2388 = vld [vmem:[#allocation2 + $0x34] sm:$0xf]
      %v2389 = vld [vmem:[#allocation2 + $0x38] sm:$0x1]
      %v2390 = vld [vmem:[#allocation2 + $0x3c] sm:$0xf]
      %v2391 = vld [vmem:[#allocation2 + $0x40] sm:$0xf]
      %v2392 = vld [vmem:[#allocation2 + $0x44] sm:$0x1]
      %v2393 = vld [vmem:[#allocation2 + $0x48] sm:$0xf]
      %v2394 = vld [vmem:[#allocation2 + $0x4c] sm:$0xf]
      %v2395 = vld [vmem:[#allocation2 + $0x50] sm:$0x1]
      %v2396 = vld [vmem:[#allocation2 + $0x54] sm:$0xf]
      %v2397 = vld [vmem:[#allocation2 + $0x58] sm:$0xf]
      %v2398 = vld [vmem:[#allocation2 + $0x5c] sm:$0x1]
      %v2415 = vunpack.c.l.b16 %v2375
      %v2416 = vunpack.c.l.b16 %v2376
      %v2417 = vunpack.c.l.b16 %v2378
      %v2418 = vunpack.c.l.b16 %v2379
      %v2419 = vunpack.c.l.b16 %v2381
      %v2420 = vunpack.c.l.b16 %v2382
      %v2421 = vunpack.c.l.b16 %v2384
      %v2422 = vunpack.c.l.b16 %v2385
      %v2423 = vunpack.c.l.b16 %v2387
      %v2424 = vunpack.c.l.b16 %v2388
      %v2425 = vunpack.c.l.b16 %v2390
      %v2426 = vunpack.c.l.b16 %v2391
      %v2427 = vunpack.c.l.b16 %v2393
      %v2428 = vunpack.c.l.b16 %v2394
      %v2429 = vunpack.c.l.b16 %v2396
      %v2430 = vunpack.c.l.b16 %v2397
      %v2431 = vpack.c.b16 %v2416, %v2415
      %v2432 = vpack.c.b16 %v2418, %v2417
      %v2433 = vpack.c.b16 %v2420, %v2419
      %v2434 = vpack.c.b16 %v2422, %v2421
      %v2435 = vpack.c.b16 %v2424, %v2423
      %v2436 = vpack.c.b16 %v2426, %v2425
      %v2437 = vpack.c.b16 %v2428, %v2427
      %v2438 = vpack.c.b16 %v2430, %v2429
      %v2447 = vunpack.c.l.b16 %v2377
      %v2448 = vunpack.c.l.b16 %v2380
      %v2449 = vunpack.c.l.b16 %v2383
      %v2450 = vunpack.c.l.b16 %v2386
      %v2451 = vunpack.c.l.b16 %v2389
      %v2452 = vunpack.c.l.b16 %v2392
      %v2453 = vunpack.c.l.b16 %v2395
      %v2454 = vunpack.c.l.b16 %v2398
      %v2455 = vpack.c.b16 %v2447, %v2447
      %v2456 = vpack.c.b16 %v2448, %v2448
      %v2457 = vpack.c.b16 %v2449, %v2449
      %v2458 = vpack.c.b16 %v2450, %v2450
      %v2459 = vpack.c.b16 %v2451, %v2451
      %v2460 = vpack.c.b16 %v2452, %v2452
      %v2461 = vpack.c.b16 %v2453, %v2453
      %v2462 = vpack.c.b16 %v2454, %v2454
      %v2464 = vshrl.u32 %v2431, 16
      %v2466 = vshll.u32 %v2431, 16
      %v2468 = vrot.slane %v2466, 1
      %v2469 = vor.u32 %v2464, %v2468
      %v2471 = vshll.u32 %v2455, 16
      %v2473 = vrot.slane %v2471, 1
      %v2474 = vsel %vm456, %v2469, %v2473
      %v2476 = vshrl.u32 %v2432, 16
      %v2478 = vshll.u32 %v2432, 16
      %v2480 = vrot.slane %v2478, 1
      %v2481 = vor.u32 %v2476, %v2480
      %v2483 = vshll.u32 %v2456, 16
      %v2485 = vrot.slane %v2483, 1
      %v2486 = vsel %vm456, %v2481, %v2485
      %v2488 = vshrl.u32 %v2433, 16
      %v2490 = vshll.u32 %v2433, 16
      %v2492 = vrot.slane %v2490, 1
      %v2493 = vor.u32 %v2488, %v2492
      %v2495 = vshll.u32 %v2457, 16
      %v2497 = vrot.slane %v2495, 1
      %v2498 = vsel %vm456, %v2493, %v2497
      %v2500 = vshrl.u32 %v2434, 16
      %v2502 = vshll.u32 %v2434, 16
      %v2504 = vrot.slane %v2502, 1
      %v2505 = vor.u32 %v2500, %v2504
      %v2507 = vshll.u32 %v2458, 16
      %v2509 = vrot.slane %v2507, 1
      %v2510 = vsel %vm456, %v2505, %v2509
      %v2512 = vshrl.u32 %v2435, 16
      %v2514 = vshll.u32 %v2435, 16
      %v2516 = vrot.slane %v2514, 1
      %v2517 = vor.u32 %v2512, %v2516
      %v2519 = vshll.u32 %v2459, 16
      %v2521 = vrot.slane %v2519, 1
      %v2522 = vsel %vm456, %v2517, %v2521
      %v2524 = vshrl.u32 %v2436, 16
      %v2526 = vshll.u32 %v2436, 16
      %v2528 = vrot.slane %v2526, 1
      %v2529 = vor.u32 %v2524, %v2528
      %v2531 = vshll.u32 %v2460, 16
      %v2533 = vrot.slane %v2531, 1
      %v2534 = vsel %vm456, %v2529, %v2533
      %v2536 = vshrl.u32 %v2437, 16
      %v2538 = vshll.u32 %v2437, 16
      %v2540 = vrot.slane %v2538, 1
      %v2541 = vor.u32 %v2536, %v2540
      %v2543 = vshll.u32 %v2461, 16
      %v2545 = vrot.slane %v2543, 1
      %v2546 = vsel %vm456, %v2541, %v2545
      %v2548 = vshrl.u32 %v2438, 16
      %v2550 = vshll.u32 %v2438, 16
      %v2552 = vrot.slane %v2550, 1
      %v2553 = vor.u32 %v2548, %v2552
      %v2555 = vshll.u32 %v2462, 16
      %v2557 = vrot.slane %v2555, 1
      %v2558 = vsel %vm456, %v2553, %v2557
      %2559 = vrot.lane.b32.xlu0 %v2474, 4
      %v2560 = vpop.permute.xlu0 %2559
      %2561 = vrot.lane.b32.xlu0 %v2486, 4
      %v2562 = vpop.permute.xlu0 %2561
      %2563 = vrot.lane.b32.xlu0 %v2498, 4
      %v2564 = vpop.permute.xlu0 %2563
      %2565 = vrot.lane.b32.xlu0 %v2510, 4
      %v2566 = vpop.permute.xlu0 %2565
      %2567 = vrot.lane.b32.xlu0 %v2522, 4
      %v2568 = vpop.permute.xlu0 %2567
      %2569 = vrot.lane.b32.xlu0 %v2534, 4
      %v2570 = vpop.permute.xlu0 %2569
      %2571 = vrot.lane.b32.xlu0 %v2546, 4
      %v2572 = vpop.permute.xlu0 %2571
      %2573 = vrot.lane.b32.xlu0 %v2558, 4
      %v2574 = vpop.permute.xlu0 %2573
      %v2575 = vrot.slane %v2431, 1
      %v2576 = vrot.slane %v2455, 1
      %v2577 = vsel %vm597, %v2575, %v2576
      %v2578 = vrot.slane %v2432, 1
      %v2579 = vrot.slane %v2456, 1
      %v2580 = vsel %vm597, %v2578, %v2579
      %v2581 = vrot.slane %v2433, 1
      %v2582 = vrot.slane %v2457, 1
      %v2583 = vsel %vm597, %v2581, %v2582
      %v2584 = vrot.slane %v2434, 1
      %v2585 = vrot.slane %v2458, 1
      %v2586 = vsel %vm597, %v2584, %v2585
      %v2587 = vrot.slane %v2435, 1
      %v2588 = vrot.slane %v2459, 1
      %v2589 = vsel %vm597, %v2587, %v2588
      %v2590 = vrot.slane %v2436, 1
      %v2591 = vrot.slane %v2460, 1
      %v2592 = vsel %vm597, %v2590, %v2591
      %v2593 = vrot.slane %v2437, 1
      %v2594 = vrot.slane %v2461, 1
      %v2595 = vsel %vm597, %v2593, %v2594
      %v2596 = vrot.slane %v2438, 1
      %v2597 = vrot.slane %v2462, 1
      %v2598 = vsel %vm597, %v2596, %v2597
      %2599 = vrot.lane.b32.xlu0 %v2577, 8
      %v2600 = vpop.permute.xlu0 %2599
      %2601 = vrot.lane.b32.xlu0 %v2580, 8
      %v2602 = vpop.permute.xlu0 %2601
      %2603 = vrot.lane.b32.xlu0 %v2583, 8
      %v2604 = vpop.permute.xlu0 %2603
      %2605 = vrot.lane.b32.xlu0 %v2586, 8
      %v2606 = vpop.permute.xlu0 %2605
      %2607 = vrot.lane.b32.xlu0 %v2589, 8
      %v2608 = vpop.permute.xlu0 %2607
      %2609 = vrot.lane.b32.xlu0 %v2592, 8
      %v2610 = vpop.permute.xlu0 %2609
      %2611 = vrot.lane.b32.xlu0 %v2595, 8
      %v2612 = vpop.permute.xlu0 %2611
      %2613 = vrot.lane.b32.xlu0 %v2598, 8
      %v2614 = vpop.permute.xlu0 %2613
      %v2616 = vsel %vm648, %v2431, %v2560
      %v2618 = vsel %vm648, %v2432, %v2562
      %v2620 = vsel %vm648, %v2433, %v2564
      %v2622 = vsel %vm648, %v2434, %v2566
      %v2624 = vsel %vm648, %v2435, %v2568
      %v2626 = vsel %vm648, %v2436, %v2570
      %v2628 = vsel %vm648, %v2437, %v2572
      %v2630 = vsel %vm648, %v2438, %v2574
      %v2632 = vsel %vm669, %v2616, %v2600
      %v2634 = vsel %vm669, %v2618, %v2602
      %v2636 = vsel %vm669, %v2620, %v2604
      %v2638 = vsel %vm669, %v2622, %v2606
      %v2640 = vsel %vm669, %v2624, %v2608
      %v2642 = vsel %vm669, %v2626, %v2610
      %v2644 = vsel %vm669, %v2628, %v2612
      %v2646 = vsel %vm669, %v2630, %v2614
      %v2647 = vld [vmem:[%s3] sm:$0xf]
      %v2648 = vld [vmem:[%s3 + $0x4] sm:$0x3]
      %v2651 = vunpack.c.l.b16 %v2647
      %v2652 = vunpack.c.l.b16 %v2648
      %v2653 = vpack.c.b16 %v2652, %v2651
      %v2654 = vsel %vm697, %v2632, 0
      %v2656 = vsel %vm697, %v2634, 0
      %v2658 = vsel %vm697, %v2636, 0
      %v2660 = vsel %vm697, %v2638, 0
      %v2662 = vsel %vm697, %v2640, 0
      %v2664 = vsel %vm697, %v2642, 0
      %v2666 = vsel %vm697, %v2644, 0
      %v2668 = vsel %vm697, %v2646, 0
      %v2671 = vsel %vm718, %v2653, 0
      %2673 = vmatprep.subr.bf16.mxu0 0
      %2674 = vmatpush1.bf16.msra.mxu0 %v2671
      %2675 = vmatprep.subr.bf16.mxu0 0
      %2676 = vmatpush1.bf16.msra.mxu0 0
      %2677 = vmatprep.subr.bf16.mxu0 0
      %2678 = vmatpush1.bf16.msra.mxu0 0
      %2679 = vmatprep.subr.bf16.mxu0 0
      %2680 = vmatpush1.bf16.msra.mxu0 0
      %2681 = vmatprep.subr.bf16.mxu0 0
      %2682 = vmatpush1.bf16.msra.mxu0 0
      %2683 = vmatprep.subr.bf16.mxu0 0
      %2684 = vmatpush1.bf16.msra.mxu0 0
      %2685 = vmatprep.subr.bf16.mxu0 0
      %2686 = vmatpush1.bf16.msra.mxu0 0
      %2687 = vmatprep.subr.bf16.mxu0 0
      %2688 = vmatpush1.bf16.msra.mxu0 0
      %2689 = vmatprep.subr.bf16.mxu0 0
      %2690 = vmatpush1.bf16.msra.mxu0 0
      %2691 = vmatprep.subr.bf16.mxu0 0
      %2692 = vmatpush1.bf16.msra.mxu0 0
      %2693 = vmatprep.subr.bf16.mxu0 0
      %2694 = vmatpush1.bf16.msra.mxu0 0
      %2695 = vmatprep.subr.bf16.mxu0 0
      %2696 = vmatpush1.bf16.msra.mxu0 0
      %2697 = vmatprep.subr.bf16.mxu0 0
      %2698 = vmatpush1.bf16.msra.mxu0 0
      %2699 = vmatprep.subr.bf16.mxu0 0
      %2700 = vmatpush1.bf16.msra.mxu0 0
      %2701 = vmatprep.subr.bf16.mxu0 0
      %2702 = vmatpush1.bf16.msra.mxu0 0
      %2703 = vmatprep.subr.bf16.mxu0 0
      %2704 = vmatpush1.bf16.msra.mxu0 0
      %2705 = vmatprep.mubr.bf16.mxu0 0
      %2706 = vmatmul.mubr.bf16.gmra.mrb[0].mxu0 %v2654
      %v2707 = vpop.f32.mrb[0].mxu0
      %v2708 = vadd.f32 0.0, %v2707
      %v2709 = vpop.f32.mrb[0].mxu0
      %v2710 = vpop.f32.mrb[0].mxu0
      %v2711 = vadd.f32 0.0, %v2710
      %v2712 = vpop.f32.mrb[0].mxu0
      %2713 = vmatprep.mubr.bf16.mxu0 0
      %2714 = vmatmul.mubr.bf16.gmra.mrb[0].mxu0 %v2656
      %v2715 = vpop.f32.mrb[0].mxu0
      %v2716 = vadd.f32 0.0, %v2715
      %v2717 = vpop.f32.mrb[0].mxu0
      %v2718 = vpop.f32.mrb[0].mxu0
      %v2719 = vadd.f32 0.0, %v2718
      %v2720 = vpop.f32.mrb[0].mxu0
      %2721 = vmatprep.mubr.bf16.mxu0 0
      %2722 = vmatmul.mubr.bf16.gmra.mrb[0].mxu0 %v2658
      %v2723 = vpop.f32.mrb[0].mxu0
      %v2724 = vadd.f32 0.0, %v2723
      %v2725 = vpop.f32.mrb[0].mxu0
      %v2726 = vpop.f32.mrb[0].mxu0
      %v2727 = vadd.f32 0.0, %v2726
      %v2728 = vpop.f32.mrb[0].mxu0
      %2729 = vmatprep.mubr.bf16.mxu0 0
      %2730 = vmatmul.mubr.bf16.gmra.mrb[0].mxu0 %v2660
      %v2731 = vpop.f32.mrb[0].mxu0
      %v2732 = vadd.f32 0.0, %v2731
      %v2733 = vpop.f32.mrb[0].mxu0
      %v2734 = vpop.f32.mrb[0].mxu0
      %v2735 = vadd.f32 0.0, %v2734
      %v2736 = vpop.f32.mrb[0].mxu0
      %2737 = vmatprep.mubr.bf16.mxu0 0
      %2738 = vmatmul.mubr.bf16.gmra.mrb[0].mxu0 %v2662
      %v2739 = vpop.f32.mrb[0].mxu0
      %v2740 = vadd.f32 0.0, %v2739
      %v2741 = vpop.f32.mrb[0].mxu0
      %v2742 = vpop.f32.mrb[0].mxu0
      %v2743 = vadd.f32 0.0, %v2742
      %v2744 = vpop.f32.mrb[0].mxu0
      %2745 = vmatprep.mubr.bf16.mxu0 0
      %2746 = vmatmul.mubr.bf16.gmra.mrb[0].mxu0 %v2664
      %v2747 = vpop.f32.mrb[0].mxu0
      %v2748 = vadd.f32 0.0, %v2747
      %v2749 = vpop.f32.mrb[0].mxu0
      %v2750 = vpop.f32.mrb[0].mxu0
      %v2751 = vadd.f32 0.0, %v2750
      %v2752 = vpop.f32.mrb[0].mxu0
      %2753 = vmatprep.mubr.bf16.mxu0 0
      %2754 = vmatmul.mubr.bf16.gmra.mrb[0].mxu0 %v2666
      %v2755 = vpop.f32.mrb[0].mxu0
      %v2756 = vadd.f32 0.0, %v2755
      %v2757 = vpop.f32.mrb[0].mxu0
      %v2758 = vpop.f32.mrb[0].mxu0
      %v2759 = vadd.f32 0.0, %v2758
      %v2760 = vpop.f32.mrb[0].mxu0
      %2761 = vmatprep.mubr.bf16.mxu0 0
      %2762 = vmatmul.mubr.bf16.gmra.mrb[0].mxu0 %v2668
      %v2763 = vpop.f32.mrb[0].mxu0
      %v2764 = vadd.f32 0.0, %v2763
      %v2765 = vpop.f32.mrb[0].mxu0
      %v2766 = vpop.f32.mrb[0].mxu0
      %v2767 = vadd.f32 0.0, %v2766
      %v2768 = vpop.f32.mrb[0].mxu0
      %2769 = vdwg.mxu0
      %v2770 = vadd.f32 %v2373, %v2708
      %v2771 = vadd.f32 %v2373, %v2711
      %v2772 = vadd.f32 %v2373, %v2716
      %v2773 = vadd.f32 %v2373, %v2719
      %v2774 = vadd.f32 %v2373, %v2724
      %v2775 = vadd.f32 %v2373, %v2727
      %v2776 = vadd.f32 %v2373, %v2732
      %v2777 = vadd.f32 %v2373, %v2735
      %v2778 = vadd.f32 %v2373, %v2740
      %v2779 = vadd.f32 %v2373, %v2743
      %v2780 = vadd.f32 %v2373, %v2748
      %v2781 = vadd.f32 %v2373, %v2751
      %v2782 = vadd.f32 %v2373, %v2756
      %v2783 = vadd.f32 %v2373, %v2759
      %v2784 = vadd.f32 %v2373, %v2764
      %v2785 = vadd.f32 %v2373, %v2767
      %s2786 = scalar_lea.vmem [#allocation2], 12
      %v2787 = vld [vmem:[%s2786] sm:$0xf]
      %v2788 = vld [vmem:[%s2786 + $0x4] sm:$0xf]
      %v2789 = vld [vmem:[%s2786 + $0x8] sm:$0x1]
      %v2790 = vld [vmem:[%s2786 + $0xc] sm:$0xf]
      %v2791 = vld [vmem:[%s2786 + $0x10] sm:$0xf]
      %v2792 = vld [vmem:[%s2786 + $0x14] sm:$0x1]
      %v2793 = vld [vmem:[%s2786 + $0x18] sm:$0xf]
      %v2794 = vld [vmem:[%s2786 + $0x1c] sm:$0xf]
      %v2795 = vld [vmem:[%s2786 + $0x20] sm:$0x1]
      %v2796 = vld [vmem:[%s2786 + $0x24] sm:$0xf]
      %v2797 = vld [vmem:[%s2786 + $0x28] sm:$0xf]
      %v2798 = vld [vmem:[%s2786 + $0x2c] sm:$0x1]
      %v2799 = vld [vmem:[%s2786 + $0x30] sm:$0xf]
      %v2800 = vld [vmem:[%s2786 + $0x34] sm:$0xf]
      %v2801 = vld [vmem:[%s2786 + $0x38] sm:$0x1]
      %v2802 = vld [vmem:[%s2786 + $0x3c] sm:$0xf]
      %v2803 = vld [vmem:[%s2786 + $0x40] sm:$0xf]
      %v2804 = vld [vmem:[%s2786 + $0x44] sm:$0x1]
      %v2805 = vld [vmem:[%s2786 + $0x48] sm:$0xf]
      %v2806 = vld [vmem:[%s2786 + $0x4c] sm:$0xf]
      %v2807 = vld [vmem:[%s2786 + $0x50] sm:$0x1]
      %v2808 = vld [vmem:[%s2786 + $0x54] sm:$0xf]
      %v2809 = vld [vmem:[%s2786 + $0x58] sm:$0xf]
      %v2810 = vld [vmem:[%s2786 + $0x5c] sm:$0x1]
      %v2827 = vunpack.c.l.b16 %v2787
      %v2828 = vunpack.c.l.b16 %v2788
      %v2829 = vunpack.c.l.b16 %v2790
      %v2830 = vunpack.c.l.b16 %v2791
      %v2831 = vunpack.c.l.b16 %v2793
      %v2832 = vunpack.c.l.b16 %v2794
      %v2833 = vunpack.c.l.b16 %v2796
      %v2834 = vunpack.c.l.b16 %v2797
      %v2835 = vunpack.c.l.b16 %v2799
      %v2836 = vunpack.c.l.b16 %v2800
      %v2837 = vunpack.c.l.b16 %v2802
      %v2838 = vunpack.c.l.b16 %v2803
      %v2839 = vunpack.c.l.b16 %v2805
      %v2840 = vunpack.c.l.b16 %v2806
      %v2841 = vunpack.c.l.b16 %v2808
      %v2842 = vunpack.c.l.b16 %v2809
      %v2843 = vpack.c.b16 %v2828, %v2827
      %v2844 = vpack.c.b16 %v2830, %v2829
      %v2845 = vpack.c.b16 %v2832, %v2831
      %v2846 = vpack.c.b16 %v2834, %v2833
      %v2847 = vpack.c.b16 %v2836, %v2835
      %v2848 = vpack.c.b16 %v2838, %v2837
      %v2849 = vpack.c.b16 %v2840, %v2839
      %v2850 = vpack.c.b16 %v2842, %v2841
      %v2859 = vunpack.c.l.b16 %v2789
      %v2860 = vunpack.c.l.b16 %v2792
      %v2861 = vunpack.c.l.b16 %v2795
      %v2862 = vunpack.c.l.b16 %v2798
      %v2863 = vunpack.c.l.b16 %v2801
      %v2864 = vunpack.c.l.b16 %v2804
      %v2865 = vunpack.c.l.b16 %v2807
      %v2866 = vunpack.c.l.b16 %v2810
      %v2867 = vpack.c.b16 %v2859, %v2859
      %v2868 = vpack.c.b16 %v2860, %v2860
      %v2869 = vpack.c.b16 %v2861, %v2861
      %v2870 = vpack.c.b16 %v2862, %v2862
      %v2871 = vpack.c.b16 %v2863, %v2863
      %v2872 = vpack.c.b16 %v2864, %v2864
      %v2873 = vpack.c.b16 %v2865, %v2865
      %v2874 = vpack.c.b16 %v2866, %v2866
      %v2876 = vshrl.u32 %v2843, 16
      %v2878 = vshll.u32 %v2843, 16
      %v2880 = vrot.slane %v2878, 1
      %v2881 = vor.u32 %v2876, %v2880
      %v2883 = vshll.u32 %v2867, 16
      %v2885 = vrot.slane %v2883, 1
      %v2886 = vsel %vm456, %v2881, %v2885
      %v2888 = vshrl.u32 %v2844, 16
      %v2890 = vshll.u32 %v2844, 16
      %v2892 = vrot.slane %v2890, 1
      %v2893 = vor.u32 %v2888, %v2892
      %v2895 = vshll.u32 %v2868, 16
      %v2897 = vrot.slane %v2895, 1
      %v2898 = vsel %vm456, %v2893, %v2897
      %v2900 = vshrl.u32 %v2845, 16
      %v2902 = vshll.u32 %v2845, 16
      %v2904 = vrot.slane %v2902, 1
      %v2905 = vor.u32 %v2900, %v2904
      %v2907 = vshll.u32 %v2869, 16
      %v2909 = vrot.slane %v2907, 1
      %v2910 = vsel %vm456, %v2905, %v2909
      %v2912 = vshrl.u32 %v2846, 16
      %v2914 = vshll.u32 %v2846, 16
      %v2916 = vrot.slane %v2914, 1
      %v2917 = vor.u32 %v2912, %v2916
      %v2919 = vshll.u32 %v2870, 16
      %v2921 = vrot.slane %v2919, 1
      %v2922 = vsel %vm456, %v2917, %v2921
      %v2924 = vshrl.u32 %v2847, 16
      %v2926 = vshll.u32 %v2847, 16
      %v2928 = vrot.slane %v2926, 1
      %v2929 = vor.u32 %v2924, %v2928
      %v2931 = vshll.u32 %v2871, 16
      %v2933 = vrot.slane %v2931, 1
      %v2934 = vsel %vm456, %v2929, %v2933
      %v2936 = vshrl.u32 %v2848, 16
      %v2938 = vshll.u32 %v2848, 16
      %v2940 = vrot.slane %v2938, 1
      %v2941 = vor.u32 %v2936, %v2940
      %v2943 = vshll.u32 %v2872, 16
      %v2945 = vrot.slane %v2943, 1
      %v2946 = vsel %vm456, %v2941, %v2945
      %v2948 = vshrl.u32 %v2849, 16
      %v2950 = vshll.u32 %v2849, 16
      %v2952 = vrot.slane %v2950, 1
      %v2953 = vor.u32 %v2948, %v2952
      %v2955 = vshll.u32 %v2873, 16
      %v2957 = vrot.slane %v2955, 1
      %v2958 = vsel %vm456, %v2953, %v2957
      %v2960 = vshrl.u32 %v2850, 16
      %v2962 = vshll.u32 %v2850, 16
      %v2964 = vrot.slane %v2962, 1
      %v2965 = vor.u32 %v2960, %v2964
      %v2967 = vshll.u32 %v2874, 16
      %v2969 = vrot.slane %v2967, 1
      %v2970 = vsel %vm456, %v2965, %v2969
      %2971 = vrot.lane.b32.xlu0 %v2886, 4
      %v2972 = vpop.permute.xlu0 %2971
      %2973 = vrot.lane.b32.xlu0 %v2898, 4
      %v2974 = vpop.permute.xlu0 %2973
      %2975 = vrot.lane.b32.xlu0 %v2910, 4
      %v2976 = vpop.permute.xlu0 %2975
      %2977 = vrot.lane.b32.xlu0 %v2922, 4
      %v2978 = vpop.permute.xlu0 %2977
      %2979 = vrot.lane.b32.xlu0 %v2934, 4
      %v2980 = vpop.permute.xlu0 %2979
      %2981 = vrot.lane.b32.xlu0 %v2946, 4
      %v2982 = vpop.permute.xlu0 %2981
      %2983 = vrot.lane.b32.xlu0 %v2958, 4
      %v2984 = vpop.permute.xlu0 %2983
      %2985 = vrot.lane.b32.xlu0 %v2970, 4
      %v2986 = vpop.permute.xlu0 %2985
      %v2987 = vrot.slane %v2843, 1
      %v2988 = vrot.slane %v2867, 1
      %v2989 = vsel %vm597, %v2987, %v2988
      %v2990 = vrot.slane %v2844, 1
      %v2991 = vrot.slane %v2868, 1
      %v2992 = vsel %vm597, %v2990, %v2991
      %v2993 = vrot.slane %v2845, 1
      %v2994 = vrot.slane %v2869, 1
      %v2995 = vsel %vm597, %v2993, %v2994
      %v2996 = vrot.slane %v2846, 1
      %v2997 = vrot.slane %v2870, 1
      %v2998 = vsel %vm597, %v2996, %v2997
      %v2999 = vrot.slane %v2847, 1
      %v3000 = vrot.slane %v2871, 1
      %v3001 = vsel %vm597, %v2999, %v3000
      %v3002 = vrot.slane %v2848, 1
      %v3003 = vrot.slane %v2872, 1
      %v3004 = vsel %vm597, %v3002, %v3003
      %v3005 = vrot.slane %v2849, 1
      %v3006 = vrot.slane %v2873, 1
      %v3007 = vsel %vm597, %v3005, %v3006
      %v3008 = vrot.slane %v2850, 1
      %v3009 = vrot.slane %v2874, 1
      %v3010 = vsel %vm597, %v3008, %v3009
      %3011 = vrot.lane.b32.xlu0 %v2989, 8
      %v3012 = vpop.permute.xlu0 %3011
      %3013 = vrot.lane.b32.xlu0 %v2992, 8
      %v3014 = vpop.permute.xlu0 %3013
      %3015 = vrot.lane.b32.xlu0 %v2995, 8
      %v3016 = vpop.permute.xlu0 %3015
      %3017 = vrot.lane.b32.xlu0 %v2998, 8
      %v3018 = vpop.permute.xlu0 %3017
      %3019 = vrot.lane.b32.xlu0 %v3001, 8
      %v3020 = vpop.permute.xlu0 %3019
      %3021 = vrot.lane.b32.xlu0 %v3004, 8
      %v3022 = vpop.permute.xlu0 %3021
      %3023 = vrot.lane.b32.xlu0 %v3007, 8
      %v3024 = vpop.permute.xlu0 %3023
      %3025 = vrot.lane.b32.xlu0 %v3010, 8
      %v3026 = vpop.permute.xlu0 %3025
      %v3028 = vsel %vm648, %v2843, %v2972
      %v3030 = vsel %vm648, %v2844, %v2974
      %v3032 = vsel %vm648, %v2845, %v2976
      %v3034 = vsel %vm648, %v2846, %v2978
      %v3036 = vsel %vm648, %v2847, %v2980
      %v3038 = vsel %vm648, %v2848, %v2982
      %v3040 = vsel %vm648, %v2849, %v2984
      %v3042 = vsel %vm648, %v2850, %v2986
      %v3044 = vsel %vm669, %v3028, %v3012
      %v3046 = vsel %vm669, %v3030, %v3014
      %v3048 = vsel %vm669, %v3032, %v3016
      %v3050 = vsel %vm669, %v3034, %v3018
      %v3052 = vsel %vm669, %v3036, %v3020
      %v3054 = vsel %vm669, %v3038, %v3022
      %v3056 = vsel %vm669, %v3040, %v3024
      %v3058 = vsel %vm669, %v3042, %v3026
      %s3059 = scalar_lea.vmem %s3, 8
      %v3060 = vld [vmem:[%s3059] sm:$0xf]
      %v3061 = vld [vmem:[%s3059 + $0x4] sm:$0x3]
      %v3064 = vunpack.c.l.b16 %v3060
      %v3065 = vunpack.c.l.b16 %v3061
      %v3066 = vpack.c.b16 %v3065, %v3064
      %v3067 = vsel %vm697, %v3044, 0
      %v3069 = vsel %vm697, %v3046, 0
      %v3071 = vsel %vm697, %v3048, 0
      %v3073 = vsel %vm697, %v3050, 0
      %v3075 = vsel %vm697, %v3052, 0
      %v3077 = vsel %vm697, %v3054, 0
      %v3079 = vsel %vm697, %v3056, 0
      %v3081 = vsel %vm697, %v3058, 0
      %v3084 = vsel %vm718, %v3066, 0
      %3086 = vmatprep.subr.bf16.mxu0 0
      %3087 = vmatpush1.bf16.msra.mxu0 %v3084
      %3088 = vmatprep.subr.bf16.mxu0 0
      %3089 = vmatpush1.bf16.msra.mxu0 0
      %3090 = vmatprep.subr.bf16.mxu0 0
      %3091 = vmatpush1.bf16.msra.mxu0 0
      %3092 = vmatprep.subr.bf16.mxu0 0
      %3093 = vmatpush1.bf16.msra.mxu0 0
      %3094 = vmatprep.subr.bf16.mxu0 0
      %3095 = vmatpush1.bf16.msra.mxu0 0
      %3096 = vmatprep.subr.bf16.mxu0 0
      %3097 = vmatpush1.bf16.msra.mxu0 0
      %3098 = vmatprep.subr.bf16.mxu0 0
      %3099 = vmatpush1.bf16.msra.mxu0 0
      %3100 = vmatprep.subr.bf16.mxu0 0
      %3101 = vmatpush1.bf16.msra.mxu0 0
      %3102 = vmatprep.subr.bf16.mxu0 0
      %3103 = vmatpush1.bf16.msra.mxu0 0
      %3104 = vmatprep.subr.bf16.mxu0 0
      %3105 = vmatpush1.bf16.msra.mxu0 0
      %3106 = vmatprep.subr.bf16.mxu0 0
      %3107 = vmatpush1.bf16.msra.mxu0 0
      %3108 = vmatprep.subr.bf16.mxu0 0
      %3109 = vmatpush1.bf16.msra.mxu0 0
      %3110 = vmatprep.subr.bf16.mxu0 0
      %3111 = vmatpush1.bf16.msra.mxu0 0
      %3112 = vmatprep.subr.bf16.mxu0 0
      %3113 = vmatpush1.bf16.msra.mxu0 0
      %3114 = vmatprep.subr.bf16.mxu0 0
      %3115 = vmatpush1.bf16.msra.mxu0 0
      %3116 = vmatprep.subr.bf16.mxu0 0
      %3117 = vmatpush1.bf16.msra.mxu0 0
      %3118 = vmatprep.mubr.bf16.mxu0 0
      %3119 = vmatmul.mubr.bf16.gmra.mrb[0].mxu0 %v3067
      %v3120 = vpop.f32.mrb[0].mxu0
      %v3121 = vadd.f32 0.0, %v3120
      %v3122 = vpop.f32.mrb[0].mxu0
      %v3123 = vpop.f32.mrb[0].mxu0
      %v3124 = vadd.f32 0.0, %v3123
      %v3125 = vpop.f32.mrb[0].mxu0
      %3126 = vmatprep.mubr.bf16.mxu0 0
      %3127 = vmatmul.mubr.bf16.gmra.mrb[0].mxu0 %v3069
      %v3128 = vpop.f32.mrb[0].mxu0
      %v3129 = vadd.f32 0.0, %v3128
      %v3130 = vpop.f32.mrb[0].mxu0
      %v3131 = vpop.f32.mrb[0].mxu0
      %v3132 = vadd.f32 0.0, %v3131
      %v3133 = vpop.f32.mrb[0].mxu0
      %3134 = vmatprep.mubr.bf16.mxu0 0
      %3135 = vmatmul.mubr.bf16.gmra.mrb[0].mxu0 %v3071
      %v3136 = vpop.f32.mrb[0].mxu0
      %v3137 = vadd.f32 0.0, %v3136
      %v3138 = vpop.f32.mrb[0].mxu0
      %v3139 = vpop.f32.mrb[0].mxu0
      %v3140 = vadd.f32 0.0, %v3139
      %v3141 = vpop.f32.mrb[0].mxu0
      %3142 = vmatprep.mubr.bf16.mxu0 0
      %3143 = vmatmul.mubr.bf16.gmra.mrb[0].mxu0 %v3073
      %v3144 = vpop.f32.mrb[0].mxu0
      %v3145 = vadd.f32 0.0, %v3144
      %v3146 = vpop.f32.mrb[0].mxu0
      %v3147 = vpop.f32.mrb[0].mxu0
      %v3148 = vadd.f32 0.0, %v3147
      %v3149 = vpop.f32.mrb[0].mxu0
      %3150 = vmatprep.mubr.bf16.mxu0 0
      %3151 = vmatmul.mubr.bf16.gmra.mrb[0].mxu0 %v3075
      %v3152 = vpop.f32.mrb[0].mxu0
      %v3153 = vadd.f32 0.0, %v3152
      %v3154 = vpop.f32.mrb[0].mxu0
      %v3155 = vpop.f32.mrb[0].mxu0
      %v3156 = vadd.f32 0.0, %v3155
      %v3157 = vpop.f32.mrb[0].mxu0
      %3158 = vmatprep.mubr.bf16.mxu0 0
      %3159 = vmatmul.mubr.bf16.gmra.mrb[0].mxu0 %v3077
      %v3160 = vpop.f32.mrb[0].mxu0
      %v3161 = vadd.f32 0.0, %v3160
      %v3162 = vpop.f32.mrb[0].mxu0
      %v3163 = vpop.f32.mrb[0].mxu0
      %v3164 = vadd.f32 0.0, %v3163
      %v3165 = vpop.f32.mrb[0].mxu0
      %3166 = vmatprep.mubr.bf16.mxu0 0
      %3167 = vmatmul.mubr.bf16.gmra.mrb[0].mxu0 %v3079
      %v3168 = vpop.f32.mrb[0].mxu0
      %v3169 = vadd.f32 0.0, %v3168
      %v3170 = vpop.f32.mrb[0].mxu0
      %v3171 = vpop.f32.mrb[0].mxu0
      %v3172 = vadd.f32 0.0, %v3171
      %v3173 = vpop.f32.mrb[0].mxu0
      %3174 = vmatprep.mubr.bf16.mxu0 0
      %3175 = vmatmul.mubr.bf16.gmra.mrb[0].mxu0 %v3081
      %v3176 = vpop.f32.mrb[0].mxu0
      %v3177 = vadd.f32 0.0, %v3176
      %v3178 = vpop.f32.mrb[0].mxu0
      %v3179 = vpop.f32.mrb[0].mxu0
      %v3180 = vadd.f32 0.0, %v3179
      %v3181 = vpop.f32.mrb[0].mxu0
      %3182 = vdwg.mxu0
      %v3183 = vadd.f32 %v2770, %v3121
      %v3184 = vadd.f32 %v2771, %v3124
      %v3185 = vadd.f32 %v2772, %v3129
      %v3186 = vadd.f32 %v2773, %v3132
      %v3187 = vadd.f32 %v2774, %v3137
      %v3188 = vadd.f32 %v2775, %v3140
      %v3189 = vadd.f32 %v2776, %v3145
      %v3190 = vadd.f32 %v2777, %v3148
      %v3191 = vadd.f32 %v2778, %v3153
      %v3192 = vadd.f32 %v2779, %v3156
      %v3193 = vadd.f32 %v2780, %v3161
      %v3194 = vadd.f32 %v2781, %v3164
      %v3195 = vadd.f32 %v2782, %v3169
      %v3196 = vadd.f32 %v2783, %v3172
      %v3197 = vadd.f32 %v2784, %v3177
      %v3198 = vadd.f32 %v2785, %v3180
      %s3199 = scalar_lea.vmem [#allocation2], 24
      %v3200 = vld [vmem:[%s3199] sm:$0xf]
      %v3201 = vld [vmem:[%s3199 + $0x4] sm:$0xf]
      %v3202 = vld [vmem:[%s3199 + $0x8] sm:$0x1]
      %v3203 = vld [vmem:[%s3199 + $0xc] sm:$0xf]
      %v3204 = vld [vmem:[%s3199 + $0x10] sm:$0xf]
      %v3205 = vld [vmem:[%s3199 + $0x14] sm:$0x1]
      %v3206 = vld [vmem:[%s3199 + $0x18] sm:$0xf]
      %v3207 = vld [vmem:[%s3199 + $0x1c] sm:$0xf]
      %v3208 = vld [vmem:[%s3199 + $0x20] sm:$0x1]
      %v3209 = vld [vmem:[%s3199 + $0x24] sm:$0xf]
      %v3210 = vld [vmem:[%s3199 + $0x28] sm:$0xf]
      %v3211 = vld [vmem:[%s3199 + $0x2c] sm:$0x1]
      %v3212 = vld [vmem:[%s3199 + $0x30] sm:$0xf]
      %v3213 = vld [vmem:[%s3199 + $0x34] sm:$0xf]
      %v3214 = vld [vmem:[%s3199 + $0x38] sm:$0x1]
      %v3215 = vld [vmem:[%s3199 + $0x3c] sm:$0xf]
      %v3216 = vld [vmem:[%s3199 + $0x40] sm:$0xf]
      %v3217 = vld [vmem:[%s3199 + $0x44] sm:$0x1]
      %v3218 = vld [vmem:[%s3199 + $0x48] sm:$0xf]
      %v3219 = vld [vmem:[%s3199 + $0x4c] sm:$0xf]
      %v3220 = vld [vmem:[%s3199 + $0x50] sm:$0x1]
      %v3221 = vld [vmem:[%s3199 + $0x54] sm:$0xf]
      %v3222 = vld [vmem:[%s3199 + $0x58] sm:$0xf]
      %v3223 = vld [vmem:[%s3199 + $0x5c] sm:$0x1]
      %v3240 = vunpack.c.l.b16 %v3200
      %v3241 = vunpack.c.l.b16 %v3201
      %v3242 = vunpack.c.l.b16 %v3203
      %v3243 = vunpack.c.l.b16 %v3204
      %v3244 = vunpack.c.l.b16 %v3206
      %v3245 = vunpack.c.l.b16 %v3207
      %v3246 = vunpack.c.l.b16 %v3209
      %v3247 = vunpack.c.l.b16 %v3210
      %v3248 = vunpack.c.l.b16 %v3212
      %v3249 = vunpack.c.l.b16 %v3213
      %v3250 = vunpack.c.l.b16 %v3215
      %v3251 = vunpack.c.l.b16 %v3216
      %v3252 = vunpack.c.l.b16 %v3218
      %v3253 = vunpack.c.l.b16 %v3219
      %v3254 = vunpack.c.l.b16 %v3221
      %v3255 = vunpack.c.l.b16 %v3222
      %v3256 = vpack.c.b16 %v3241, %v3240
      %v3257 = vpack.c.b16 %v3243, %v3242
      %v3258 = vpack.c.b16 %v3245, %v3244
      %v3259 = vpack.c.b16 %v3247, %v3246
      %v3260 = vpack.c.b16 %v3249, %v3248
      %v3261 = vpack.c.b16 %v3251, %v3250
      %v3262 = vpack.c.b16 %v3253, %v3252
      %v3263 = vpack.c.b16 %v3255, %v3254
      %v3272 = vunpack.c.l.b16 %v3202
      %v3273 = vunpack.c.l.b16 %v3205
      %v3274 = vunpack.c.l.b16 %v3208
      %v3275 = vunpack.c.l.b16 %v3211
      %v3276 = vunpack.c.l.b16 %v3214
      %v3277 = vunpack.c.l.b16 %v3217
      %v3278 = vunpack.c.l.b16 %v3220
      %v3279 = vunpack.c.l.b16 %v3223
      %v3280 = vpack.c.b16 %v3272, %v3272
      %v3281 = vpack.c.b16 %v3273, %v3273
      %v3282 = vpack.c.b16 %v3274, %v3274
      %v3283 = vpack.c.b16 %v3275, %v3275
      %v3284 = vpack.c.b16 %v3276, %v3276
      %v3285 = vpack.c.b16 %v3277, %v3277
      %v3286 = vpack.c.b16 %v3278, %v3278
      %v3287 = vpack.c.b16 %v3279, %v3279
      %v3289 = vshrl.u32 %v3256, 16
      %v3291 = vshll.u32 %v3256, 16
      %v3293 = vrot.slane %v3291, 1
      %v3294 = vor.u32 %v3289, %v3293
      %v3296 = vshll.u32 %v3280, 16
      %v3298 = vrot.slane %v3296, 1
      %v3299 = vsel %vm456, %v3294, %v3298
      %v3301 = vshrl.u32 %v3257, 16
      %v3303 = vshll.u32 %v3257, 16
      %v3305 = vrot.slane %v3303, 1
      %v3306 = vor.u32 %v3301, %v3305
      %v3308 = vshll.u32 %v3281, 16
      %v3310 = vrot.slane %v3308, 1
      %v3311 = vsel %vm456, %v3306, %v3310
      %v3313 = vshrl.u32 %v3258, 16
      %v3315 = vshll.u32 %v3258, 16
      %v3317 = vrot.slane %v3315, 1
      %v3318 = vor.u32 %v3313, %v3317
      %v3320 = vshll.u32 %v3282, 16
      %v3322 = vrot.slane %v3320, 1
      %v3323 = vsel %vm456, %v3318, %v3322
      %v3325 = vshrl.u32 %v3259, 16
      %v3327 = vshll.u32 %v3259, 16
      %v3329 = vrot.slane %v3327, 1
      %v3330 = vor.u32 %v3325, %v3329
      %v3332 = vshll.u32 %v3283, 16
      %v3334 = vrot.slane %v3332, 1
      %v3335 = vsel %vm456, %v3330, %v3334
      %v3337 = vshrl.u32 %v3260, 16
      %v3339 = vshll.u32 %v3260, 16
      %v3341 = vrot.slane %v3339, 1
      %v3342 = vor.u32 %v3337, %v3341
      %v3344 = vshll.u32 %v3284, 16
      %v3346 = vrot.slane %v3344, 1
      %v3347 = vsel %vm456, %v3342, %v3346
      %v3349 = vshrl.u32 %v3261, 16
      %v3351 = vshll.u32 %v3261, 16
      %v3353 = vrot.slane %v3351, 1
      %v3354 = vor.u32 %v3349, %v3353
      %v3356 = vshll.u32 %v3285, 16
      %v3358 = vrot.slane %v3356, 1
      %v3359 = vsel %vm456, %v3354, %v3358
      %v3361 = vshrl.u32 %v3262, 16
      %v3363 = vshll.u32 %v3262, 16
      %v3365 = vrot.slane %v3363, 1
      %v3366 = vor.u32 %v3361, %v3365
      %v3368 = vshll.u32 %v3286, 16
      %v3370 = vrot.slane %v3368, 1
      %v3371 = vsel %vm456, %v3366, %v3370
      %v3373 = vshrl.u32 %v3263, 16
      %v3375 = vshll.u32 %v3263, 16
      %v3377 = vrot.slane %v3375, 1
      %v3378 = vor.u32 %v3373, %v3377
      %v3380 = vshll.u32 %v3287, 16
      %v3382 = vrot.slane %v3380, 1
      %v3383 = vsel %vm456, %v3378, %v3382
      %3384 = vrot.lane.b32.xlu0 %v3299, 4
      %v3385 = vpop.permute.xlu0 %3384
      %3386 = vrot.lane.b32.xlu0 %v3311, 4
      %v3387 = vpop.permute.xlu0 %3386
      %3388 = vrot.lane.b32.xlu0 %v3323, 4
      %v3389 = vpop.permute.xlu0 %3388
      %3390 = vrot.lane.b32.xlu0 %v3335, 4
      %v3391 = vpop.permute.xlu0 %3390
      %3392 = vrot.lane.b32.xlu0 %v3347, 4
      %v3393 = vpop.permute.xlu0 %3392
      %3394 = vrot.lane.b32.xlu0 %v3359, 4
      %v3395 = vpop.permute.xlu0 %3394
      %3396 = vrot.lane.b32.xlu0 %v3371, 4
      %v3397 = vpop.permute.xlu0 %3396
      %3398 = vrot.lane.b32.xlu0 %v3383, 4
      %v3399 = vpop.permute.xlu0 %3398
      %v3400 = vrot.slane %v3256, 1
      %v3401 = vrot.slane %v3280, 1
      %v3402 = vsel %vm597, %v3400, %v3401
      %v3403 = vrot.slane %v3257, 1
      %v3404 = vrot.slane %v3281, 1
      %v3405 = vsel %vm597, %v3403, %v3404
      %v3406 = vrot.slane %v3258, 1
      %v3407 = vrot.slane %v3282, 1
      %v3408 = vsel %vm597, %v3406, %v3407
      %v3409 = vrot.slane %v3259, 1
      %v3410 = vrot.slane %v3283, 1
      %v3411 = vsel %vm597, %v3409, %v3410
      %v3412 = vrot.slane %v3260, 1
      %v3413 = vrot.slane %v3284, 1
      %v3414 = vsel %vm597, %v3412, %v3413
      %v3415 = vrot.slane %v3261, 1
      %v3416 = vrot.slane %v3285, 1
      %v3417 = vsel %vm597, %v3415, %v3416
      %v3418 = vrot.slane %v3262, 1
      %v3419 = vrot.slane %v3286, 1
      %v3420 = vsel %vm597, %v3418, %v3419
      %v3421 = vrot.slane %v3263, 1
      %v3422 = vrot.slane %v3287, 1
      %v3423 = vsel %vm597, %v3421, %v3422
      %3424 = vrot.lane.b32.xlu0 %v3402, 8
      %v3425 = vpop.permute.xlu0 %3424
      %3426 = vrot.lane.b32.xlu0 %v3405, 8
      %v3427 = vpop.permute.xlu0 %3426
      %3428 = vrot.lane.b32.xlu0 %v3408, 8
      %v3429 = vpop.permute.xlu0 %3428
      %3430 = vrot.lane.b32.xlu0 %v3411, 8
      %v3431 = vpop.permute.xlu0 %3430
      %3432 = vrot.lane.b32.xlu0 %v3414, 8
      %v3433 = vpop.permute.xlu0 %3432
      %3434 = vrot.lane.b32.xlu0 %v3417, 8
      %v3435 = vpop.permute.xlu0 %3434
      %3436 = vrot.lane.b32.xlu0 %v3420, 8
      %v3437 = vpop.permute.xlu0 %3436
      %3438 = vrot.lane.b32.xlu0 %v3423, 8
      %v3439 = vpop.permute.xlu0 %3438
      %v3441 = vsel %vm648, %v3256, %v3385
      %v3443 = vsel %vm648, %v3257, %v3387
      %v3445 = vsel %vm648, %v3258, %v3389
      %v3447 = vsel %vm648, %v3259, %v3391
      %v3449 = vsel %vm648, %v3260, %v3393
      %v3451 = vsel %vm648, %v3261, %v3395
      %v3453 = vsel %vm648, %v3262, %v3397
      %v3455 = vsel %vm648, %v3263, %v3399
      %v3457 = vsel %vm669, %v3441, %v3425
      %v3459 = vsel %vm669, %v3443, %v3427
      %v3461 = vsel %vm669, %v3445, %v3429
      %v3463 = vsel %vm669, %v3447, %v3431
      %v3465 = vsel %vm669, %v3449, %v3433
      %v3467 = vsel %vm669, %v3451, %v3435
      %v3469 = vsel %vm669, %v3453, %v3437
      %v3471 = vsel %vm669, %v3455, %v3439
      %s3472 = scalar_lea.vmem %s3, 16
      %v3473 = vld [vmem:[%s3472] sm:$0xf]
      %v3474 = vld [vmem:[%s3472 + $0x4] sm:$0x3]
      %v3477 = vunpack.c.l.b16 %v3473
      %v3478 = vunpack.c.l.b16 %v3474
      %v3479 = vpack.c.b16 %v3478, %v3477
      %v3480 = vsel %vm697, %v3457, 0
      %v3482 = vsel %vm697, %v3459, 0
      %v3484 = vsel %vm697, %v3461, 0
      %v3486 = vsel %vm697, %v3463, 0
      %v3488 = vsel %vm697, %v3465, 0
      %v3490 = vsel %vm697, %v3467, 0
      %v3492 = vsel %vm697, %v3469, 0
      %v3494 = vsel %vm697, %v3471, 0
      %v3497 = vsel %vm718, %v3479, 0
      %3499 = vmatprep.subr.bf16.mxu0 0
      %3500 = vmatpush1.bf16.msra.mxu0 %v3497
      %3501 = vmatprep.subr.bf16.mxu0 0
      %3502 = vmatpush1.bf16.msra.mxu0 0
      %3503 = vmatprep.subr.bf16.mxu0 0
      %3504 = vmatpush1.bf16.msra.mxu0 0
      %3505 = vmatprep.subr.bf16.mxu0 0
      %3506 = vmatpush1.bf16.msra.mxu0 0
      %3507 = vmatprep.subr.bf16.mxu0 0
      %3508 = vmatpush1.bf16.msra.mxu0 0
      %3509 = vmatprep.subr.bf16.mxu0 0
      %3510 = vmatpush1.bf16.msra.mxu0 0
      %3511 = vmatprep.subr.bf16.mxu0 0
      %3512 = vmatpush1.bf16.msra.mxu0 0
      %3513 = vmatprep.subr.bf16.mxu0 0
      %3514 = vmatpush1.bf16.msra.mxu0 0
      %3515 = vmatprep.subr.bf16.mxu0 0
      %3516 = vmatpush1.bf16.msra.mxu0 0
      %3517 = vmatprep.subr.bf16.mxu0 0
      %3518 = vmatpush1.bf16.msra.mxu0 0
      %3519 = vmatprep.subr.bf16.mxu0 0
      %3520 = vmatpush1.bf16.msra.mxu0 0
      %3521 = vmatprep.subr.bf16.mxu0 0
      %3522 = vmatpush1.bf16.msra.mxu0 0
      %3523 = vmatprep.subr.bf16.mxu0 0
      %3524 = vmatpush1.bf16.msra.mxu0 0
      %3525 = vmatprep.subr.bf16.mxu0 0
      %3526 = vmatpush1.bf16.msra.mxu0 0
      %3527 = vmatprep.subr.bf16.mxu0 0
      %3528 = vmatpush1.bf16.msra.mxu0 0
      %3529 = vmatprep.subr.bf16.mxu0 0
      %3530 = vmatpush1.bf16.msra.mxu0 0
      %3531 = vmatprep.mubr.bf16.mxu0 0
      %3532 = vmatmul.mubr.bf16.gmra.mrb[0].mxu0 %v3480
      %v3533 = vpop.f32.mrb[0].mxu0
      %v3534 = vadd.f32 0.0, %v3533
      %v3535 = vpop.f32.mrb[0].mxu0
      %v3536 = vpop.f32.mrb[0].mxu0
      %v3537 = vadd.f32 0.0, %v3536
      %v3538 = vpop.f32.mrb[0].mxu0
      %3539 = vmatprep.mubr.bf16.mxu0 0
      %3540 = vmatmul.mubr.bf16.gmra.mrb[0].mxu0 %v3482
      %v3541 = vpop.f32.mrb[0].mxu0
      %v3542 = vadd.f32 0.0, %v3541
      %v3543 = vpop.f32.mrb[0].mxu0
      %v3544 = vpop.f32.mrb[0].mxu0
      %v3545 = vadd.f32 0.0, %v3544
      %v3546 = vpop.f32.mrb[0].mxu0
      %3547 = vmatprep.mubr.bf16.mxu0 0
      %3548 = vmatmul.mubr.bf16.gmra.mrb[0].mxu0 %v3484
      %v3549 = vpop.f32.mrb[0].mxu0
      %v3550 = vadd.f32 0.0, %v3549
      %v3551 = vpop.f32.mrb[0].mxu0
      %v3552 = vpop.f32.mrb[0].mxu0
      %v3553 = vadd.f32 0.0, %v3552
      %v3554 = vpop.f32.mrb[0].mxu0
      %3555 = vmatprep.mubr.bf16.mxu0 0
      %3556 = vmatmul.mubr.bf16.gmra.mrb[0].mxu0 %v3486
      %v3557 = vpop.f32.mrb[0].mxu0
      %v3558 = vadd.f32 0.0, %v3557
      %v3559 = vpop.f32.mrb[0].mxu0
      %v3560 = vpop.f32.mrb[0].mxu0
      %v3561 = vadd.f32 0.0, %v3560
      %v3562 = vpop.f32.mrb[0].mxu0
      %3563 = vmatprep.mubr.bf16.mxu0 0
      %3564 = vmatmul.mubr.bf16.gmra.mrb[0].mxu0 %v3488
      %v3565 = vpop.f32.mrb[0].mxu0
      %v3566 = vadd.f32 0.0, %v3565
      %v3567 = vpop.f32.mrb[0].mxu0
      %v3568 = vpop.f32.mrb[0].mxu0
      %v3569 = vadd.f32 0.0, %v3568
      %v3570 = vpop.f32.mrb[0].mxu0
      %3571 = vmatprep.mubr.bf16.mxu0 0
      %3572 = vmatmul.mubr.bf16.gmra.mrb[0].mxu0 %v3490
      %v3573 = vpop.f32.mrb[0].mxu0
      %v3574 = vadd.f32 0.0, %v3573
      %v3575 = vpop.f32.mrb[0].mxu0
      %v3576 = vpop.f32.mrb[0].mxu0
      %v3577 = vadd.f32 0.0, %v3576
      %v3578 = vpop.f32.mrb[0].mxu0
      %3579 = vmatprep.mubr.bf16.mxu0 0
      %3580 = vmatmul.mubr.bf16.gmra.mrb[0].mxu0 %v3492
      %v3581 = vpop.f32.mrb[0].mxu0
      %v3582 = vadd.f32 0.0, %v3581
      %v3583 = vpop.f32.mrb[0].mxu0
      %v3584 = vpop.f32.mrb[0].mxu0
      %v3585 = vadd.f32 0.0, %v3584
      %v3586 = vpop.f32.mrb[0].mxu0
      %3587 = vmatprep.mubr.bf16.mxu0 0
      %3588 = vmatmul.mubr.bf16.gmra.mrb[0].mxu0 %v3494
      %v3589 = vpop.f32.mrb[0].mxu0
      %v3590 = vadd.f32 0.0, %v3589
      %v3591 = vpop.f32.mrb[0].mxu0
      %v3592 = vpop.f32.mrb[0].mxu0
      %v3593 = vadd.f32 0.0, %v3592
      %v3594 = vpop.f32.mrb[0].mxu0
      %3595 = vdwg.mxu0
      %v3596 = vadd.f32 %v3183, %v3534
      %v3597 = vadd.f32 %v3184, %v3537
      %v3598 = vadd.f32 %v3185, %v3542
      %v3599 = vadd.f32 %v3186, %v3545
      %v3600 = vadd.f32 %v3187, %v3550
      %v3601 = vadd.f32 %v3188, %v3553
      %v3602 = vadd.f32 %v3189, %v3558
      %v3603 = vadd.f32 %v3190, %v3561
      %v3604 = vadd.f32 %v3191, %v3566
      %v3605 = vadd.f32 %v3192, %v3569
      %v3606 = vadd.f32 %v3193, %v3574
      %v3607 = vadd.f32 %v3194, %v3577
      %v3608 = vadd.f32 %v3195, %v3582
      %v3609 = vadd.f32 %v3196, %v3585
      %v3610 = vadd.f32 %v3197, %v3590
      %v3611 = vadd.f32 %v3198, %v3593
      %v3612 = vld [vmem:[%s1396] sm:$0xf]
      %v3613 = vld [vmem:[%s1396 + $0x4] sm:$0xf]
      %v3614 = vld [vmem:[%s1396 + $0x8] sm:$0x1]
      %v3615 = vld [vmem:[%s1396 + $0xc] sm:$0xf]
      %v3616 = vld [vmem:[%s1396 + $0x10] sm:$0xf]
      %v3617 = vld [vmem:[%s1396 + $0x14] sm:$0x1]
      %v3618 = vld [vmem:[%s1396 + $0x18] sm:$0xf]
      %v3619 = vld [vmem:[%s1396 + $0x1c] sm:$0xf]
      %v3620 = vld [vmem:[%s1396 + $0x20] sm:$0x1]
      %v3621 = vld [vmem:[%s1396 + $0x24] sm:$0xf]
      %v3622 = vld [vmem:[%s1396 + $0x28] sm:$0xf]
      %v3623 = vld [vmem:[%s1396 + $0x2c] sm:$0x1]
      %v3624 = vld [vmem:[%s1396 + $0x30] sm:$0xf]
      %v3625 = vld [vmem:[%s1396 + $0x34] sm:$0xf]
      %v3626 = vld [vmem:[%s1396 + $0x38] sm:$0x1]
      %v3627 = vld [vmem:[%s1396 + $0x3c] sm:$0xf]
      %v3628 = vld [vmem:[%s1396 + $0x40] sm:$0xf]
      %v3629 = vld [vmem:[%s1396 + $0x44] sm:$0x1]
      %v3630 = vld [vmem:[%s1396 + $0x48] sm:$0xf]
      %v3631 = vld [vmem:[%s1396 + $0x4c] sm:$0xf]
      %v3632 = vld [vmem:[%s1396 + $0x50] sm:$0x1]
      %v3633 = vld [vmem:[%s1396 + $0x54] sm:$0xf]
      %v3634 = vld [vmem:[%s1396 + $0x58] sm:$0xf]
      %v3635 = vld [vmem:[%s1396 + $0x5c] sm:$0x1]
      %vm3636 = vsmask.f32 3328
      %vm3637 = vsmask.f32 7440
      %vm3638 = vmor %vm3636, %vm3637
      %v3640 = vshrl.u32 %v3612, 16
      %v3642 = vrot.slane %v3640, 4
      %v3643 = vshll.u32 %v3612, 16
      %v3645 = vrot.slane %v3643, 5
      %v3646 = vor.u32 %v3642, %v3645
      %v3647 = vrot.slane %v3646, 4
      %v3649 = vshll.u32 %v3613, 16
      %v3651 = vrot.slane %v3649, 5
      %v3652 = vsel %vm3638, %v3647, %v3651
      %v3653 = vshrl.u32 %v3613, 16
      %v3655 = vrot.slane %v3653, 4
      %v3656 = vor.u32 %v3655, %v3651
      %v3657 = vrot.slane %v3656, 4
      %v3659 = vshll.u32 %v3614, 16
      %v3661 = vrot.slane %v3659, 5
      %v3662 = vsel %vm3638, %v3657, %v3661
      %v3664 = vshrl.u32 %v3615, 16
      %v3666 = vrot.slane %v3664, 4
      %v3667 = vshll.u32 %v3615, 16
      %v3669 = vrot.slane %v3667, 5
      %v3670 = vor.u32 %v3666, %v3669
      %v3671 = vrot.slane %v3670, 4
      %v3673 = vshll.u32 %v3616, 16
      %v3675 = vrot.slane %v3673, 5
      %v3676 = vsel %vm3638, %v3671, %v3675
      %v3677 = vshrl.u32 %v3616, 16
      %v3679 = vrot.slane %v3677, 4
      %v3680 = vor.u32 %v3679, %v3675
      %v3681 = vrot.slane %v3680, 4
      %v3683 = vshll.u32 %v3617, 16
      %v3685 = vrot.slane %v3683, 5
      %v3686 = vsel %vm3638, %v3681, %v3685
      %v3688 = vshrl.u32 %v3618, 16
      %v3690 = vrot.slane %v3688, 4
      %v3691 = vshll.u32 %v3618, 16
      %v3693 = vrot.slane %v3691, 5
      %v3694 = vor.u32 %v3690, %v3693
      %v3695 = vrot.slane %v3694, 4
      %v3697 = vshll.u32 %v3619, 16
      %v3699 = vrot.slane %v3697, 5
      %v3700 = vsel %vm3638, %v3695, %v3699
      %v3701 = vshrl.u32 %v3619, 16
      %v3703 = vrot.slane %v3701, 4
      %v3704 = vor.u32 %v3703, %v3699
      %v3705 = vrot.slane %v3704, 4
      %v3707 = vshll.u32 %v3620, 16
      %v3709 = vrot.slane %v3707, 5
      %v3710 = vsel %vm3638, %v3705, %v3709
      %v3712 = vshrl.u32 %v3621, 16
      %v3714 = vrot.slane %v3712, 4
      %v3715 = vshll.u32 %v3621, 16
      %v3717 = vrot.slane %v3715, 5
      %v3718 = vor.u32 %v3714, %v3717
      %v3719 = vrot.slane %v3718, 4
      %v3721 = vshll.u32 %v3622, 16
      %v3723 = vrot.slane %v3721, 5
      %v3724 = vsel %vm3638, %v3719, %v3723
      %v3725 = vshrl.u32 %v3622, 16
      %v3727 = vrot.slane %v3725, 4
      %v3728 = vor.u32 %v3727, %v3723
      %v3729 = vrot.slane %v3728, 4
      %v3731 = vshll.u32 %v3623, 16
      %v3733 = vrot.slane %v3731, 5
      %v3734 = vsel %vm3638, %v3729, %v3733
      %v3736 = vshrl.u32 %v3624, 16
      %v3738 = vrot.slane %v3736, 4
      %v3739 = vshll.u32 %v3624, 16
      %v3741 = vrot.slane %v3739, 5
      %v3742 = vor.u32 %v3738, %v3741
      %v3743 = vrot.slane %v3742, 4
      %v3745 = vshll.u32 %v3625, 16
      %v3747 = vrot.slane %v3745, 5
      %v3748 = vsel %vm3638, %v3743, %v3747
      %v3749 = vshrl.u32 %v3625, 16
      %v3751 = vrot.slane %v3749, 4
      %v3752 = vor.u32 %v3751, %v3747
      %v3753 = vrot.slane %v3752, 4
      %v3755 = vshll.u32 %v3626, 16
      %v3757 = vrot.slane %v3755, 5
      %v3758 = vsel %vm3638, %v3753, %v3757
      %v3760 = vshrl.u32 %v3627, 16
      %v3762 = vrot.slane %v3760, 4
      %v3763 = vshll.u32 %v3627, 16
      %v3765 = vrot.slane %v3763, 5
      %v3766 = vor.u32 %v3762, %v3765
      %v3767 = vrot.slane %v3766, 4
      %v3769 = vshll.u32 %v3628, 16
      %v3771 = vrot.slane %v3769, 5
      %v3772 = vsel %vm3638, %v3767, %v3771
      %v3773 = vshrl.u32 %v3628, 16
      %v3775 = vrot.slane %v3773, 4
      %v3776 = vor.u32 %v3775, %v3771
      %v3777 = vrot.slane %v3776, 4
      %v3779 = vshll.u32 %v3629, 16
      %v3781 = vrot.slane %v3779, 5
      %v3782 = vsel %vm3638, %v3777, %v3781
      %v3784 = vshrl.u32 %v3630, 16
      %v3786 = vrot.slane %v3784, 4
      %v3787 = vshll.u32 %v3630, 16
      %v3789 = vrot.slane %v3787, 5
      %v3790 = vor.u32 %v3786, %v3789
      %v3791 = vrot.slane %v3790, 4
      %v3793 = vshll.u32 %v3631, 16
      %v3795 = vrot.slane %v3793, 5
      %v3796 = vsel %vm3638, %v3791, %v3795
      %v3797 = vshrl.u32 %v3631, 16
      %v3799 = vrot.slane %v3797, 4
      %v3800 = vor.u32 %v3799, %v3795
      %v3801 = vrot.slane %v3800, 4
      %v3803 = vshll.u32 %v3632, 16
      %v3805 = vrot.slane %v3803, 5
      %v3806 = vsel %vm3638, %v3801, %v3805
      %v3808 = vshrl.u32 %v3633, 16
      %v3810 = vrot.slane %v3808, 4
      %v3811 = vshll.u32 %v3633, 16
      %v3813 = vrot.slane %v3811, 5
      %v3814 = vor.u32 %v3810, %v3813
      %v3815 = vrot.slane %v3814, 4
      %v3817 = vshll.u32 %v3634, 16
      %v3819 = vrot.slane %v3817, 5
      %v3820 = vsel %vm3638, %v3815, %v3819
      %v3821 = vshrl.u32 %v3634, 16
      %v3823 = vrot.slane %v3821, 4
      %v3824 = vor.u32 %v3823, %v3819
      %v3825 = vrot.slane %v3824, 4
      %v3827 = vshll.u32 %v3635, 16
      %v3829 = vrot.slane %v3827, 5
      %v3830 = vsel %vm3638, %v3825, %v3829
      %v3831 = vld [vmem:[%s5] sm:$0x3]
      %v3832 = vld [vmem:[%s6] sm:$0x1]
      %v3834 = vlaneseq
      %v3835 = vshrl.u32 %v3834, 7
      %v3836 = vsub.s32 0, %v3835
      %v3837 = vrot.slane %v3832, %v3836
      %v3839 = vunpack.c.l.b16 %v3652
      %v3840 = vunpack.c.l.b16 %v3662
      %v3841 = vunpack.c.l.b16 %v3676
      %v3842 = vunpack.c.l.b16 %v3686
      %v3843 = vunpack.c.l.b16 %v3700
      %v3844 = vunpack.c.l.b16 %v3710
      %v3845 = vunpack.c.l.b16 %v3724
      %v3846 = vunpack.c.l.b16 %v3734
      %v3847 = vunpack.c.l.b16 %v3748
      %v3848 = vunpack.c.l.b16 %v3758
      %v3849 = vunpack.c.l.b16 %v3772
      %v3850 = vunpack.c.l.b16 %v3782
      %v3851 = vunpack.c.l.b16 %v3796
      %v3852 = vunpack.c.l.b16 %v3806
      %v3853 = vunpack.c.l.b16 %v3820
      %v3854 = vunpack.c.l.b16 %v3830
      %v3855 = vpack.c.b16 %v3840, %v3839
      %v3856 = vpack.c.b16 %v3842, %v3841
      %v3857 = vpack.c.b16 %v3844, %v3843
      %v3858 = vpack.c.b16 %v3846, %v3845
      %v3859 = vpack.c.b16 %v3848, %v3847
      %v3860 = vpack.c.b16 %v3850, %v3849
      %v3861 = vpack.c.b16 %v3852, %v3851
      %v3862 = vpack.c.b16 %v3854, %v3853
      %v3864 = vsel %vm648, %v3855, 0
      %v3867 = vsel %vm648, %v3856, 0
      %v3870 = vsel %vm648, %v3857, 0
      %v3873 = vsel %vm648, %v3858, 0
      %v3876 = vsel %vm648, %v3859, 0
      %v3879 = vsel %vm648, %v3860, 0
      %v3882 = vsel %vm648, %v3861, 0
      %v3885 = vsel %vm648, %v3862, 0
      %vm3887 = vcmask 1041408
      %v3889 = vsel %vm3887, %v3831, 0
      %3891 = vmatprep.subr.bf16.mxu0 0
      %3892 = vmatpush1.bf16.msra.mxu0 %v3889
      %3893 = vmatprep.subr.bf16.mxu0 0
      %3894 = vmatpush1.bf16.msra.mxu0 0
      %3895 = vmatprep.subr.bf16.mxu0 0
      %3896 = vmatpush1.bf16.msra.mxu0 0
      %3897 = vmatprep.subr.bf16.mxu0 0
      %3898 = vmatpush1.bf16.msra.mxu0 0
      %3899 = vmatprep.subr.bf16.mxu0 0
      %3900 = vmatpush1.bf16.msra.mxu0 0
      %3901 = vmatprep.subr.bf16.mxu0 0
      %3902 = vmatpush1.bf16.msra.mxu0 0
      %3903 = vmatprep.subr.bf16.mxu0 0
      %3904 = vmatpush1.bf16.msra.mxu0 0
      %3905 = vmatprep.subr.bf16.mxu0 0
      %3906 = vmatpush1.bf16.msra.mxu0 0
      %3907 = vmatprep.subr.bf16.mxu0 0
      %3908 = vmatpush1.bf16.msra.mxu0 0
      %3909 = vmatprep.subr.bf16.mxu0 0
      %3910 = vmatpush1.bf16.msra.mxu0 0
      %3911 = vmatprep.subr.bf16.mxu0 0
      %3912 = vmatpush1.bf16.msra.mxu0 0
      %3913 = vmatprep.subr.bf16.mxu0 0
      %3914 = vmatpush1.bf16.msra.mxu0 0
      %3915 = vmatprep.subr.bf16.mxu0 0
      %3916 = vmatpush1.bf16.msra.mxu0 0
      %3917 = vmatprep.subr.bf16.mxu0 0
      %3918 = vmatpush1.bf16.msra.mxu0 0
      %3919 = vmatprep.subr.bf16.mxu0 0
      %3920 = vmatpush1.bf16.msra.mxu0 0
      %3921 = vmatprep.subr.bf16.mxu0 0
      %3922 = vmatpush1.bf16.msra.mxu0 0
      %3923 = vmatprep.mubr.bf16.mxu0 0
      %3924 = vmatmul.mubr.bf16.gmra.mrb[0].mxu0 %v3864
      %v3925 = vpop.f32.mrb[0].mxu0
      %v3926 = vadd.f32 %v3837, %v3925
      %v3927 = vpop.f32.mrb[0].mxu0
      %v3928 = vpop.f32.mrb[0].mxu0
      %v3929 = vadd.f32 %v3837, %v3928
      %v3930 = vpop.f32.mrb[0].mxu0
      %3931 = vmatprep.mubr.bf16.mxu0 0
      %3932 = vmatmul.mubr.bf16.gmra.mrb[0].mxu0 %v3867
      %v3933 = vpop.f32.mrb[0].mxu0
      %v3934 = vadd.f32 %v3837, %v3933
      %v3935 = vpop.f32.mrb[0].mxu0
      %v3936 = vpop.f32.mrb[0].mxu0
      %v3937 = vadd.f32 %v3837, %v3936
      %v3938 = vpop.f32.mrb[0].mxu0
      %3939 = vmatprep.mubr.bf16.mxu0 0
      %3940 = vmatmul.mubr.bf16.gmra.mrb[0].mxu0 %v3870
      %v3941 = vpop.f32.mrb[0].mxu0
      %v3942 = vadd.f32 %v3837, %v3941
      %v3943 = vpop.f32.mrb[0].mxu0
      %v3944 = vpop.f32.mrb[0].mxu0
      %v3945 = vadd.f32 %v3837, %v3944
      %v3946 = vpop.f32.mrb[0].mxu0
      %3947 = vmatprep.mubr.bf16.mxu0 0
      %3948 = vmatmul.mubr.bf16.gmra.mrb[0].mxu0 %v3873
      %v3949 = vpop.f32.mrb[0].mxu0
      %v3950 = vadd.f32 %v3837, %v3949
      %v3951 = vpop.f32.mrb[0].mxu0
      %v3952 = vpop.f32.mrb[0].mxu0
      %v3953 = vadd.f32 %v3837, %v3952
      %v3954 = vpop.f32.mrb[0].mxu0
      %3955 = vmatprep.mubr.bf16.mxu0 0
      %3956 = vmatmul.mubr.bf16.gmra.mrb[0].mxu0 %v3876
      %v3957 = vpop.f32.mrb[0].mxu0
      %v3958 = vadd.f32 %v3837, %v3957
      %v3959 = vpop.f32.mrb[0].mxu0
      %v3960 = vpop.f32.mrb[0].mxu0
      %v3961 = vadd.f32 %v3837, %v3960
      %v3962 = vpop.f32.mrb[0].mxu0
      %3963 = vmatprep.mubr.bf16.mxu0 0
      %3964 = vmatmul.mubr.bf16.gmra.mrb[0].mxu0 %v3879
      %v3965 = vpop.f32.mrb[0].mxu0
      %v3966 = vadd.f32 %v3837, %v3965
      %v3967 = vpop.f32.mrb[0].mxu0
      %v3968 = vpop.f32.mrb[0].mxu0
      %v3969 = vadd.f32 %v3837, %v3968
      %v3970 = vpop.f32.mrb[0].mxu0
      %3971 = vmatprep.mubr.bf16.mxu0 0
      %3972 = vmatmul.mubr.bf16.gmra.mrb[0].mxu0 %v3882
      %v3973 = vpop.f32.mrb[0].mxu0
      %v3974 = vadd.f32 %v3837, %v3973
      %v3975 = vpop.f32.mrb[0].mxu0
      %v3976 = vpop.f32.mrb[0].mxu0
      %v3977 = vadd.f32 %v3837, %v3976
      %v3978 = vpop.f32.mrb[0].mxu0
      %3979 = vmatprep.mubr.bf16.mxu0 0
      %3980 = vmatmul.mubr.bf16.gmra.mrb[0].mxu0 %v3885
      %v3981 = vpop.f32.mrb[0].mxu0
      %v3982 = vadd.f32 %v3837, %v3981
      %v3983 = vpop.f32.mrb[0].mxu0
      %v3984 = vpop.f32.mrb[0].mxu0
      %v3985 = vadd.f32 %v3837, %v3984
      %v3986 = vpop.f32.mrb[0].mxu0
      %3987 = vdwg.mxu0
      %v3988 = vadd.f32 %v3926, %v3596
      %v3989 = vadd.f32 %v3929, %v3597
      %v3990 = vadd.f32 %v3934, %v3598
      %v3991 = vadd.f32 %v3937, %v3599
      %v3992 = vadd.f32 %v3942, %v3600
      %v3993 = vadd.f32 %v3945, %v3601
      %v3994 = vadd.f32 %v3950, %v3602
      %v3995 = vadd.f32 %v3953, %v3603
      %v3996 = vadd.f32 %v3958, %v3604
      %v3997 = vadd.f32 %v3961, %v3605
      %v3998 = vadd.f32 %v3966, %v3606
      %v3999 = vadd.f32 %v3969, %v3607
      %v4000 = vadd.f32 %v3974, %v3608
      %v4001 = vadd.f32 %v3977, %v3609
      %v4002 = vadd.f32 %v3982, %v3610
      %v4003 = vadd.f32 %v3985, %v3611
      %4004 = vst.msk [vmem:[%s302] sm:$0xff] %vm669, %v3988
      %4005 = vst.msk [vmem:[%s302 + $0x8] sm:$0xff] %vm669, %v3989
      %4006 = vst.msk [vmem:[%s302 + $0x10] sm:$0xff] %vm669, %v3990
      %4007 = vst.msk [vmem:[%s302 + $0x18] sm:$0xff] %vm669, %v3991
      %4008 = vst.msk [vmem:[%s302 + $0x20] sm:$0xff] %vm669, %v3992
      %4009 = vst.msk [vmem:[%s302 + $0x28] sm:$0xff] %vm669, %v3993
      %4010 = vst.msk [vmem:[%s302 + $0x30] sm:$0xff] %vm669, %v3994
      %4011 = vst.msk [vmem:[%s302 + $0x38] sm:$0xff] %vm669, %v3995
      %4012 = vst.msk [vmem:[%s302 + $0x40] sm:$0xff] %vm669, %v3996
      %4013 = vst.msk [vmem:[%s302 + $0x48] sm:$0xff] %vm669, %v3997
      %4014 = vst.msk [vmem:[%s302 + $0x50] sm:$0xff] %vm669, %v3998
      %4015 = vst.msk [vmem:[%s302 + $0x58] sm:$0xff] %vm669, %v3999
      %4016 = vst.msk [vmem:[%s302 + $0x60] sm:$0xff] %vm669, %v4000
      %4017 = vst.msk [vmem:[%s302 + $0x68] sm:$0xff] %vm669, %v4001
      %4018 = vst.msk [vmem:[%s302 + $0x70] sm:$0xff] %vm669, %v4002
      %4019 = vst.msk [vmem:[%s302 + $0x78] sm:$0xff] %vm669, %v4003
      %s4020 = smul.u32 8, %s23
      %p4021 = scmp.lt.s32.totalorder %s22, 1
      %s4022 = scalar_select %p4021, %s22, 1
      %p4023 = scmp.lt.s32.totalorder %s4020, 15
      %s4024 = scalar_select %p4023, %s4020, 15
      %s4025 = smul.addr %s4024, 2
      %s4026 = smul.addr %s4022, 32
      %s4027 = sadd.s32 %s4025, %s4026
      %s4028 = smul.addr %s4027, 8
      %s4029 = scalar_lea.vmem %s7, %s4028
      // Predicated region
      $region57: #{tpu_custom_call.1} parent=47 // pred_check
        %p4030 = pneg %p202
      $region58: #{tpu_custom_call.1} parent=47 // pred_check_branch
        %4032 = sbr.rel (%p4030) target = $region60
      $region59: #{tpu_custom_call.1} parent=47 // pred_region
        %s4033 = smul.u32 8, %s23
      $region60: #{tpu_custom_call.1} parent=47 // pred_fallthru
        _
    $region48: #{tpu_custom_call.1} parent=5 // pred_fallthru
      _
    %p4034 = scmp.le.s32.totalorder 2, %s13
    // Predicated region
    $region61: #{tpu_custom_call.1} parent=5 // pred_check
      %p4035 = pneg %p4034
    $region62: #{tpu_custom_call.1} parent=5 // pred_check_branch
      %4037 = sbr.rel (%p4035) target = $region64
    $region63: #{tpu_custom_call.1} parent=5 // pred_region
      %s4038 = ssub.s32 %s13, 2
      // Predicated region
      $region65: #{tpu_custom_call.1} parent=63 // pred_check
        %p4039 = pneg %p208
      $region66: #{tpu_custom_call.1} parent=63 // pred_check_branch
        %4041 = sbr.rel (%p4039) target = $region68
      $region67: #{tpu_custom_call.1} parent=63 // pred_region
        %s4042 = smul.u32 8, %s25
        %p4043 = scmp.lt.s32.totalorder %s24, 1
        %s4044 = scalar_select %p4043, %s24, 1
        %p4045 = scmp.lt.s32.totalorder %s4042, 15
        %s4046 = scalar_select %p4045, %s4042, 15
        %s4047 = smul.addr %s4046, 2
        %s4048 = smul.addr %s4044, 32
        %s4049 = sadd.s32 %s4047, %s4048
        %s4050 = smul.addr %s4049, 8
        %s4051 = scalar_lea.vmem %s7, %s4050
      $region68: #{tpu_custom_call.1} parent=63 // pred_fallthru
        _
    $region64: #{tpu_custom_call.1} parent=5 // pred_fallthru
      _
  $region6: #{tpu_custom_call.1} parent=0 // loop_footer
    %s17 = sadd.s32 1, %s13
  $region7: #{tpu_custom_call.1} parent=0 // loop_footer_branch
    %12 = sbr.rel target = $region3
  $region8: #{tpu_custom_call.1} parent=0 // loop_exit
    _

</llo_original>
